<compile_context>
chip_gen: v7x
topology: tpu7x:2x2x1
jax: 0.10.0
libtpu: 0.0.40
codegen_flags: <defaults>
</compile_context>

<pallas_src>
import functools

import numpy as np
import jax
import jax.numpy as jnp
from jax.experimental import pallas as pl
from jax.experimental.pallas import tpu as pltpu


# --------------------------------------------------------------------------- #
# kernel: pure structured copies (no MXU)
# --------------------------------------------------------------------------- #
def _upsample_kernel(x_ref, o_ref, *, g, w, s):
    # x_ref: (tq, g*W)   -- g consecutive input rows folded per matrix row
    # o_ref: (tq, g*s*s*W)
    x = x_ref[...]

    # Height duplication: input row-chunk u appears s times consecutively in
    # the output group-row ([u=0]*s, [u=1]*s, ...).  Static lane slices +
    # concatenation along the lane axis only.
    pieces = []
    for u in range(g):
        xu = x[:, u * w:(u + 1) * w]          # (tq, W), static slice
        pieces.extend([xu] * s)
    h = jnp.concatenate(pieces, axis=-1) if len(pieces) > 1 else pieces[0]

    # Width duplication: nearest-neighbour interleave along lanes.
    o_ref[...] = jnp.repeat(h, s, axis=1)     # (tq, g*s*s*W)


# --------------------------------------------------------------------------- #
# helpers
# --------------------------------------------------------------------------- #
def _vmem_limit_bytes():
    """Generation-aware VMEM limit (half of physical, capped at 64 MiB)."""
    try:
        cap = int(pltpu.get_tpu_info().vmem_capacity_bytes)
    except Exception:
        cap = 64 << 20        # conservative default (v7x physical per core)
    return min(cap // 2, 64 << 20)


def _pick_group(rows, w, s, max_k_out=4096):
    """Smallest g dividing `rows` with output lane width g*s*s*w % 128 == 0.

    Falls back to 1 (correct, masked stores) when no such g exists.
    """
    base = s * s * w
    if base % 128 == 0:
        return 1
    g = 2
    while g * base <= max_k_out and g <= rows:
        if rows % g == 0 and (g * base) % 128 == 0:
            return g
        g += 1
    return 1


def _pick_row_tile(q, k_in, k_out, itemsize, sub, budget_bytes):
    """Row tile: dtype-aligned, VMEM-budgeted, and >= 2 grid steps if possible."""
    if q <= sub:
        return q
    per_row = 2 * (k_in + k_out) * itemsize        # double-buffered in + out
    tq = min(2048, max(sub, budget_bytes // per_row))
    tq = min(tq, pl.cdiv(q, 2))                    # keep both v7x cores busy
    tq = max(sub, (tq // sub) * sub)               # sublane alignment
    return min(tq, q)


# --------------------------------------------------------------------------- #
# public wrapper: NCHW in, NCHW out (same as the PyTorch module)
# --------------------------------------------------------------------------- #
def upsample_nearest(x, scale_factor=2, size=None):
    n, c, h, w = x.shape
    if size is not None:
        # TODO(synk): only integer, symmetric size-based scaling is supported
        # (general F.upsample_nearest size semantics not translated).
        oh, ow = (size, size) if isinstance(size, int) else tuple(size)
        assert oh % h == 0 and ow % w == 0 and oh // h == ow // w
        s = oh // h
    else:
        s = int(scale_factor)
    if s == 1:
        return x

    rows = n * c * h
    itemsize = int(np.dtype(x.dtype).itemsize)
    sub = {4: 8, 2: 16, 1: 32}.get(itemsize, 8)    # sublane packing by dtype

    g = _pick_group(rows, w, s)
    q = rows // g
    k_in, k_out = g * w, g * s * s * w

    vmem_limit = _vmem_limit_bytes()
    tq = _pick_row_tile(q, k_in, k_out, itemsize, sub, vmem_limit // 3)
    grid = (pl.cdiv(q, tq),)

    out2d = pl.pallas_call(
        functools.partial(_upsample_kernel, g=g, w=w, s=s),
        grid=grid,
        in_specs=[pl.BlockSpec((tq, k_in), lambda i: (i, 0))],
        out_specs=pl.BlockSpec((tq, k_out), lambda i: (i, 0)),
        out_shape=jax.ShapeDtypeStruct((q, k_out), x.dtype),
        compiler_params=pltpu.CompilerParams(
            dimension_semantics=("parallel",),
            vmem_limit_bytes=vmem_limit,
        ),
        cost_estimate=pl.CostEstimate(
            flops=q * k_out,                       # pure copies
            transcendentals=0,
            bytes_accessed=(q * k_in + q * k_out) * itemsize,
        ),
    )(x.reshape(q, k_in))

    # row-major reshape back to NCHW — no data movement.
    return out2d.reshape(n, c, s * h, s * w)


# --------------------------------------------------------------------------- #
if __name__ == "__main__":
    key = jax.random.PRNGKey(0)
    x = jax.random.normal(key, (2, 4, 16, 16), jnp.float32)  # NCHW, as in PyTorch

    y = jax.block_until_ready(upsample_nearest(x, scale_factor=2))

    assert y.shape == (2, 4, 32, 32), y.shape
    ref = jnp.repeat(jnp.repeat(x, 2, axis=2), 2, axis=3)    # nearest-neighbour ref
    assert bool(jnp.array_equal(y, ref))
    print("KERNEL_OK")
</pallas_src>

<mosaic_0001>
module attributes {stable_mosaic.version = 11 : i64} {
  func.func @_upsample_kernel(%arg0: i32, %arg1: memref<32x32xf32, #tpu.memory_space<vmem>>, %arg2: memref<32x128xf32, #tpu.memory_space<vmem>>) attributes {dimension_semantics = [#tpu.dimension_semantics<parallel>], iteration_bounds = array<i64: 2>, scalar_prefetch = 0 : i64, scratch_operands = 0 : i64, tpu.core_type = #tpu.core_type<tc>, window_params = [{transform_indices = @transform_0, window_bounds = array<i64: 32, 32>}, {transform_indices = @transform_1, window_bounds = array<i64: 32, 128>}]} {
    %c0 = arith.constant 0 : index
    %c0_0 = arith.constant 0 : index
    %0 = vector.load %arg1[%c0, %c0_0] : memref<32x32xf32, #tpu.memory_space<vmem>>, vector<32x32xf32>
    %1 = vector.extract_strided_slice %0 {offsets = [0, 0], sizes = [32, 16], strides = [1, 1]} : vector<32x32xf32> to vector<32x16xf32>
    %2 = vector.extract_strided_slice %0 {offsets = [0, 16], sizes = [32, 16], strides = [1, 1]} : vector<32x32xf32> to vector<32x16xf32>
    %3 = tpu.concatenate %1, %1, %2, %2 in 1 : vector<32x16xf32>, vector<32x16xf32>, vector<32x16xf32>, vector<32x16xf32> -> vector<32x64xf32>
    %4 = vector.shape_cast %3 : vector<32x64xf32> to vector<32x64x1xf32>
    %5 = vector.broadcast %4 : vector<32x64x1xf32> to vector<32x64x2xf32>
    %6 = vector.shape_cast %5 : vector<32x64x2xf32> to vector<32x128xf32>
    %c0_1 = arith.constant 0 : index
    %c0_2 = arith.constant 0 : index
    %7 = vector.load %arg2[%c0_1, %c0_2] : memref<32x128xf32, #tpu.memory_space<vmem>>, vector<32x128xf32>
    tpu.vector_store %arg2[%c0_1, %c0_2], %6 {strides = array<i32>} : memref<32x128xf32, #tpu.memory_space<vmem>>, vector<32x128xf32>,
    return
  }
  func.func @transform_0(%arg0: i32) -> (i32, i32) {
    %c0_i32 = arith.constant 0 : i32
    %c0_i32_0 = arith.constant 0 : i32
    return %arg0, %c0_i32 : i32, i32
  }
  func.func @transform_1(%arg0: i32) -> (i32, i32) {
    %c0_i32 = arith.constant 0 : i32
    %c0_i32_0 = arith.constant 0 : i32
    return %arg0, %c0_i32 : i32, i32
  }
}

</mosaic_0001>

<llo_original>
// kernel: tpu_custom_call.1
$region0: #{tpu_custom_call.1}
  #allocation0 [shape = 'u32[]', space=smem, size = 0x4, offset = 0x4, fixed_abs, tag = 'smem constant byte address 0x4 - core index']
  #allocation1 [shape = 'u32[144,128]{1,0:T(1,128)}', space=vmem, size = 0x12000, scoped, tag = 'internal scratch']
  %s0 = inlined_call_operand.vmem [shape: f32[64,32], index: 0, kind: input, shape index: {}]
  %s1 = inlined_call_operand.hbm [shape: f32[64,128], index: 1, kind: output, shape index: {}]
  %s2 = sld [smem:[#allocation0]]
  $region37: #{tpu_custom_call.1} parent=0
    _
  %s4 = ssub.s32 1, %s2
  %s5 = scalar_select 0, %s4, %s2
  $region1: #{tpu_custom_call.1} parent=0
    #allocation2 [shape = 'u8[32768]{0}', space=vmem, size = 0x8000, scoped, tag = 'output window, operand 0']
    #allocation3 [shape = 's32[2]{0}', space=sflag, size = 0x8, scoped, tag = 'scoped memory for tpu_custom_call.1']
    %6 = vsyncpa [#allocation3], 0
    %s7 = scalar_lea.sflag [#allocation3], 1
    %8 = vsyncpa %s7, 0
    loop: start=0, step=1, limit=4
    $region2: #{tpu_custom_call.1} parent=1 // loop_pre_header
      _
    $region3: #{tpu_custom_call.1} parent=1 // loop_header
      %s10 = sphi 0, %s14
      %p11 = scmp.ge.s32.totalorder %s10, 4
      %s20 = sphi 0, %s22
      %s23 = sphi 0, %s20
      %s24 = sphi 0, %s23
      %s40 = sphi 0, %s24
      %s46 = sphi 0, %s48
      %s49 = sphi 0, %s46
      %s50 = sphi 0, %s49
      %s66 = sphi 0, %s50
    $region4: #{tpu_custom_call.1} parent=1 // loop_header_branch
      %13 = sbr.rel (%p11) target = $region8
    $region5: #{tpu_custom_call.1} parent=1 // loop_body
      %s15 = ssub.s32 %s10, 1
      %s16 = ssub.s32 %s10, 2
      %s17 = sadd.s32 %s10, 1
      %s18 = ssub.s32 %s10, %s17
      %p19 = scmp.eq.s32.totalorder %s18, 0
      %s21 = sadd.s32 %s20, 1
      %s22 = scalar_select %p19, %s20, %s21
      %p25 = pneg %p19
      %p26 = scmp.eq.s32.totalorder %s10, 1
      %p27 = por %p25, %p26
      %p28 = scmp.ne.s32.totalorder %s20, %s23
      %p29 = scmp.eq.s32.totalorder %s10, 0
      %p30 = por %p28, %p29
      %p31 = scmp.ne.s32.totalorder %s20, %s23
      %p32 = scmp.eq.s32.totalorder %s15, 1
      %p33 = por %p31, %p32
      %p34 = scmp.ne.s32.totalorder %s23, %s24
      %p35 = scmp.eq.s32.totalorder %s15, 0
      %p36 = por %p34, %p35
      %p37 = scmp.ne.s32.totalorder %s23, %s24
      %p38 = scmp.eq.s32.totalorder %s16, 1
      %p39 = por %p37, %p38
      %p41 = scmp.ne.s32.totalorder %s24, %s40
      %p42 = scmp.eq.s32.totalorder %s16, 0
      %p43 = por %p41, %p42
      %s44 = ssub.s32 %s10, %s17
      %p45 = scmp.eq.s32.totalorder %s44, 0
      %s47 = sadd.s32 %s46, 1
      %s48 = scalar_select %p45, %s46, %s47
      %p51 = pneg %p45
      %p52 = scmp.eq.s32.totalorder %s10, 1
      %p53 = por %p51, %p52
      %p54 = scmp.ne.s32.totalorder %s46, %s49
      %p55 = scmp.eq.s32.totalorder %s10, 0
      %p56 = por %p54, %p55
      %p57 = scmp.ne.s32.totalorder %s46, %s49
      %p58 = scmp.eq.s32.totalorder %s15, 1
      %p59 = por %p57, %p58
      %p60 = scmp.ne.s32.totalorder %s49, %s50
      %p61 = scmp.eq.s32.totalorder %s15, 0
      %p62 = por %p60, %p61
      %p63 = scmp.ne.s32.totalorder %s49, %s50
      %p64 = scmp.eq.s32.totalorder %s16, 1
      %p65 = por %p63, %p64
      %p67 = scmp.ne.s32.totalorder %s50, %s66
      %p68 = scmp.eq.s32.totalorder %s16, 0
      %p69 = por %p67, %p68
      %p70 = scmp.le.s32.totalorder 1, %s10
      %p71 = scmp.lt.s32.totalorder %s10, 3
      %p72 = pnand %p70, %p71
      %p73 = pneg %p72
      // Predicated region
      $region9: #{tpu_custom_call.1} parent=5 // pred_check
        _
      $region10: #{tpu_custom_call.1} parent=5 // pred_check_branch
        %75 = sbr.rel (%p72) target = $region12
      $region11: #{tpu_custom_call.1} parent=5 // pred_region
        %s76 = ssub.s32 %s10, 1
      $region12: #{tpu_custom_call.1} parent=5 // pred_fallthru
        _
      %p77 = scmp.lt.s32.totalorder %s10, 2
      // Predicated region
      $region13: #{tpu_custom_call.1} parent=5 // pred_check
        %p78 = pneg %p77
      $region14: #{tpu_custom_call.1} parent=5 // pred_check_branch
        %80 = sbr.rel (%p78) target = $region16
      $region15: #{tpu_custom_call.1} parent=5 // pred_region
        // Predicated region
        $region17: #{tpu_custom_call.1} parent=15 // pred_check
          %p81 = pneg %p30
        $region18: #{tpu_custom_call.1} parent=15 // pred_check_branch
          %83 = sbr.rel (%p81) target = $region20
        $region19: #{tpu_custom_call.1} parent=15 // pred_region
          %s84 = smul.u32 4, %s10
          %p85 = scmp.lt.s32.totalorder %s84, 7
          %s86 = scalar_select %p85, %s84, 7
          %s87 = smul.addr %s86, 8
          %s88 = scalar_lea.vmem %s0, %s87
          %s89 = smul.u32 4, %s10
        $region20: #{tpu_custom_call.1} parent=15 // pred_fallthru
          _
      $region16: #{tpu_custom_call.1} parent=5 // pred_fallthru
        _
      %p90 = scmp.le.s32.totalorder 1, %s10
      %p91 = scmp.lt.s32.totalorder %s10, 3
      %p92 = pnand %p90, %p91
      %p93 = pneg %p92
      // Predicated region
      $region21: #{tpu_custom_call.1} parent=5 // pred_check
        _
      $region22: #{tpu_custom_call.1} parent=5 // pred_check_branch
        %95 = sbr.rel (%p92) target = $region24
      $region23: #{tpu_custom_call.1} parent=5 // pred_region
        %s96 = ssub.s32 %s10, 1
        %s97 = smul.u32 4, %s15
        %p98 = scmp.lt.s32.totalorder %s97, 7
        %s99 = scalar_select %p98, %s97, 7
        %s100 = smul.addr %s99, 8
        %s101 = scalar_lea.vmem %s0, %s100
        %p102 = pneg %p36
        %p103 = pneg %p33
        %p104 = pneg %p62
        %p105 = pneg %p59
        %s106 = sand.u32 %s49, 1
        %s107 = scalar_lea.sflag [#allocation3], %s106
        %s108 = sand.u32 %s49, 1
        %s109 = smul.addr %s108, 32
        %s110 = scalar_lea.vmem [#allocation2], %s109
        %s111 = smul.u32 4, %s15
        %p112 = scmp.lt.s32.totalorder %s111, 7
        %s113 = scalar_select %p112, %s111, 7
        %s114 = smul.addr %s113, 8
        %s115 = scalar_lea.vmem %s0, %s114
        %s116 = smul.u32 4, %s15
        %s117 = smul.u32 4, %s15
        %v118 = vld [vmem:[%s115] sm:$0xff]
        %v119 = vld [vmem:[%s115 + $0x8] sm:$0xff]
        %v120 = vld [vmem:[%s115 + $0x10] sm:$0xff]
        %v121 = vld [vmem:[%s115 + $0x18] sm:$0xff]
        %126 = vrot.lane.b32.xlu0 %v118, 16
        %v127 = vpop.permute.xlu0 %126
        %128 = vrot.lane.b32.xlu0 %v119, 16
        %v129 = vpop.permute.xlu0 %128
        %130 = vrot.lane.b32.xlu0 %v120, 16
        %v131 = vpop.permute.xlu0 %130
        %132 = vrot.lane.b32.xlu0 %v121, 16
        %v133 = vpop.permute.xlu0 %132
        %138 = vrot.lane.b32.xlu0 %v118, 32
        %v139 = vpop.permute.xlu0 %138
        %140 = vrot.lane.b32.xlu0 %v119, 32
        %v141 = vpop.permute.xlu0 %140
        %142 = vrot.lane.b32.xlu0 %v120, 32
        %v143 = vpop.permute.xlu0 %142
        %144 = vrot.lane.b32.xlu0 %v121, 32
        %v145 = vpop.permute.xlu0 %144
        %vm150 = vcmask 130048
        %v151 = vsel %vm150, %v118, %v127
        %v152 = vsel %vm150, %v119, %v129
        %v153 = vsel %vm150, %v120, %v131
        %v154 = vsel %vm150, %v121, %v133
        %vm155 = vcmask 261120
        %v156 = vsel %vm155, %v151, %v127
        %v157 = vsel %vm155, %v152, %v129
        %v158 = vsel %vm155, %v153, %v131
        %v159 = vsel %vm155, %v154, %v133
        %vm160 = vcmask 392192
        %v161 = vsel %vm160, %v156, %v139
        %v162 = vsel %vm160, %v157, %v141
        %v163 = vsel %vm160, %v158, %v143
        %v164 = vsel %vm160, %v159, %v145
        %v165 = vlaneseq
        %v166 = vshrl.u32 %v165, 7
        %v167 = vsub.s32 0, %v166
        %v168 = vrot.slane %v161, %v167
        %170 = vbcast.lane.b32.xlu0 %v168, 256
        %v171 = vpop.permute.xlu0 %170
        %s173 = sor.u32 256, 8
        %174 = vbcast.lane.b32.xlu0 %v168, %s173
        %v175 = vpop.permute.xlu0 %174
        %s177 = sor.u32 256, 16
        %178 = vbcast.lane.b32.xlu0 %v168, %s177
        %v179 = vpop.permute.xlu0 %178
        %s181 = sor.u32 256, 24
        %182 = vbcast.lane.b32.xlu0 %v168, %s181
        %v183 = vpop.permute.xlu0 %182
        %s185 = sor.u32 256, 32
        %186 = vbcast.lane.b32.xlu0 %v168, %s185
        %v187 = vpop.permute.xlu0 %186
        %s189 = sor.u32 256, 40
        %190 = vbcast.lane.b32.xlu0 %v168, %s189
        %v191 = vpop.permute.xlu0 %190
        %s193 = sor.u32 256, 48
        %194 = vbcast.lane.b32.xlu0 %v168, %s193
        %v195 = vpop.permute.xlu0 %194
        %s197 = sor.u32 256, 56
        %198 = vbcast.lane.b32.xlu0 %v168, %s197
        %v199 = vpop.permute.xlu0 %198
        %v200 = vlaneseq
        %v201 = vshrl.u32 %v200, 7
        %v202 = vsub.s32 1, %v201
        %v203 = vrot.slane %v161, %v202
        %205 = vbcast.lane.b32.xlu0 %v203, 256
        %v206 = vpop.permute.xlu0 %205
        %s208 = sor.u32 256, 8
        %209 = vbcast.lane.b32.xlu0 %v203, %s208
        %v210 = vpop.permute.xlu0 %209
        %s212 = sor.u32 256, 16
        %213 = vbcast.lane.b32.xlu0 %v203, %s212
        %v214 = vpop.permute.xlu0 %213
        %s216 = sor.u32 256, 24
        %217 = vbcast.lane.b32.xlu0 %v203, %s216
        %v218 = vpop.permute.xlu0 %217
        %s220 = sor.u32 256, 32
        %221 = vbcast.lane.b32.xlu0 %v203, %s220
        %v222 = vpop.permute.xlu0 %221
        %s224 = sor.u32 256, 40
        %225 = vbcast.lane.b32.xlu0 %v203, %s224
        %v226 = vpop.permute.xlu0 %225
        %s228 = sor.u32 256, 48
        %229 = vbcast.lane.b32.xlu0 %v203, %s228
        %v230 = vpop.permute.xlu0 %229
        %s232 = sor.u32 256, 56
        %233 = vbcast.lane.b32.xlu0 %v203, %s232
        %v234 = vpop.permute.xlu0 %233
        %v235 = vlaneseq
        %v236 = vshrl.u32 %v235, 7
        %v237 = vsub.s32 2, %v236
        %v238 = vrot.slane %v161, %v237
        %240 = vbcast.lane.b32.xlu0 %v238, 256
        %v241 = vpop.permute.xlu0 %240
        %s243 = sor.u32 256, 8
        %244 = vbcast.lane.b32.xlu0 %v238, %s243
        %v245 = vpop.permute.xlu0 %244
        %s247 = sor.u32 256, 16
        %248 = vbcast.lane.b32.xlu0 %v238, %s247
        %v249 = vpop.permute.xlu0 %248
        %s251 = sor.u32 256, 24
        %252 = vbcast.lane.b32.xlu0 %v238, %s251
        %v253 = vpop.permute.xlu0 %252
        %s255 = sor.u32 256, 32
        %256 = vbcast.lane.b32.xlu0 %v238, %s255
        %v257 = vpop.permute.xlu0 %256
        %s259 = sor.u32 256, 40
        %260 = vbcast.lane.b32.xlu0 %v238, %s259
        %v261 = vpop.permute.xlu0 %260
        %s263 = sor.u32 256, 48
        %264 = vbcast.lane.b32.xlu0 %v238, %s263
        %v265 = vpop.permute.xlu0 %264
        %s267 = sor.u32 256, 56
        %268 = vbcast.lane.b32.xlu0 %v238, %s267
        %v269 = vpop.permute.xlu0 %268
        %v270 = vlaneseq
        %v271 = vshrl.u32 %v270, 7
        %v272 = vsub.s32 3, %v271
        %v273 = vrot.slane %v161, %v272
        %275 = vbcast.lane.b32.xlu0 %v273, 256
        %v276 = vpop.permute.xlu0 %275
        %s278 = sor.u32 256, 8
        %279 = vbcast.lane.b32.xlu0 %v273, %s278
        %v280 = vpop.permute.xlu0 %279
        %s282 = sor.u32 256, 16
        %283 = vbcast.lane.b32.xlu0 %v273, %s282
        %v284 = vpop.permute.xlu0 %283
        %s286 = sor.u32 256, 24
        %287 = vbcast.lane.b32.xlu0 %v273, %s286
        %v288 = vpop.permute.xlu0 %287
        %s290 = sor.u32 256, 32
        %291 = vbcast.lane.b32.xlu0 %v273, %s290
        %v292 = vpop.permute.xlu0 %291
        %s294 = sor.u32 256, 40
        %295 = vbcast.lane.b32.xlu0 %v273, %s294
        %v296 = vpop.permute.xlu0 %295
        %s298 = sor.u32 256, 48
        %299 = vbcast.lane.b32.xlu0 %v273, %s298
        %v300 = vpop.permute.xlu0 %299
        %s302 = sor.u32 256, 56
        %303 = vbcast.lane.b32.xlu0 %v273, %s302
        %v304 = vpop.permute.xlu0 %303
        %v305 = vlaneseq
        %v306 = vshrl.u32 %v305, 7
        %v307 = vsub.s32 4, %v306
        %v308 = vrot.slane %v161, %v307
        %310 = vbcast.lane.b32.xlu0 %v308, 256
        %v311 = vpop.permute.xlu0 %310
        %s313 = sor.u32 256, 8
        %314 = vbcast.lane.b32.xlu0 %v308, %s313
        %v315 = vpop.permute.xlu0 %314
        %s317 = sor.u32 256, 16
        %318 = vbcast.lane.b32.xlu0 %v308, %s317
        %v319 = vpop.permute.xlu0 %318
        %s321 = sor.u32 256, 24
        %322 = vbcast.lane.b32.xlu0 %v308, %s321
        %v323 = vpop.permute.xlu0 %322
        %s325 = sor.u32 256, 32
        %326 = vbcast.lane.b32.xlu0 %v308, %s325
        %v327 = vpop.permute.xlu0 %326
        %s329 = sor.u32 256, 40
        %330 = vbcast.lane.b32.xlu0 %v308, %s329
        %v331 = vpop.permute.xlu0 %330
        %s333 = sor.u32 256, 48
        %334 = vbcast.lane.b32.xlu0 %v308, %s333
        %v335 = vpop.permute.xlu0 %334
        %s337 = sor.u32 256, 56
        %338 = vbcast.lane.b32.xlu0 %v308, %s337
        %v339 = vpop.permute.xlu0 %338
        %v340 = vlaneseq
        %v341 = vshrl.u32 %v340, 7
        %v342 = vsub.s32 5, %v341
        %v343 = vrot.slane %v161, %v342
        %345 = vbcast.lane.b32.xlu0 %v343, 256
        %v346 = vpop.permute.xlu0 %345
        %s348 = sor.u32 256, 8
        %349 = vbcast.lane.b32.xlu0 %v343, %s348
        %v350 = vpop.permute.xlu0 %349
        %s352 = sor.u32 256, 16
        %353 = vbcast.lane.b32.xlu0 %v343, %s352
        %v354 = vpop.permute.xlu0 %353
        %s356 = sor.u32 256, 24
        %357 = vbcast.lane.b32.xlu0 %v343, %s356
        %v358 = vpop.permute.xlu0 %357
        %s360 = sor.u32 256, 32
        %361 = vbcast.lane.b32.xlu0 %v343, %s360
        %v362 = vpop.permute.xlu0 %361
        %s364 = sor.u32 256, 40
        %365 = vbcast.lane.b32.xlu0 %v343, %s364
        %v366 = vpop.permute.xlu0 %365
        %s368 = sor.u32 256, 48
        %369 = vbcast.lane.b32.xlu0 %v343, %s368
        %v370 = vpop.permute.xlu0 %369
        %s372 = sor.u32 256, 56
        %373 = vbcast.lane.b32.xlu0 %v343, %s372
        %v374 = vpop.permute.xlu0 %373
        %v375 = vlaneseq
        %v376 = vshrl.u32 %v375, 7
        %v377 = vsub.s32 6, %v376
        %v378 = vrot.slane %v161, %v377
        %380 = vbcast.lane.b32.xlu0 %v378, 256
        %v381 = vpop.permute.xlu0 %380
        %s383 = sor.u32 256, 8
        %384 = vbcast.lane.b32.xlu0 %v378, %s383
        %v385 = vpop.permute.xlu0 %384
        %s387 = sor.u32 256, 16
        %388 = vbcast.lane.b32.xlu0 %v378, %s387
        %v389 = vpop.permute.xlu0 %388
        %s391 = sor.u32 256, 24
        %392 = vbcast.lane.b32.xlu0 %v378, %s391
        %v393 = vpop.permute.xlu0 %392
        %s395 = sor.u32 256, 32
        %396 = vbcast.lane.b32.xlu0 %v378, %s395
        %v397 = vpop.permute.xlu0 %396
        %s399 = sor.u32 256, 40
        %400 = vbcast.lane.b32.xlu0 %v378, %s399
        %v401 = vpop.permute.xlu0 %400
        %s403 = sor.u32 256, 48
        %404 = vbcast.lane.b32.xlu0 %v378, %s403
        %v405 = vpop.permute.xlu0 %404
        %s407 = sor.u32 256, 56
        %408 = vbcast.lane.b32.xlu0 %v378, %s407
        %v409 = vpop.permute.xlu0 %408
        %v410 = vlaneseq
        %v411 = vshrl.u32 %v410, 7
        %v412 = vsub.s32 7, %v411
        %v413 = vrot.slane %v161, %v412
        %415 = vbcast.lane.b32.xlu0 %v413, 256
        %v416 = vpop.permute.xlu0 %415
        %s418 = sor.u32 256, 8
        %419 = vbcast.lane.b32.xlu0 %v413, %s418
        %v420 = vpop.permute.xlu0 %419
        %s422 = sor.u32 256, 16
        %423 = vbcast.lane.b32.xlu0 %v413, %s422
        %v424 = vpop.permute.xlu0 %423
        %s426 = sor.u32 256, 24
        %427 = vbcast.lane.b32.xlu0 %v413, %s426
        %v428 = vpop.permute.xlu0 %427
        %s430 = sor.u32 256, 32
        %431 = vbcast.lane.b32.xlu0 %v413, %s430
        %v432 = vpop.permute.xlu0 %431
        %s434 = sor.u32 256, 40
        %435 = vbcast.lane.b32.xlu0 %v413, %s434
        %v436 = vpop.permute.xlu0 %435
        %s438 = sor.u32 256, 48
        %439 = vbcast.lane.b32.xlu0 %v413, %s438
        %v440 = vpop.permute.xlu0 %439
        %s442 = sor.u32 256, 56
        %443 = vbcast.lane.b32.xlu0 %v413, %s442
        %v444 = vpop.permute.xlu0 %443
        %v445 = vlaneseq
        %v446 = vshrl.u32 %v445, 7
        %v447 = vsub.s32 0, %v446
        %v448 = vrot.slane %v162, %v447
        %450 = vbcast.lane.b32.xlu0 %v448, 256
        %v451 = vpop.permute.xlu0 %450
        %s453 = sor.u32 256, 8
        %454 = vbcast.lane.b32.xlu0 %v448, %s453
        %v455 = vpop.permute.xlu0 %454
        %s457 = sor.u32 256, 16
        %458 = vbcast.lane.b32.xlu0 %v448, %s457
        %v459 = vpop.permute.xlu0 %458
        %s461 = sor.u32 256, 24
        %462 = vbcast.lane.b32.xlu0 %v448, %s461
        %v463 = vpop.permute.xlu0 %462
        %s465 = sor.u32 256, 32
        %466 = vbcast.lane.b32.xlu0 %v448, %s465
        %v467 = vpop.permute.xlu0 %466
        %s469 = sor.u32 256, 40
        %470 = vbcast.lane.b32.xlu0 %v448, %s469
        %v471 = vpop.permute.xlu0 %470
        %s473 = sor.u32 256, 48
        %474 = vbcast.lane.b32.xlu0 %v448, %s473
        %v475 = vpop.permute.xlu0 %474
        %s477 = sor.u32 256, 56
        %478 = vbcast.lane.b32.xlu0 %v448, %s477
        %v479 = vpop.permute.xlu0 %478
        %v480 = vlaneseq
        %v481 = vshrl.u32 %v480, 7
        %v482 = vsub.s32 1, %v481
        %v483 = vrot.slane %v162, %v482
        %485 = vbcast.lane.b32.xlu0 %v483, 256
        %v486 = vpop.permute.xlu0 %485
        %s488 = sor.u32 256, 8
        %489 = vbcast.lane.b32.xlu0 %v483, %s488
        %v490 = vpop.permute.xlu0 %489
        %s492 = sor.u32 256, 16
        %493 = vbcast.lane.b32.xlu0 %v483, %s492
        %v494 = vpop.permute.xlu0 %493
        %s496 = sor.u32 256, 24
        %497 = vbcast.lane.b32.xlu0 %v483, %s496
        %v498 = vpop.permute.xlu0 %497
        %s500 = sor.u32 256, 32
        %501 = vbcast.lane.b32.xlu0 %v483, %s500
        %v502 = vpop.permute.xlu0 %501
        %s504 = sor.u32 256, 40
        %505 = vbcast.lane.b32.xlu0 %v483, %s504
        %v506 = vpop.permute.xlu0 %505
        %s508 = sor.u32 256, 48
        %509 = vbcast.lane.b32.xlu0 %v483, %s508
        %v510 = vpop.permute.xlu0 %509
        %s512 = sor.u32 256, 56
        %513 = vbcast.lane.b32.xlu0 %v483, %s512
        %v514 = vpop.permute.xlu0 %513
        %v515 = vlaneseq
        %v516 = vshrl.u32 %v515, 7
        %v517 = vsub.s32 2, %v516
        %v518 = vrot.slane %v162, %v517
        %520 = vbcast.lane.b32.xlu0 %v518, 256
        %v521 = vpop.permute.xlu0 %520
        %s523 = sor.u32 256, 8
        %524 = vbcast.lane.b32.xlu0 %v518, %s523
        %v525 = vpop.permute.xlu0 %524
        %s527 = sor.u32 256, 16
        %528 = vbcast.lane.b32.xlu0 %v518, %s527
        %v529 = vpop.permute.xlu0 %528
        %s531 = sor.u32 256, 24
        %532 = vbcast.lane.b32.xlu0 %v518, %s531
        %v533 = vpop.permute.xlu0 %532
        %s535 = sor.u32 256, 32
        %536 = vbcast.lane.b32.xlu0 %v518, %s535
        %v537 = vpop.permute.xlu0 %536
        %s539 = sor.u32 256, 40
        %540 = vbcast.lane.b32.xlu0 %v518, %s539
        %v541 = vpop.permute.xlu0 %540
        %s543 = sor.u32 256, 48
        %544 = vbcast.lane.b32.xlu0 %v518, %s543
        %v545 = vpop.permute.xlu0 %544
        %s547 = sor.u32 256, 56
        %548 = vbcast.lane.b32.xlu0 %v518, %s547
        %v549 = vpop.permute.xlu0 %548
        %v550 = vlaneseq
        %v551 = vshrl.u32 %v550, 7
        %v552 = vsub.s32 3, %v551
        %v553 = vrot.slane %v162, %v552
        %555 = vbcast.lane.b32.xlu0 %v553, 256
        %v556 = vpop.permute.xlu0 %555
        %s558 = sor.u32 256, 8
        %559 = vbcast.lane.b32.xlu0 %v553, %s558
        %v560 = vpop.permute.xlu0 %559
        %s562 = sor.u32 256, 16
        %563 = vbcast.lane.b32.xlu0 %v553, %s562
        %v564 = vpop.permute.xlu0 %563
        %s566 = sor.u32 256, 24
        %567 = vbcast.lane.b32.xlu0 %v553, %s566
        %v568 = vpop.permute.xlu0 %567
        %s570 = sor.u32 256, 32
        %571 = vbcast.lane.b32.xlu0 %v553, %s570
        %v572 = vpop.permute.xlu0 %571
        %s574 = sor.u32 256, 40
        %575 = vbcast.lane.b32.xlu0 %v553, %s574
        %v576 = vpop.permute.xlu0 %575
        %s578 = sor.u32 256, 48
        %579 = vbcast.lane.b32.xlu0 %v553, %s578
        %v580 = vpop.permute.xlu0 %579
        %s582 = sor.u32 256, 56
        %583 = vbcast.lane.b32.xlu0 %v553, %s582
        %v584 = vpop.permute.xlu0 %583
        %v585 = vlaneseq
        %v586 = vshrl.u32 %v585, 7
        %v587 = vsub.s32 4, %v586
        %v588 = vrot.slane %v162, %v587
        %590 = vbcast.lane.b32.xlu0 %v588, 256
        %v591 = vpop.permute.xlu0 %590
        %s593 = sor.u32 256, 8
        %594 = vbcast.lane.b32.xlu0 %v588, %s593
        %v595 = vpop.permute.xlu0 %594
        %s597 = sor.u32 256, 16
        %598 = vbcast.lane.b32.xlu0 %v588, %s597
        %v599 = vpop.permute.xlu0 %598
        %s601 = sor.u32 256, 24
        %602 = vbcast.lane.b32.xlu0 %v588, %s601
        %v603 = vpop.permute.xlu0 %602
        %s605 = sor.u32 256, 32
        %606 = vbcast.lane.b32.xlu0 %v588, %s605
        %v607 = vpop.permute.xlu0 %606
        %s609 = sor.u32 256, 40
        %610 = vbcast.lane.b32.xlu0 %v588, %s609
        %v611 = vpop.permute.xlu0 %610
        %s613 = sor.u32 256, 48
        %614 = vbcast.lane.b32.xlu0 %v588, %s613
        %v615 = vpop.permute.xlu0 %614
        %s617 = sor.u32 256, 56
        %618 = vbcast.lane.b32.xlu0 %v588, %s617
        %v619 = vpop.permute.xlu0 %618
        %v620 = vlaneseq
        %v621 = vshrl.u32 %v620, 7
        %v622 = vsub.s32 5, %v621
        %v623 = vrot.slane %v162, %v622
        %625 = vbcast.lane.b32.xlu0 %v623, 256
        %v626 = vpop.permute.xlu0 %625
        %s628 = sor.u32 256, 8
        %629 = vbcast.lane.b32.xlu0 %v623, %s628
        %v630 = vpop.permute.xlu0 %629
        %s632 = sor.u32 256, 16
        %633 = vbcast.lane.b32.xlu0 %v623, %s632
        %v634 = vpop.permute.xlu0 %633
        %s636 = sor.u32 256, 24
        %637 = vbcast.lane.b32.xlu0 %v623, %s636
        %v638 = vpop.permute.xlu0 %637
        %s640 = sor.u32 256, 32
        %641 = vbcast.lane.b32.xlu0 %v623, %s640
        %v642 = vpop.permute.xlu0 %641
        %s644 = sor.u32 256, 40
        %645 = vbcast.lane.b32.xlu0 %v623, %s644
        %v646 = vpop.permute.xlu0 %645
        %s648 = sor.u32 256, 48
        %649 = vbcast.lane.b32.xlu0 %v623, %s648
        %v650 = vpop.permute.xlu0 %649
        %s652 = sor.u32 256, 56
        %653 = vbcast.lane.b32.xlu0 %v623, %s652
        %v654 = vpop.permute.xlu0 %653
        %v655 = vlaneseq
        %v656 = vshrl.u32 %v655, 7
        %v657 = vsub.s32 6, %v656
        %v658 = vrot.slane %v162, %v657
        %660 = vbcast.lane.b32.xlu0 %v658, 256
        %v661 = vpop.permute.xlu0 %660
        %s663 = sor.u32 256, 8
        %664 = vbcast.lane.b32.xlu0 %v658, %s663
        %v665 = vpop.permute.xlu0 %664
        %s667 = sor.u32 256, 16
        %668 = vbcast.lane.b32.xlu0 %v658, %s667
        %v669 = vpop.permute.xlu0 %668
        %s671 = sor.u32 256, 24
        %672 = vbcast.lane.b32.xlu0 %v658, %s671
        %v673 = vpop.permute.xlu0 %672
        %s675 = sor.u32 256, 32
        %676 = vbcast.lane.b32.xlu0 %v658, %s675
        %v677 = vpop.permute.xlu0 %676
        %s679 = sor.u32 256, 40
        %680 = vbcast.lane.b32.xlu0 %v658, %s679
        %v681 = vpop.permute.xlu0 %680
        %s683 = sor.u32 256, 48
        %684 = vbcast.lane.b32.xlu0 %v658, %s683
        %v685 = vpop.permute.xlu0 %684
        %s687 = sor.u32 256, 56
        %688 = vbcast.lane.b32.xlu0 %v658, %s687
        %v689 = vpop.permute.xlu0 %688
        %v690 = vlaneseq
        %v691 = vshrl.u32 %v690, 7
        %v692 = vsub.s32 7, %v691
        %v693 = vrot.slane %v162, %v692
        %695 = vbcast.lane.b32.xlu0 %v693, 256
        %v696 = vpop.permute.xlu0 %695
        %s698 = sor.u32 256, 8
        %699 = vbcast.lane.b32.xlu0 %v693, %s698
        %v700 = vpop.permute.xlu0 %699
        %s702 = sor.u32 256, 16
        %703 = vbcast.lane.b32.xlu0 %v693, %s702
        %v704 = vpop.permute.xlu0 %703
        %s706 = sor.u32 256, 24
        %707 = vbcast.lane.b32.xlu0 %v693, %s706
        %v708 = vpop.permute.xlu0 %707
        %s710 = sor.u32 256, 32
        %711 = vbcast.lane.b32.xlu0 %v693, %s710
        %v712 = vpop.permute.xlu0 %711
        %s714 = sor.u32 256, 40
        %715 = vbcast.lane.b32.xlu0 %v693, %s714
        %v716 = vpop.permute.xlu0 %715
        %s718 = sor.u32 256, 48
        %719 = vbcast.lane.b32.xlu0 %v693, %s718
        %v720 = vpop.permute.xlu0 %719
        %s722 = sor.u32 256, 56
        %723 = vbcast.lane.b32.xlu0 %v693, %s722
        %v724 = vpop.permute.xlu0 %723
        %v725 = vlaneseq
        %v726 = vshrl.u32 %v725, 7
        %v727 = vsub.s32 0, %v726
        %v728 = vrot.slane %v163, %v727
        %730 = vbcast.lane.b32.xlu0 %v728, 256
        %v731 = vpop.permute.xlu0 %730
        %s733 = sor.u32 256, 8
        %734 = vbcast.lane.b32.xlu0 %v728, %s733
        %v735 = vpop.permute.xlu0 %734
        %s737 = sor.u32 256, 16
        %738 = vbcast.lane.b32.xlu0 %v728, %s737
        %v739 = vpop.permute.xlu0 %738
        %s741 = sor.u32 256, 24
        %742 = vbcast.lane.b32.xlu0 %v728, %s741
        %v743 = vpop.permute.xlu0 %742
        %s745 = sor.u32 256, 32
        %746 = vbcast.lane.b32.xlu0 %v728, %s745
        %v747 = vpop.permute.xlu0 %746
        %s749 = sor.u32 256, 40
        %750 = vbcast.lane.b32.xlu0 %v728, %s749
        %v751 = vpop.permute.xlu0 %750
        %s753 = sor.u32 256, 48
        %754 = vbcast.lane.b32.xlu0 %v728, %s753
        %v755 = vpop.permute.xlu0 %754
        %s757 = sor.u32 256, 56
        %758 = vbcast.lane.b32.xlu0 %v728, %s757
        %v759 = vpop.permute.xlu0 %758
        %v760 = vlaneseq
        %v761 = vshrl.u32 %v760, 7
        %v762 = vsub.s32 1, %v761
        %v763 = vrot.slane %v163, %v762
        %765 = vbcast.lane.b32.xlu0 %v763, 256
        %v766 = vpop.permute.xlu0 %765
        %s768 = sor.u32 256, 8
        %769 = vbcast.lane.b32.xlu0 %v763, %s768
        %v770 = vpop.permute.xlu0 %769
        %s772 = sor.u32 256, 16
        %773 = vbcast.lane.b32.xlu0 %v763, %s772
        %v774 = vpop.permute.xlu0 %773
        %s776 = sor.u32 256, 24
        %777 = vbcast.lane.b32.xlu0 %v763, %s776
        %v778 = vpop.permute.xlu0 %777
        %s780 = sor.u32 256, 32
        %781 = vbcast.lane.b32.xlu0 %v763, %s780
        %v782 = vpop.permute.xlu0 %781
        %s784 = sor.u32 256, 40
        %785 = vbcast.lane.b32.xlu0 %v763, %s784
        %v786 = vpop.permute.xlu0 %785
        %s788 = sor.u32 256, 48
        %789 = vbcast.lane.b32.xlu0 %v763, %s788
        %v790 = vpop.permute.xlu0 %789
        %s792 = sor.u32 256, 56
        %793 = vbcast.lane.b32.xlu0 %v763, %s792
        %v794 = vpop.permute.xlu0 %793
        %v795 = vlaneseq
        %v796 = vshrl.u32 %v795, 7
        %v797 = vsub.s32 2, %v796
        %v798 = vrot.slane %v163, %v797
        %800 = vbcast.lane.b32.xlu0 %v798, 256
        %v801 = vpop.permute.xlu0 %800
        %s803 = sor.u32 256, 8
        %804 = vbcast.lane.b32.xlu0 %v798, %s803
        %v805 = vpop.permute.xlu0 %804
        %s807 = sor.u32 256, 16
        %808 = vbcast.lane.b32.xlu0 %v798, %s807
        %v809 = vpop.permute.xlu0 %808
        %s811 = sor.u32 256, 24
        %812 = vbcast.lane.b32.xlu0 %v798, %s811
        %v813 = vpop.permute.xlu0 %812
        %s815 = sor.u32 256, 32
        %816 = vbcast.lane.b32.xlu0 %v798, %s815
        %v817 = vpop.permute.xlu0 %816
        %s819 = sor.u32 256, 40
        %820 = vbcast.lane.b32.xlu0 %v798, %s819
        %v821 = vpop.permute.xlu0 %820
        %s823 = sor.u32 256, 48
        %824 = vbcast.lane.b32.xlu0 %v798, %s823
        %v825 = vpop.permute.xlu0 %824
        %s827 = sor.u32 256, 56
        %828 = vbcast.lane.b32.xlu0 %v798, %s827
        %v829 = vpop.permute.xlu0 %828
        %v830 = vlaneseq
        %v831 = vshrl.u32 %v830, 7
        %v832 = vsub.s32 3, %v831
        %v833 = vrot.slane %v163, %v832
        %835 = vbcast.lane.b32.xlu0 %v833, 256
        %v836 = vpop.permute.xlu0 %835
        %s838 = sor.u32 256, 8
        %839 = vbcast.lane.b32.xlu0 %v833, %s838
        %v840 = vpop.permute.xlu0 %839
        %s842 = sor.u32 256, 16
        %843 = vbcast.lane.b32.xlu0 %v833, %s842
        %v844 = vpop.permute.xlu0 %843
        %s846 = sor.u32 256, 24
        %847 = vbcast.lane.b32.xlu0 %v833, %s846
        %v848 = vpop.permute.xlu0 %847
        %s850 = sor.u32 256, 32
        %851 = vbcast.lane.b32.xlu0 %v833, %s850
        %v852 = vpop.permute.xlu0 %851
        %s854 = sor.u32 256, 40
        %855 = vbcast.lane.b32.xlu0 %v833, %s854
        %v856 = vpop.permute.xlu0 %855
        %s858 = sor.u32 256, 48
        %859 = vbcast.lane.b32.xlu0 %v833, %s858
        %v860 = vpop.permute.xlu0 %859
        %s862 = sor.u32 256, 56
        %863 = vbcast.lane.b32.xlu0 %v833, %s862
        %v864 = vpop.permute.xlu0 %863
        %v865 = vlaneseq
        %v866 = vshrl.u32 %v865, 7
        %v867 = vsub.s32 4, %v866
        %v868 = vrot.slane %v163, %v867
        %870 = vbcast.lane.b32.xlu0 %v868, 256
        %v871 = vpop.permute.xlu0 %870
        %s873 = sor.u32 256, 8
        %874 = vbcast.lane.b32.xlu0 %v868, %s873
        %v875 = vpop.permute.xlu0 %874
        %s877 = sor.u32 256, 16
        %878 = vbcast.lane.b32.xlu0 %v868, %s877
        %v879 = vpop.permute.xlu0 %878
        %s881 = sor.u32 256, 24
        %882 = vbcast.lane.b32.xlu0 %v868, %s881
        %v883 = vpop.permute.xlu0 %882
        %s885 = sor.u32 256, 32
        %886 = vbcast.lane.b32.xlu0 %v868, %s885
        %v887 = vpop.permute.xlu0 %886
        %s889 = sor.u32 256, 40
        %890 = vbcast.lane.b32.xlu0 %v868, %s889
        %v891 = vpop.permute.xlu0 %890
        %s893 = sor.u32 256, 48
        %894 = vbcast.lane.b32.xlu0 %v868, %s893
        %v895 = vpop.permute.xlu0 %894
        %s897 = sor.u32 256, 56
        %898 = vbcast.lane.b32.xlu0 %v868, %s897
        %v899 = vpop.permute.xlu0 %898
        %v900 = vlaneseq
        %v901 = vshrl.u32 %v900, 7
        %v902 = vsub.s32 5, %v901
        %v903 = vrot.slane %v163, %v902
        %905 = vbcast.lane.b32.xlu0 %v903, 256
        %v906 = vpop.permute.xlu0 %905
        %s908 = sor.u32 256, 8
        %909 = vbcast.lane.b32.xlu0 %v903, %s908
        %v910 = vpop.permute.xlu0 %909
        %s912 = sor.u32 256, 16
        %913 = vbcast.lane.b32.xlu0 %v903, %s912
        %v914 = vpop.permute.xlu0 %913
        %s916 = sor.u32 256, 24
        %917 = vbcast.lane.b32.xlu0 %v903, %s916
        %v918 = vpop.permute.xlu0 %917
        %s920 = sor.u32 256, 32
        %921 = vbcast.lane.b32.xlu0 %v903, %s920
        %v922 = vpop.permute.xlu0 %921
        %s924 = sor.u32 256, 40
        %925 = vbcast.lane.b32.xlu0 %v903, %s924
        %v926 = vpop.permute.xlu0 %925
        %s928 = sor.u32 256, 48
        %929 = vbcast.lane.b32.xlu0 %v903, %s928
        %v930 = vpop.permute.xlu0 %929
        %s932 = sor.u32 256, 56
        %933 = vbcast.lane.b32.xlu0 %v903, %s932
        %v934 = vpop.permute.xlu0 %933
        %v935 = vlaneseq
        %v936 = vshrl.u32 %v935, 7
        %v937 = vsub.s32 6, %v936
        %v938 = vrot.slane %v163, %v937
        %940 = vbcast.lane.b32.xlu0 %v938, 256
        %v941 = vpop.permute.xlu0 %940
        %s943 = sor.u32 256, 8
        %944 = vbcast.lane.b32.xlu0 %v938, %s943
        %v945 = vpop.permute.xlu0 %944
        %s947 = sor.u32 256, 16
        %948 = vbcast.lane.b32.xlu0 %v938, %s947
        %v949 = vpop.permute.xlu0 %948
        %s951 = sor.u32 256, 24
        %952 = vbcast.lane.b32.xlu0 %v938, %s951
        %v953 = vpop.permute.xlu0 %952
        %s955 = sor.u32 256, 32
        %956 = vbcast.lane.b32.xlu0 %v938, %s955
        %v957 = vpop.permute.xlu0 %956
        %s959 = sor.u32 256, 40
        %960 = vbcast.lane.b32.xlu0 %v938, %s959
        %v961 = vpop.permute.xlu0 %960
        %s963 = sor.u32 256, 48
        %964 = vbcast.lane.b32.xlu0 %v938, %s963
        %v965 = vpop.permute.xlu0 %964
        %s967 = sor.u32 256, 56
        %968 = vbcast.lane.b32.xlu0 %v938, %s967
        %v969 = vpop.permute.xlu0 %968
        %v970 = vlaneseq
        %v971 = vshrl.u32 %v970, 7
        %v972 = vsub.s32 7, %v971
        %v973 = vrot.slane %v163, %v972
        %975 = vbcast.lane.b32.xlu0 %v973, 256
        %v976 = vpop.permute.xlu0 %975
        %s978 = sor.u32 256, 8
        %979 = vbcast.lane.b32.xlu0 %v973, %s978
        %v980 = vpop.permute.xlu0 %979
        %s982 = sor.u32 256, 16
        %983 = vbcast.lane.b32.xlu0 %v973, %s982
        %v984 = vpop.permute.xlu0 %983
        %s986 = sor.u32 256, 24
        %987 = vbcast.lane.b32.xlu0 %v973, %s986
        %v988 = vpop.permute.xlu0 %987
        %s990 = sor.u32 256, 32
        %991 = vbcast.lane.b32.xlu0 %v973, %s990
        %v992 = vpop.permute.xlu0 %991
        %s994 = sor.u32 256, 40
        %995 = vbcast.lane.b32.xlu0 %v973, %s994
        %v996 = vpop.permute.xlu0 %995
        %s998 = sor.u32 256, 48
        %999 = vbcast.lane.b32.xlu0 %v973, %s998
        %v1000 = vpop.permute.xlu0 %999
        %s1002 = sor.u32 256, 56
        %1003 = vbcast.lane.b32.xlu0 %v973, %s1002
        %v1004 = vpop.permute.xlu0 %1003
        %v1005 = vlaneseq
        %v1006 = vshrl.u32 %v1005, 7
        %v1007 = vsub.s32 0, %v1006
        %v1008 = vrot.slane %v164, %v1007
        %1010 = vbcast.lane.b32.xlu0 %v1008, 256
        %v1011 = vpop.permute.xlu0 %1010
        %s1013 = sor.u32 256, 8
        %1014 = vbcast.lane.b32.xlu0 %v1008, %s1013
        %v1015 = vpop.permute.xlu0 %1014
        %s1017 = sor.u32 256, 16
        %1018 = vbcast.lane.b32.xlu0 %v1008, %s1017
        %v1019 = vpop.permute.xlu0 %1018
        %s1021 = sor.u32 256, 24
        %1022 = vbcast.lane.b32.xlu0 %v1008, %s1021
        %v1023 = vpop.permute.xlu0 %1022
        %s1025 = sor.u32 256, 32
        %1026 = vbcast.lane.b32.xlu0 %v1008, %s1025
        %v1027 = vpop.permute.xlu0 %1026
        %s1029 = sor.u32 256, 40
        %1030 = vbcast.lane.b32.xlu0 %v1008, %s1029
        %v1031 = vpop.permute.xlu0 %1030
        %s1033 = sor.u32 256, 48
        %1034 = vbcast.lane.b32.xlu0 %v1008, %s1033
        %v1035 = vpop.permute.xlu0 %1034
        %s1037 = sor.u32 256, 56
        %1038 = vbcast.lane.b32.xlu0 %v1008, %s1037
        %v1039 = vpop.permute.xlu0 %1038
        %v1040 = vlaneseq
        %v1041 = vshrl.u32 %v1040, 7
        %v1042 = vsub.s32 1, %v1041
        %v1043 = vrot.slane %v164, %v1042
        %1045 = vbcast.lane.b32.xlu0 %v1043, 256
        %v1046 = vpop.permute.xlu0 %1045
        %s1048 = sor.u32 256, 8
        %1049 = vbcast.lane.b32.xlu0 %v1043, %s1048
        %v1050 = vpop.permute.xlu0 %1049
        %s1052 = sor.u32 256, 16
        %1053 = vbcast.lane.b32.xlu0 %v1043, %s1052
        %v1054 = vpop.permute.xlu0 %1053
        %s1056 = sor.u32 256, 24
        %1057 = vbcast.lane.b32.xlu0 %v1043, %s1056
        %v1058 = vpop.permute.xlu0 %1057
        %s1060 = sor.u32 256, 32
        %1061 = vbcast.lane.b32.xlu0 %v1043, %s1060
        %v1062 = vpop.permute.xlu0 %1061
        %s1064 = sor.u32 256, 40
        %1065 = vbcast.lane.b32.xlu0 %v1043, %s1064
        %v1066 = vpop.permute.xlu0 %1065
        %s1068 = sor.u32 256, 48
        %1069 = vbcast.lane.b32.xlu0 %v1043, %s1068
        %v1070 = vpop.permute.xlu0 %1069
        %s1072 = sor.u32 256, 56
        %1073 = vbcast.lane.b32.xlu0 %v1043, %s1072
        %v1074 = vpop.permute.xlu0 %1073
        %v1075 = vlaneseq
        %v1076 = vshrl.u32 %v1075, 7
        %v1077 = vsub.s32 2, %v1076
        %v1078 = vrot.slane %v164, %v1077
        %1080 = vbcast.lane.b32.xlu0 %v1078, 256
        %v1081 = vpop.permute.xlu0 %1080
        %s1083 = sor.u32 256, 8
        %1084 = vbcast.lane.b32.xlu0 %v1078, %s1083
        %v1085 = vpop.permute.xlu0 %1084
        %s1087 = sor.u32 256, 16
        %1088 = vbcast.lane.b32.xlu0 %v1078, %s1087
        %v1089 = vpop.permute.xlu0 %1088
        %s1091 = sor.u32 256, 24
        %1092 = vbcast.lane.b32.xlu0 %v1078, %s1091
        %v1093 = vpop.permute.xlu0 %1092
        %s1095 = sor.u32 256, 32
        %1096 = vbcast.lane.b32.xlu0 %v1078, %s1095
        %v1097 = vpop.permute.xlu0 %1096
        %s1099 = sor.u32 256, 40
        %1100 = vbcast.lane.b32.xlu0 %v1078, %s1099
        %v1101 = vpop.permute.xlu0 %1100
        %s1103 = sor.u32 256, 48
        %1104 = vbcast.lane.b32.xlu0 %v1078, %s1103
        %v1105 = vpop.permute.xlu0 %1104
        %s1107 = sor.u32 256, 56
        %1108 = vbcast.lane.b32.xlu0 %v1078, %s1107
        %v1109 = vpop.permute.xlu0 %1108
        %v1110 = vlaneseq
        %v1111 = vshrl.u32 %v1110, 7
        %v1112 = vsub.s32 3, %v1111
        %v1113 = vrot.slane %v164, %v1112
        %1115 = vbcast.lane.b32.xlu0 %v1113, 256
        %v1116 = vpop.permute.xlu0 %1115
        %s1118 = sor.u32 256, 8
        %1119 = vbcast.lane.b32.xlu0 %v1113, %s1118
        %v1120 = vpop.permute.xlu0 %1119
        %s1122 = sor.u32 256, 16
        %1123 = vbcast.lane.b32.xlu0 %v1113, %s1122
        %v1124 = vpop.permute.xlu0 %1123
        %s1126 = sor.u32 256, 24
        %1127 = vbcast.lane.b32.xlu0 %v1113, %s1126
        %v1128 = vpop.permute.xlu0 %1127
        %s1130 = sor.u32 256, 32
        %1131 = vbcast.lane.b32.xlu0 %v1113, %s1130
        %v1132 = vpop.permute.xlu0 %1131
        %s1134 = sor.u32 256, 40
        %1135 = vbcast.lane.b32.xlu0 %v1113, %s1134
        %v1136 = vpop.permute.xlu0 %1135
        %s1138 = sor.u32 256, 48
        %1139 = vbcast.lane.b32.xlu0 %v1113, %s1138
        %v1140 = vpop.permute.xlu0 %1139
        %s1142 = sor.u32 256, 56
        %1143 = vbcast.lane.b32.xlu0 %v1113, %s1142
        %v1144 = vpop.permute.xlu0 %1143
        %v1145 = vlaneseq
        %v1146 = vshrl.u32 %v1145, 7
        %v1147 = vsub.s32 4, %v1146
        %v1148 = vrot.slane %v164, %v1147
        %1150 = vbcast.lane.b32.xlu0 %v1148, 256
        %v1151 = vpop.permute.xlu0 %1150
        %s1153 = sor.u32 256, 8
        %1154 = vbcast.lane.b32.xlu0 %v1148, %s1153
        %v1155 = vpop.permute.xlu0 %1154
        %s1157 = sor.u32 256, 16
        %1158 = vbcast.lane.b32.xlu0 %v1148, %s1157
        %v1159 = vpop.permute.xlu0 %1158
        %s1161 = sor.u32 256, 24
        %1162 = vbcast.lane.b32.xlu0 %v1148, %s1161
        %v1163 = vpop.permute.xlu0 %1162
        %s1165 = sor.u32 256, 32
        %1166 = vbcast.lane.b32.xlu0 %v1148, %s1165
        %v1167 = vpop.permute.xlu0 %1166
        %s1169 = sor.u32 256, 40
        %1170 = vbcast.lane.b32.xlu0 %v1148, %s1169
        %v1171 = vpop.permute.xlu0 %1170
        %s1173 = sor.u32 256, 48
        %1174 = vbcast.lane.b32.xlu0 %v1148, %s1173
        %v1175 = vpop.permute.xlu0 %1174
        %s1177 = sor.u32 256, 56
        %1178 = vbcast.lane.b32.xlu0 %v1148, %s1177
        %v1179 = vpop.permute.xlu0 %1178
        %v1180 = vlaneseq
        %v1181 = vshrl.u32 %v1180, 7
        %v1182 = vsub.s32 5, %v1181
        %v1183 = vrot.slane %v164, %v1182
        %1185 = vbcast.lane.b32.xlu0 %v1183, 256
        %v1186 = vpop.permute.xlu0 %1185
        %s1188 = sor.u32 256, 8
        %1189 = vbcast.lane.b32.xlu0 %v1183, %s1188
        %v1190 = vpop.permute.xlu0 %1189
        %s1192 = sor.u32 256, 16
        %1193 = vbcast.lane.b32.xlu0 %v1183, %s1192
        %v1194 = vpop.permute.xlu0 %1193
        %s1196 = sor.u32 256, 24
        %1197 = vbcast.lane.b32.xlu0 %v1183, %s1196
        %v1198 = vpop.permute.xlu0 %1197
        %s1200 = sor.u32 256, 32
        %1201 = vbcast.lane.b32.xlu0 %v1183, %s1200
        %v1202 = vpop.permute.xlu0 %1201
        %s1204 = sor.u32 256, 40
        %1205 = vbcast.lane.b32.xlu0 %v1183, %s1204
        %v1206 = vpop.permute.xlu0 %1205
        %s1208 = sor.u32 256, 48
        %1209 = vbcast.lane.b32.xlu0 %v1183, %s1208
        %v1210 = vpop.permute.xlu0 %1209
        %s1212 = sor.u32 256, 56
        %1213 = vbcast.lane.b32.xlu0 %v1183, %s1212
        %v1214 = vpop.permute.xlu0 %1213
        %v1215 = vlaneseq
        %v1216 = vshrl.u32 %v1215, 7
        %v1217 = vsub.s32 6, %v1216
        %v1218 = vrot.slane %v164, %v1217
        %1220 = vbcast.lane.b32.xlu0 %v1218, 256
        %v1221 = vpop.permute.xlu0 %1220
        %s1223 = sor.u32 256, 8
        %1224 = vbcast.lane.b32.xlu0 %v1218, %s1223
        %v1225 = vpop.permute.xlu0 %1224
        %s1227 = sor.u32 256, 16
        %1228 = vbcast.lane.b32.xlu0 %v1218, %s1227
        %v1229 = vpop.permute.xlu0 %1228
        %s1231 = sor.u32 256, 24
        %1232 = vbcast.lane.b32.xlu0 %v1218, %s1231
        %v1233 = vpop.permute.xlu0 %1232
        %s1235 = sor.u32 256, 32
        %1236 = vbcast.lane.b32.xlu0 %v1218, %s1235
        %v1237 = vpop.permute.xlu0 %1236
        %s1239 = sor.u32 256, 40
        %1240 = vbcast.lane.b32.xlu0 %v1218, %s1239
        %v1241 = vpop.permute.xlu0 %1240
        %s1243 = sor.u32 256, 48
        %1244 = vbcast.lane.b32.xlu0 %v1218, %s1243
        %v1245 = vpop.permute.xlu0 %1244
        %s1247 = sor.u32 256, 56
        %1248 = vbcast.lane.b32.xlu0 %v1218, %s1247
        %v1249 = vpop.permute.xlu0 %1248
        %v1250 = vlaneseq
        %v1251 = vshrl.u32 %v1250, 7
        %v1252 = vsub.s32 7, %v1251
        %v1253 = vrot.slane %v164, %v1252
        %1255 = vbcast.lane.b32.xlu0 %v1253, 256
        %v1256 = vpop.permute.xlu0 %1255
        %s1258 = sor.u32 256, 8
        %1259 = vbcast.lane.b32.xlu0 %v1253, %s1258
        %v1260 = vpop.permute.xlu0 %1259
        %s1262 = sor.u32 256, 16
        %1263 = vbcast.lane.b32.xlu0 %v1253, %s1262
        %v1264 = vpop.permute.xlu0 %1263
        %s1266 = sor.u32 256, 24
        %1267 = vbcast.lane.b32.xlu0 %v1253, %s1266
        %v1268 = vpop.permute.xlu0 %1267
        %s1270 = sor.u32 256, 32
        %1271 = vbcast.lane.b32.xlu0 %v1253, %s1270
        %v1272 = vpop.permute.xlu0 %1271
        %s1274 = sor.u32 256, 40
        %1275 = vbcast.lane.b32.xlu0 %v1253, %s1274
        %v1276 = vpop.permute.xlu0 %1275
        %s1278 = sor.u32 256, 48
        %1279 = vbcast.lane.b32.xlu0 %v1253, %s1278
        %v1280 = vpop.permute.xlu0 %1279
        %s1282 = sor.u32 256, 56
        %1283 = vbcast.lane.b32.xlu0 %v1253, %s1282
        %v1284 = vpop.permute.xlu0 %1283
        %v1285 = vcombine.low %v171, %v241
        %v1286 = vcombine.high %v171, %v241
        %v1288 = vunpack.c.l.s4 1983009808
        %v1289 = vunpack.c.0.s8 %v1288
        %v1290 = vlaneseq
        %v1291 = vshrl.u32 %v1290, 7
        %v1292 = vsub.s32 %v1289, %v1291
        %v1293 = vrot.slane %v1285, %v1292
        %v1295 = vunpack.c.l.s4 1983009808
        %v1296 = vunpack.c.0.s8 %v1295
        %v1297 = vlaneseq
        %v1298 = vshrl.u32 %v1297, 7
        %v1299 = vsub.s32 %v1296, %v1298
        %v1300 = vrot.slane %v1286, %v1299
        %v1301 = vcombine.low %v206, %v276
        %v1302 = vcombine.high %v206, %v276
        %v1304 = vunpack.c.l.s4 1983009808
        %v1305 = vunpack.c.0.s8 %v1304
        %v1306 = vlaneseq
        %v1307 = vshrl.u32 %v1306, 7
        %v1308 = vsub.s32 %v1305, %v1307
        %v1309 = vrot.slane %v1301, %v1308
        %v1311 = vunpack.c.l.s4 1983009808
        %v1312 = vunpack.c.0.s8 %v1311
        %v1313 = vlaneseq
        %v1314 = vshrl.u32 %v1313, 7
        %v1315 = vsub.s32 %v1312, %v1314
        %v1316 = vrot.slane %v1302, %v1315
        %v1317 = vcombine.low %v311, %v381
        %v1318 = vcombine.high %v311, %v381
        %v1320 = vunpack.c.l.s4 1983009808
        %v1321 = vunpack.c.0.s8 %v1320
        %v1322 = vlaneseq
        %v1323 = vshrl.u32 %v1322, 7
        %v1324 = vsub.s32 %v1321, %v1323
        %v1325 = vrot.slane %v1317, %v1324
        %v1327 = vunpack.c.l.s4 1983009808
        %v1328 = vunpack.c.0.s8 %v1327
        %v1329 = vlaneseq
        %v1330 = vshrl.u32 %v1329, 7
        %v1331 = vsub.s32 %v1328, %v1330
        %v1332 = vrot.slane %v1318, %v1331
        %v1333 = vcombine.low %v346, %v416
        %v1334 = vcombine.high %v346, %v416
        %v1336 = vunpack.c.l.s4 1983009808
        %v1337 = vunpack.c.0.s8 %v1336
        %v1338 = vlaneseq
        %v1339 = vshrl.u32 %v1338, 7
        %v1340 = vsub.s32 %v1337, %v1339
        %v1341 = vrot.slane %v1333, %v1340
        %v1343 = vunpack.c.l.s4 1983009808
        %v1344 = vunpack.c.0.s8 %v1343
        %v1345 = vlaneseq
        %v1346 = vshrl.u32 %v1345, 7
        %v1347 = vsub.s32 %v1344, %v1346
        %v1348 = vrot.slane %v1334, %v1347
        %v1349 = vcombine.low %v1293, %v1309
        %v1350 = vcombine.high %v1293, %v1309
        %v1352 = vunpack.c.l.s4 1934713408
        %v1353 = vunpack.c.0.s8 %v1352
        %v1354 = vlaneseq
        %v1355 = vshrl.u32 %v1354, 7
        %v1356 = vsub.s32 %v1353, %v1355
        %v1357 = vrot.slane %v1349, %v1356
        %v1359 = vunpack.c.l.s4 1934713408
        %v1360 = vunpack.c.0.s8 %v1359
        %v1361 = vlaneseq
        %v1362 = vshrl.u32 %v1361, 7
        %v1363 = vsub.s32 %v1360, %v1362
        %v1364 = vrot.slane %v1350, %v1363
        %v1365 = vcombine.low %v1300, %v1316
        %v1366 = vcombine.high %v1300, %v1316
        %v1368 = vunpack.c.l.s4 1934713408
        %v1369 = vunpack.c.0.s8 %v1368
        %v1370 = vlaneseq
        %v1371 = vshrl.u32 %v1370, 7
        %v1372 = vsub.s32 %v1369, %v1371
        %v1373 = vrot.slane %v1365, %v1372
        %v1375 = vunpack.c.l.s4 1934713408
        %v1376 = vunpack.c.0.s8 %v1375
        %v1377 = vlaneseq
        %v1378 = vshrl.u32 %v1377, 7
        %v1379 = vsub.s32 %v1376, %v1378
        %v1380 = vrot.slane %v1366, %v1379
        %v1381 = vcombine.low %v1325, %v1341
        %v1382 = vcombine.high %v1325, %v1341
        %v1384 = vunpack.c.l.s4 1934713408
        %v1385 = vunpack.c.0.s8 %v1384
        %v1386 = vlaneseq
        %v1387 = vshrl.u32 %v1386, 7
        %v1388 = vsub.s32 %v1385, %v1387
        %v1389 = vrot.slane %v1381, %v1388
        %v1391 = vunpack.c.l.s4 1934713408
        %v1392 = vunpack.c.0.s8 %v1391
        %v1393 = vlaneseq
        %v1394 = vshrl.u32 %v1393, 7
        %v1395 = vsub.s32 %v1392, %v1394
        %v1396 = vrot.slane %v1382, %v1395
        %v1397 = vcombine.low %v1332, %v1348
        %v1398 = vcombine.high %v1332, %v1348
        %v1400 = vunpack.c.l.s4 1934713408
        %v1401 = vunpack.c.0.s8 %v1400
        %v1402 = vlaneseq
        %v1403 = vshrl.u32 %v1402, 7
        %v1404 = vsub.s32 %v1401, %v1403
        %v1405 = vrot.slane %v1397, %v1404
        %v1407 = vunpack.c.l.s4 1934713408
        %v1408 = vunpack.c.0.s8 %v1407
        %v1409 = vlaneseq
        %v1410 = vshrl.u32 %v1409, 7
        %v1411 = vsub.s32 %v1408, %v1410
        %v1412 = vrot.slane %v1398, %v1411
        %v1413 = vcombine.low %v1357, %v1389
        %v1414 = vcombine.high %v1357, %v1389
        %v1415 = vcombine.low %v1364, %v1396
        %v1416 = vcombine.high %v1364, %v1396
        %v1417 = vcombine.low %v1373, %v1405
        %v1418 = vcombine.high %v1373, %v1405
        %v1419 = vcombine.low %v1380, %v1412
        %v1420 = vcombine.high %v1380, %v1412
        %v1421 = vcombine.low %v451, %v521
        %v1422 = vcombine.high %v451, %v521
        %v1424 = vunpack.c.l.s4 1983009808
        %v1425 = vunpack.c.0.s8 %v1424
        %v1426 = vlaneseq
        %v1427 = vshrl.u32 %v1426, 7
        %v1428 = vsub.s32 %v1425, %v1427
        %v1429 = vrot.slane %v1421, %v1428
        %v1431 = vunpack.c.l.s4 1983009808
        %v1432 = vunpack.c.0.s8 %v1431
        %v1433 = vlaneseq
        %v1434 = vshrl.u32 %v1433, 7
        %v1435 = vsub.s32 %v1432, %v1434
        %v1436 = vrot.slane %v1422, %v1435
        %v1437 = vcombine.low %v486, %v556
        %v1438 = vcombine.high %v486, %v556
        %v1440 = vunpack.c.l.s4 1983009808
        %v1441 = vunpack.c.0.s8 %v1440
        %v1442 = vlaneseq
        %v1443 = vshrl.u32 %v1442, 7
        %v1444 = vsub.s32 %v1441, %v1443
        %v1445 = vrot.slane %v1437, %v1444
        %v1447 = vunpack.c.l.s4 1983009808
        %v1448 = vunpack.c.0.s8 %v1447
        %v1449 = vlaneseq
        %v1450 = vshrl.u32 %v1449, 7
        %v1451 = vsub.s32 %v1448, %v1450
        %v1452 = vrot.slane %v1438, %v1451
        %v1453 = vcombine.low %v591, %v661
        %v1454 = vcombine.high %v591, %v661
        %v1456 = vunpack.c.l.s4 1983009808
        %v1457 = vunpack.c.0.s8 %v1456
        %v1458 = vlaneseq
        %v1459 = vshrl.u32 %v1458, 7
        %v1460 = vsub.s32 %v1457, %v1459
        %v1461 = vrot.slane %v1453, %v1460
        %v1463 = vunpack.c.l.s4 1983009808
        %v1464 = vunpack.c.0.s8 %v1463
        %v1465 = vlaneseq
        %v1466 = vshrl.u32 %v1465, 7
        %v1467 = vsub.s32 %v1464, %v1466
        %v1468 = vrot.slane %v1454, %v1467
        %v1469 = vcombine.low %v626, %v696
        %v1470 = vcombine.high %v626, %v696
        %v1472 = vunpack.c.l.s4 1983009808
        %v1473 = vunpack.c.0.s8 %v1472
        %v1474 = vlaneseq
        %v1475 = vshrl.u32 %v1474, 7
        %v1476 = vsub.s32 %v1473, %v1475
        %v1477 = vrot.slane %v1469, %v1476
        %v1479 = vunpack.c.l.s4 1983009808
        %v1480 = vunpack.c.0.s8 %v1479
        %v1481 = vlaneseq
        %v1482 = vshrl.u32 %v1481, 7
        %v1483 = vsub.s32 %v1480, %v1482
        %v1484 = vrot.slane %v1470, %v1483
        %v1485 = vcombine.low %v1429, %v1445
        %v1486 = vcombine.high %v1429, %v1445
        %v1488 = vunpack.c.l.s4 1934713408
        %v1489 = vunpack.c.0.s8 %v1488
        %v1490 = vlaneseq
        %v1491 = vshrl.u32 %v1490, 7
        %v1492 = vsub.s32 %v1489, %v1491
        %v1493 = vrot.slane %v1485, %v1492
        %v1495 = vunpack.c.l.s4 1934713408
        %v1496 = vunpack.c.0.s8 %v1495
        %v1497 = vlaneseq
        %v1498 = vshrl.u32 %v1497, 7
        %v1499 = vsub.s32 %v1496, %v1498
        %v1500 = vrot.slane %v1486, %v1499
        %v1501 = vcombine.low %v1436, %v1452
        %v1502 = vcombine.high %v1436, %v1452
        %v1504 = vunpack.c.l.s4 1934713408
        %v1505 = vunpack.c.0.s8 %v1504
        %v1506 = vlaneseq
        %v1507 = vshrl.u32 %v1506, 7
        %v1508 = vsub.s32 %v1505, %v1507
        %v1509 = vrot.slane %v1501, %v1508
        %v1511 = vunpack.c.l.s4 1934713408
        %v1512 = vunpack.c.0.s8 %v1511
        %v1513 = vlaneseq
        %v1514 = vshrl.u32 %v1513, 7
        %v1515 = vsub.s32 %v1512, %v1514
        %v1516 = vrot.slane %v1502, %v1515
        %v1517 = vcombine.low %v1461, %v1477
        %v1518 = vcombine.high %v1461, %v1477
        %v1520 = vunpack.c.l.s4 1934713408
        %v1521 = vunpack.c.0.s8 %v1520
        %v1522 = vlaneseq
        %v1523 = vshrl.u32 %v1522, 7
        %v1524 = vsub.s32 %v1521, %v1523
        %v1525 = vrot.slane %v1517, %v1524
        %v1527 = vunpack.c.l.s4 1934713408
        %v1528 = vunpack.c.0.s8 %v1527
        %v1529 = vlaneseq
        %v1530 = vshrl.u32 %v1529, 7
        %v1531 = vsub.s32 %v1528, %v1530
        %v1532 = vrot.slane %v1518, %v1531
        %v1533 = vcombine.low %v1468, %v1484
        %v1534 = vcombine.high %v1468, %v1484
        %v1536 = vunpack.c.l.s4 1934713408
        %v1537 = vunpack.c.0.s8 %v1536
        %v1538 = vlaneseq
        %v1539 = vshrl.u32 %v1538, 7
        %v1540 = vsub.s32 %v1537, %v1539
        %v1541 = vrot.slane %v1533, %v1540
        %v1543 = vunpack.c.l.s4 1934713408
        %v1544 = vunpack.c.0.s8 %v1543
        %v1545 = vlaneseq
        %v1546 = vshrl.u32 %v1545, 7
        %v1547 = vsub.s32 %v1544, %v1546
        %v1548 = vrot.slane %v1534, %v1547
        %v1549 = vcombine.low %v1493, %v1525
        %v1550 = vcombine.high %v1493, %v1525
        %v1551 = vcombine.low %v1500, %v1532
        %v1552 = vcombine.high %v1500, %v1532
        %v1553 = vcombine.low %v1509, %v1541
        %v1554 = vcombine.high %v1509, %v1541
        %v1555 = vcombine.low %v1516, %v1548
        %v1556 = vcombine.high %v1516, %v1548
        %v1557 = vcombine.low %v731, %v801
        %v1558 = vcombine.high %v731, %v801
        %v1560 = vunpack.c.l.s4 1983009808
        %v1561 = vunpack.c.0.s8 %v1560
        %v1562 = vlaneseq
        %v1563 = vshrl.u32 %v1562, 7
        %v1564 = vsub.s32 %v1561, %v1563
        %v1565 = vrot.slane %v1557, %v1564
        %v1567 = vunpack.c.l.s4 1983009808
        %v1568 = vunpack.c.0.s8 %v1567
        %v1569 = vlaneseq
        %v1570 = vshrl.u32 %v1569, 7
        %v1571 = vsub.s32 %v1568, %v1570
        %v1572 = vrot.slane %v1558, %v1571
        %v1573 = vcombine.low %v766, %v836
        %v1574 = vcombine.high %v766, %v836
        %v1576 = vunpack.c.l.s4 1983009808
        %v1577 = vunpack.c.0.s8 %v1576
        %v1578 = vlaneseq
        %v1579 = vshrl.u32 %v1578, 7
        %v1580 = vsub.s32 %v1577, %v1579
        %v1581 = vrot.slane %v1573, %v1580
        %v1583 = vunpack.c.l.s4 1983009808
        %v1584 = vunpack.c.0.s8 %v1583
        %v1585 = vlaneseq
        %v1586 = vshrl.u32 %v1585, 7
        %v1587 = vsub.s32 %v1584, %v1586
        %v1588 = vrot.slane %v1574, %v1587
        %v1589 = vcombine.low %v871, %v941
        %v1590 = vcombine.high %v871, %v941
        %v1592 = vunpack.c.l.s4 1983009808
        %v1593 = vunpack.c.0.s8 %v1592
        %v1594 = vlaneseq
        %v1595 = vshrl.u32 %v1594, 7
        %v1596 = vsub.s32 %v1593, %v1595
        %v1597 = vrot.slane %v1589, %v1596
        %v1599 = vunpack.c.l.s4 1983009808
        %v1600 = vunpack.c.0.s8 %v1599
        %v1601 = vlaneseq
        %v1602 = vshrl.u32 %v1601, 7
        %v1603 = vsub.s32 %v1600, %v1602
        %v1604 = vrot.slane %v1590, %v1603
        %v1605 = vcombine.low %v906, %v976
        %v1606 = vcombine.high %v906, %v976
        %v1608 = vunpack.c.l.s4 1983009808
        %v1609 = vunpack.c.0.s8 %v1608
        %v1610 = vlaneseq
        %v1611 = vshrl.u32 %v1610, 7
        %v1612 = vsub.s32 %v1609, %v1611
        %v1613 = vrot.slane %v1605, %v1612
        %v1615 = vunpack.c.l.s4 1983009808
        %v1616 = vunpack.c.0.s8 %v1615
        %v1617 = vlaneseq
        %v1618 = vshrl.u32 %v1617, 7
        %v1619 = vsub.s32 %v1616, %v1618
        %v1620 = vrot.slane %v1606, %v1619
        %v1621 = vcombine.low %v1565, %v1581
        %v1622 = vcombine.high %v1565, %v1581
        %v1624 = vunpack.c.l.s4 1934713408
        %v1625 = vunpack.c.0.s8 %v1624
        %v1626 = vlaneseq
        %v1627 = vshrl.u32 %v1626, 7
        %v1628 = vsub.s32 %v1625, %v1627
        %v1629 = vrot.slane %v1621, %v1628
        %v1631 = vunpack.c.l.s4 1934713408
        %v1632 = vunpack.c.0.s8 %v1631
        %v1633 = vlaneseq
        %v1634 = vshrl.u32 %v1633, 7
        %v1635 = vsub.s32 %v1632, %v1634
        %v1636 = vrot.slane %v1622, %v1635
        %v1637 = vcombine.low %v1572, %v1588
        %v1638 = vcombine.high %v1572, %v1588
        %v1640 = vunpack.c.l.s4 1934713408
        %v1641 = vunpack.c.0.s8 %v1640
        %v1642 = vlaneseq
        %v1643 = vshrl.u32 %v1642, 7
        %v1644 = vsub.s32 %v1641, %v1643
        %v1645 = vrot.slane %v1637, %v1644
        %v1647 = vunpack.c.l.s4 1934713408
        %v1648 = vunpack.c.0.s8 %v1647
        %v1649 = vlaneseq
        %v1650 = vshrl.u32 %v1649, 7
        %v1651 = vsub.s32 %v1648, %v1650
        %v1652 = vrot.slane %v1638, %v1651
        %v1653 = vcombine.low %v1597, %v1613
        %v1654 = vcombine.high %v1597, %v1613
        %v1656 = vunpack.c.l.s4 1934713408
        %v1657 = vunpack.c.0.s8 %v1656
        %v1658 = vlaneseq
        %v1659 = vshrl.u32 %v1658, 7
        %v1660 = vsub.s32 %v1657, %v1659
        %v1661 = vrot.slane %v1653, %v1660
        %v1663 = vunpack.c.l.s4 1934713408
        %v1664 = vunpack.c.0.s8 %v1663
        %v1665 = vlaneseq
        %v1666 = vshrl.u32 %v1665, 7
        %v1667 = vsub.s32 %v1664, %v1666
        %v1668 = vrot.slane %v1654, %v1667
        %v1669 = vcombine.low %v1604, %v1620
        %v1670 = vcombine.high %v1604, %v1620
        %v1672 = vunpack.c.l.s4 1934713408
        %v1673 = vunpack.c.0.s8 %v1672
        %v1674 = vlaneseq
        %v1675 = vshrl.u32 %v1674, 7
        %v1676 = vsub.s32 %v1673, %v1675
        %v1677 = vrot.slane %v1669, %v1676
        %v1679 = vunpack.c.l.s4 1934713408
        %v1680 = vunpack.c.0.s8 %v1679
        %v1681 = vlaneseq
        %v1682 = vshrl.u32 %v1681, 7
        %v1683 = vsub.s32 %v1680, %v1682
        %v1684 = vrot.slane %v1670, %v1683
        %v1685 = vcombine.low %v1629, %v1661
        %v1686 = vcombine.high %v1629, %v1661
        %v1687 = vcombine.low %v1636, %v1668
        %v1688 = vcombine.high %v1636, %v1668
        %v1689 = vcombine.low %v1645, %v1677
        %v1690 = vcombine.high %v1645, %v1677
        %v1691 = vcombine.low %v1652, %v1684
        %v1692 = vcombine.high %v1652, %v1684
        %v1693 = vcombine.low %v1011, %v1081
        %v1694 = vcombine.high %v1011, %v1081
        %v1696 = vunpack.c.l.s4 1983009808
        %v1697 = vunpack.c.0.s8 %v1696
        %v1698 = vlaneseq
        %v1699 = vshrl.u32 %v1698, 7
        %v1700 = vsub.s32 %v1697, %v1699
        %v1701 = vrot.slane %v1693, %v1700
        %v1703 = vunpack.c.l.s4 1983009808
        %v1704 = vunpack.c.0.s8 %v1703
        %v1705 = vlaneseq
        %v1706 = vshrl.u32 %v1705, 7
        %v1707 = vsub.s32 %v1704, %v1706
        %v1708 = vrot.slane %v1694, %v1707
        %v1709 = vcombine.low %v1046, %v1116
        %v1710 = vcombine.high %v1046, %v1116
        %v1712 = vunpack.c.l.s4 1983009808
        %v1713 = vunpack.c.0.s8 %v1712
        %v1714 = vlaneseq
        %v1715 = vshrl.u32 %v1714, 7
        %v1716 = vsub.s32 %v1713, %v1715
        %v1717 = vrot.slane %v1709, %v1716
        %v1719 = vunpack.c.l.s4 1983009808
        %v1720 = vunpack.c.0.s8 %v1719
        %v1721 = vlaneseq
        %v1722 = vshrl.u32 %v1721, 7
        %v1723 = vsub.s32 %v1720, %v1722
        %v1724 = vrot.slane %v1710, %v1723
        %v1725 = vcombine.low %v1151, %v1221
        %v1726 = vcombine.high %v1151, %v1221
        %v1728 = vunpack.c.l.s4 1983009808
        %v1729 = vunpack.c.0.s8 %v1728
        %v1730 = vlaneseq
        %v1731 = vshrl.u32 %v1730, 7
        %v1732 = vsub.s32 %v1729, %v1731
        %v1733 = vrot.slane %v1725, %v1732
        %v1735 = vunpack.c.l.s4 1983009808
        %v1736 = vunpack.c.0.s8 %v1735
        %v1737 = vlaneseq
        %v1738 = vshrl.u32 %v1737, 7
        %v1739 = vsub.s32 %v1736, %v1738
        %v1740 = vrot.slane %v1726, %v1739
        %v1741 = vcombine.low %v1186, %v1256
        %v1742 = vcombine.high %v1186, %v1256
        %v1744 = vunpack.c.l.s4 1983009808
        %v1745 = vunpack.c.0.s8 %v1744
        %v1746 = vlaneseq
        %v1747 = vshrl.u32 %v1746, 7
        %v1748 = vsub.s32 %v1745, %v1747
        %v1749 = vrot.slane %v1741, %v1748
        %v1751 = vunpack.c.l.s4 1983009808
        %v1752 = vunpack.c.0.s8 %v1751
        %v1753 = vlaneseq
        %v1754 = vshrl.u32 %v1753, 7
        %v1755 = vsub.s32 %v1752, %v1754
        %v1756 = vrot.slane %v1742, %v1755
        %v1757 = vcombine.low %v1701, %v1717
        %v1758 = vcombine.high %v1701, %v1717
        %v1760 = vunpack.c.l.s4 1934713408
        %v1761 = vunpack.c.0.s8 %v1760
        %v1762 = vlaneseq
        %v1763 = vshrl.u32 %v1762, 7
        %v1764 = vsub.s32 %v1761, %v1763
        %v1765 = vrot.slane %v1757, %v1764
        %v1767 = vunpack.c.l.s4 1934713408
        %v1768 = vunpack.c.0.s8 %v1767
        %v1769 = vlaneseq
        %v1770 = vshrl.u32 %v1769, 7
        %v1771 = vsub.s32 %v1768, %v1770
        %v1772 = vrot.slane %v1758, %v1771
        %v1773 = vcombine.low %v1708, %v1724
        %v1774 = vcombine.high %v1708, %v1724
        %v1776 = vunpack.c.l.s4 1934713408
        %v1777 = vunpack.c.0.s8 %v1776
        %v1778 = vlaneseq
        %v1779 = vshrl.u32 %v1778, 7
        %v1780 = vsub.s32 %v1777, %v1779
        %v1781 = vrot.slane %v1773, %v1780
        %v1783 = vunpack.c.l.s4 1934713408
        %v1784 = vunpack.c.0.s8 %v1783
        %v1785 = vlaneseq
        %v1786 = vshrl.u32 %v1785, 7
        %v1787 = vsub.s32 %v1784, %v1786
        %v1788 = vrot.slane %v1774, %v1787
        %v1789 = vcombine.low %v1733, %v1749
        %v1790 = vcombine.high %v1733, %v1749
        %v1792 = vunpack.c.l.s4 1934713408
        %v1793 = vunpack.c.0.s8 %v1792
        %v1794 = vlaneseq
        %v1795 = vshrl.u32 %v1794, 7
        %v1796 = vsub.s32 %v1793, %v1795
        %v1797 = vrot.slane %v1789, %v1796
        %v1799 = vunpack.c.l.s4 1934713408
        %v1800 = vunpack.c.0.s8 %v1799
        %v1801 = vlaneseq
        %v1802 = vshrl.u32 %v1801, 7
        %v1803 = vsub.s32 %v1800, %v1802
        %v1804 = vrot.slane %v1790, %v1803
        %v1805 = vcombine.low %v1740, %v1756
        %v1806 = vcombine.high %v1740, %v1756
        %v1808 = vunpack.c.l.s4 1934713408
        %v1809 = vunpack.c.0.s8 %v1808
        %v1810 = vlaneseq
        %v1811 = vshrl.u32 %v1810, 7
        %v1812 = vsub.s32 %v1809, %v1811
        %v1813 = vrot.slane %v1805, %v1812
        %v1815 = vunpack.c.l.s4 1934713408
        %v1816 = vunpack.c.0.s8 %v1815
        %v1817 = vlaneseq
        %v1818 = vshrl.u32 %v1817, 7
        %v1819 = vsub.s32 %v1816, %v1818
        %v1820 = vrot.slane %v1806, %v1819
        %v1821 = vcombine.low %v1765, %v1797
        %v1822 = vcombine.high %v1765, %v1797
        %v1823 = vcombine.low %v1772, %v1804
        %v1824 = vcombine.high %v1772, %v1804
        %v1825 = vcombine.low %v1781, %v1813
        %v1826 = vcombine.high %v1781, %v1813
        %v1827 = vcombine.low %v1788, %v1820
        %v1828 = vcombine.high %v1788, %v1820
        %v1829 = vcombine.low %v175, %v245
        %v1830 = vcombine.high %v175, %v245
        %v1832 = vunpack.c.l.s4 1983009808
        %v1833 = vunpack.c.0.s8 %v1832
        %v1834 = vlaneseq
        %v1835 = vshrl.u32 %v1834, 7
        %v1836 = vsub.s32 %v1833, %v1835
        %v1837 = vrot.slane %v1829, %v1836
        %v1839 = vunpack.c.l.s4 1983009808
        %v1840 = vunpack.c.0.s8 %v1839
        %v1841 = vlaneseq
        %v1842 = vshrl.u32 %v1841, 7
        %v1843 = vsub.s32 %v1840, %v1842
        %v1844 = vrot.slane %v1830, %v1843
        %v1845 = vcombine.low %v210, %v280
        %v1846 = vcombine.high %v210, %v280
        %v1848 = vunpack.c.l.s4 1983009808
        %v1849 = vunpack.c.0.s8 %v1848
        %v1850 = vlaneseq
        %v1851 = vshrl.u32 %v1850, 7
        %v1852 = vsub.s32 %v1849, %v1851
        %v1853 = vrot.slane %v1845, %v1852
        %v1855 = vunpack.c.l.s4 1983009808
        %v1856 = vunpack.c.0.s8 %v1855
        %v1857 = vlaneseq
        %v1858 = vshrl.u32 %v1857, 7
        %v1859 = vsub.s32 %v1856, %v1858
        %v1860 = vrot.slane %v1846, %v1859
        %v1861 = vcombine.low %v315, %v385
        %v1862 = vcombine.high %v315, %v385
        %v1864 = vunpack.c.l.s4 1983009808
        %v1865 = vunpack.c.0.s8 %v1864
        %v1866 = vlaneseq
        %v1867 = vshrl.u32 %v1866, 7
        %v1868 = vsub.s32 %v1865, %v1867
        %v1869 = vrot.slane %v1861, %v1868
        %v1871 = vunpack.c.l.s4 1983009808
        %v1872 = vunpack.c.0.s8 %v1871
        %v1873 = vlaneseq
        %v1874 = vshrl.u32 %v1873, 7
        %v1875 = vsub.s32 %v1872, %v1874
        %v1876 = vrot.slane %v1862, %v1875
        %v1877 = vcombine.low %v350, %v420
        %v1878 = vcombine.high %v350, %v420
        %v1880 = vunpack.c.l.s4 1983009808
        %v1881 = vunpack.c.0.s8 %v1880
        %v1882 = vlaneseq
        %v1883 = vshrl.u32 %v1882, 7
        %v1884 = vsub.s32 %v1881, %v1883
        %v1885 = vrot.slane %v1877, %v1884
        %v1887 = vunpack.c.l.s4 1983009808
        %v1888 = vunpack.c.0.s8 %v1887
        %v1889 = vlaneseq
        %v1890 = vshrl.u32 %v1889, 7
        %v1891 = vsub.s32 %v1888, %v1890
        %v1892 = vrot.slane %v1878, %v1891
        %v1893 = vcombine.low %v1837, %v1853
        %v1894 = vcombine.high %v1837, %v1853
        %v1896 = vunpack.c.l.s4 1934713408
        %v1897 = vunpack.c.0.s8 %v1896
        %v1898 = vlaneseq
        %v1899 = vshrl.u32 %v1898, 7
        %v1900 = vsub.s32 %v1897, %v1899
        %v1901 = vrot.slane %v1893, %v1900
        %v1903 = vunpack.c.l.s4 1934713408
        %v1904 = vunpack.c.0.s8 %v1903
        %v1905 = vlaneseq
        %v1906 = vshrl.u32 %v1905, 7
        %v1907 = vsub.s32 %v1904, %v1906
        %v1908 = vrot.slane %v1894, %v1907
        %v1909 = vcombine.low %v1844, %v1860
        %v1910 = vcombine.high %v1844, %v1860
        %v1912 = vunpack.c.l.s4 1934713408
        %v1913 = vunpack.c.0.s8 %v1912
        %v1914 = vlaneseq
        %v1915 = vshrl.u32 %v1914, 7
        %v1916 = vsub.s32 %v1913, %v1915
        %v1917 = vrot.slane %v1909, %v1916
        %v1919 = vunpack.c.l.s4 1934713408
        %v1920 = vunpack.c.0.s8 %v1919
        %v1921 = vlaneseq
        %v1922 = vshrl.u32 %v1921, 7
        %v1923 = vsub.s32 %v1920, %v1922
        %v1924 = vrot.slane %v1910, %v1923
        %v1925 = vcombine.low %v1869, %v1885
        %v1926 = vcombine.high %v1869, %v1885
        %v1928 = vunpack.c.l.s4 1934713408
        %v1929 = vunpack.c.0.s8 %v1928
        %v1930 = vlaneseq
        %v1931 = vshrl.u32 %v1930, 7
        %v1932 = vsub.s32 %v1929, %v1931
        %v1933 = vrot.slane %v1925, %v1932
        %v1935 = vunpack.c.l.s4 1934713408
        %v1936 = vunpack.c.0.s8 %v1935
        %v1937 = vlaneseq
        %v1938 = vshrl.u32 %v1937, 7
        %v1939 = vsub.s32 %v1936, %v1938
        %v1940 = vrot.slane %v1926, %v1939
        %v1941 = vcombine.low %v1876, %v1892
        %v1942 = vcombine.high %v1876, %v1892
        %v1944 = vunpack.c.l.s4 1934713408
        %v1945 = vunpack.c.0.s8 %v1944
        %v1946 = vlaneseq
        %v1947 = vshrl.u32 %v1946, 7
        %v1948 = vsub.s32 %v1945, %v1947
        %v1949 = vrot.slane %v1941, %v1948
        %v1951 = vunpack.c.l.s4 1934713408
        %v1952 = vunpack.c.0.s8 %v1951
        %v1953 = vlaneseq
        %v1954 = vshrl.u32 %v1953, 7
        %v1955 = vsub.s32 %v1952, %v1954
        %v1956 = vrot.slane %v1942, %v1955
        %v1957 = vcombine.low %v1901, %v1933
        %v1958 = vcombine.high %v1901, %v1933
        %v1959 = vcombine.low %v1908, %v1940
        %v1960 = vcombine.high %v1908, %v1940
        %v1961 = vcombine.low %v1917, %v1949
        %v1962 = vcombine.high %v1917, %v1949
        %v1963 = vcombine.low %v1924, %v1956
        %v1964 = vcombine.high %v1924, %v1956
        %v1965 = vcombine.low %v455, %v525
        %v1966 = vcombine.high %v455, %v525
        %v1968 = vunpack.c.l.s4 1983009808
        %v1969 = vunpack.c.0.s8 %v1968
        %v1970 = vlaneseq
        %v1971 = vshrl.u32 %v1970, 7
        %v1972 = vsub.s32 %v1969, %v1971
        %v1973 = vrot.slane %v1965, %v1972
        %v1975 = vunpack.c.l.s4 1983009808
        %v1976 = vunpack.c.0.s8 %v1975
        %v1977 = vlaneseq
        %v1978 = vshrl.u32 %v1977, 7
        %v1979 = vsub.s32 %v1976, %v1978
        %v1980 = vrot.slane %v1966, %v1979
        %v1981 = vcombine.low %v490, %v560
        %v1982 = vcombine.high %v490, %v560
        %v1984 = vunpack.c.l.s4 1983009808
        %v1985 = vunpack.c.0.s8 %v1984
        %v1986 = vlaneseq
        %v1987 = vshrl.u32 %v1986, 7
        %v1988 = vsub.s32 %v1985, %v1987
        %v1989 = vrot.slane %v1981, %v1988
        %v1991 = vunpack.c.l.s4 1983009808
        %v1992 = vunpack.c.0.s8 %v1991
        %v1993 = vlaneseq
        %v1994 = vshrl.u32 %v1993, 7
        %v1995 = vsub.s32 %v1992, %v1994
        %v1996 = vrot.slane %v1982, %v1995
        %v1997 = vcombine.low %v595, %v665
        %v1998 = vcombine.high %v595, %v665
        %v2000 = vunpack.c.l.s4 1983009808
        %v2001 = vunpack.c.0.s8 %v2000
        %v2002 = vlaneseq
        %v2003 = vshrl.u32 %v2002, 7
        %v2004 = vsub.s32 %v2001, %v2003
        %v2005 = vrot.slane %v1997, %v2004
        %v2007 = vunpack.c.l.s4 1983009808
        %v2008 = vunpack.c.0.s8 %v2007
        %v2009 = vlaneseq
        %v2010 = vshrl.u32 %v2009, 7
        %v2011 = vsub.s32 %v2008, %v2010
        %v2012 = vrot.slane %v1998, %v2011
        %v2013 = vcombine.low %v630, %v700
        %v2014 = vcombine.high %v630, %v700
        %v2016 = vunpack.c.l.s4 1983009808
        %v2017 = vunpack.c.0.s8 %v2016
        %v2018 = vlaneseq
        %v2019 = vshrl.u32 %v2018, 7
        %v2020 = vsub.s32 %v2017, %v2019
        %v2021 = vrot.slane %v2013, %v2020
        %v2023 = vunpack.c.l.s4 1983009808
        %v2024 = vunpack.c.0.s8 %v2023
        %v2025 = vlaneseq
        %v2026 = vshrl.u32 %v2025, 7
        %v2027 = vsub.s32 %v2024, %v2026
        %v2028 = vrot.slane %v2014, %v2027
        %v2029 = vcombine.low %v1973, %v1989
        %v2030 = vcombine.high %v1973, %v1989
        %v2032 = vunpack.c.l.s4 1934713408
        %v2033 = vunpack.c.0.s8 %v2032
        %v2034 = vlaneseq
        %v2035 = vshrl.u32 %v2034, 7
        %v2036 = vsub.s32 %v2033, %v2035
        %v2037 = vrot.slane %v2029, %v2036
        %v2039 = vunpack.c.l.s4 1934713408
        %v2040 = vunpack.c.0.s8 %v2039
        %v2041 = vlaneseq
        %v2042 = vshrl.u32 %v2041, 7
        %v2043 = vsub.s32 %v2040, %v2042
        %v2044 = vrot.slane %v2030, %v2043
        %v2045 = vcombine.low %v1980, %v1996
        %v2046 = vcombine.high %v1980, %v1996
        %v2048 = vunpack.c.l.s4 1934713408
        %v2049 = vunpack.c.0.s8 %v2048
        %v2050 = vlaneseq
        %v2051 = vshrl.u32 %v2050, 7
        %v2052 = vsub.s32 %v2049, %v2051
        %v2053 = vrot.slane %v2045, %v2052
        %v2055 = vunpack.c.l.s4 1934713408
        %v2056 = vunpack.c.0.s8 %v2055
        %v2057 = vlaneseq
        %v2058 = vshrl.u32 %v2057, 7
        %v2059 = vsub.s32 %v2056, %v2058
        %v2060 = vrot.slane %v2046, %v2059
        %v2061 = vcombine.low %v2005, %v2021
        %v2062 = vcombine.high %v2005, %v2021
        %v2064 = vunpack.c.l.s4 1934713408
        %v2065 = vunpack.c.0.s8 %v2064
        %v2066 = vlaneseq
        %v2067 = vshrl.u32 %v2066, 7
        %v2068 = vsub.s32 %v2065, %v2067
        %v2069 = vrot.slane %v2061, %v2068
        %v2071 = vunpack.c.l.s4 1934713408
        %v2072 = vunpack.c.0.s8 %v2071
        %v2073 = vlaneseq
        %v2074 = vshrl.u32 %v2073, 7
        %v2075 = vsub.s32 %v2072, %v2074
        %v2076 = vrot.slane %v2062, %v2075
        %v2077 = vcombine.low %v2012, %v2028
        %v2078 = vcombine.high %v2012, %v2028
        %v2080 = vunpack.c.l.s4 1934713408
        %v2081 = vunpack.c.0.s8 %v2080
        %v2082 = vlaneseq
        %v2083 = vshrl.u32 %v2082, 7
        %v2084 = vsub.s32 %v2081, %v2083
        %v2085 = vrot.slane %v2077, %v2084
        %v2087 = vunpack.c.l.s4 1934713408
        %v2088 = vunpack.c.0.s8 %v2087
        %v2089 = vlaneseq
        %v2090 = vshrl.u32 %v2089, 7
        %v2091 = vsub.s32 %v2088, %v2090
        %v2092 = vrot.slane %v2078, %v2091
        %v2093 = vcombine.low %v2037, %v2069
        %v2094 = vcombine.high %v2037, %v2069
        %v2095 = vcombine.low %v2044, %v2076
        %v2096 = vcombine.high %v2044, %v2076
        %v2097 = vcombine.low %v2053, %v2085
        %v2098 = vcombine.high %v2053, %v2085
        %v2099 = vcombine.low %v2060, %v2092
        %v2100 = vcombine.high %v2060, %v2092
        %v2101 = vcombine.low %v735, %v805
        %v2102 = vcombine.high %v735, %v805
        %v2104 = vunpack.c.l.s4 1983009808
        %v2105 = vunpack.c.0.s8 %v2104
        %v2106 = vlaneseq
        %v2107 = vshrl.u32 %v2106, 7
        %v2108 = vsub.s32 %v2105, %v2107
        %v2109 = vrot.slane %v2101, %v2108
        %v2111 = vunpack.c.l.s4 1983009808
        %v2112 = vunpack.c.0.s8 %v2111
        %v2113 = vlaneseq
        %v2114 = vshrl.u32 %v2113, 7
        %v2115 = vsub.s32 %v2112, %v2114
        %v2116 = vrot.slane %v2102, %v2115
        %v2117 = vcombine.low %v770, %v840
        %v2118 = vcombine.high %v770, %v840
        %v2120 = vunpack.c.l.s4 1983009808
        %v2121 = vunpack.c.0.s8 %v2120
        %v2122 = vlaneseq
        %v2123 = vshrl.u32 %v2122, 7
        %v2124 = vsub.s32 %v2121, %v2123
        %v2125 = vrot.slane %v2117, %v2124
        %v2127 = vunpack.c.l.s4 1983009808
        %v2128 = vunpack.c.0.s8 %v2127
        %v2129 = vlaneseq
        %v2130 = vshrl.u32 %v2129, 7
        %v2131 = vsub.s32 %v2128, %v2130
        %v2132 = vrot.slane %v2118, %v2131
        %v2133 = vcombine.low %v875, %v945
        %v2134 = vcombine.high %v875, %v945
        %v2136 = vunpack.c.l.s4 1983009808
        %v2137 = vunpack.c.0.s8 %v2136
        %v2138 = vlaneseq
        %v2139 = vshrl.u32 %v2138, 7
        %v2140 = vsub.s32 %v2137, %v2139
        %v2141 = vrot.slane %v2133, %v2140
        %v2143 = vunpack.c.l.s4 1983009808
        %v2144 = vunpack.c.0.s8 %v2143
        %v2145 = vlaneseq
        %v2146 = vshrl.u32 %v2145, 7
        %v2147 = vsub.s32 %v2144, %v2146
        %v2148 = vrot.slane %v2134, %v2147
        %v2149 = vcombine.low %v910, %v980
        %v2150 = vcombine.high %v910, %v980
        %v2152 = vunpack.c.l.s4 1983009808
        %v2153 = vunpack.c.0.s8 %v2152
        %v2154 = vlaneseq
        %v2155 = vshrl.u32 %v2154, 7
        %v2156 = vsub.s32 %v2153, %v2155
        %v2157 = vrot.slane %v2149, %v2156
        %v2159 = vunpack.c.l.s4 1983009808
        %v2160 = vunpack.c.0.s8 %v2159
        %v2161 = vlaneseq
        %v2162 = vshrl.u32 %v2161, 7
        %v2163 = vsub.s32 %v2160, %v2162
        %v2164 = vrot.slane %v2150, %v2163
        %v2165 = vcombine.low %v2109, %v2125
        %v2166 = vcombine.high %v2109, %v2125
        %v2168 = vunpack.c.l.s4 1934713408
        %v2169 = vunpack.c.0.s8 %v2168
        %v2170 = vlaneseq
        %v2171 = vshrl.u32 %v2170, 7
        %v2172 = vsub.s32 %v2169, %v2171
        %v2173 = vrot.slane %v2165, %v2172
        %v2175 = vunpack.c.l.s4 1934713408
        %v2176 = vunpack.c.0.s8 %v2175
        %v2177 = vlaneseq
        %v2178 = vshrl.u32 %v2177, 7
        %v2179 = vsub.s32 %v2176, %v2178
        %v2180 = vrot.slane %v2166, %v2179
        %v2181 = vcombine.low %v2116, %v2132
        %v2182 = vcombine.high %v2116, %v2132
        %v2184 = vunpack.c.l.s4 1934713408
        %v2185 = vunpack.c.0.s8 %v2184
        %v2186 = vlaneseq
        %v2187 = vshrl.u32 %v2186, 7
        %v2188 = vsub.s32 %v2185, %v2187
        %v2189 = vrot.slane %v2181, %v2188
        %v2191 = vunpack.c.l.s4 1934713408
        %v2192 = vunpack.c.0.s8 %v2191
        %v2193 = vlaneseq
        %v2194 = vshrl.u32 %v2193, 7
        %v2195 = vsub.s32 %v2192, %v2194
        %v2196 = vrot.slane %v2182, %v2195
        %v2197 = vcombine.low %v2141, %v2157
        %v2198 = vcombine.high %v2141, %v2157
        %v2200 = vunpack.c.l.s4 1934713408
        %v2201 = vunpack.c.0.s8 %v2200
        %v2202 = vlaneseq
        %v2203 = vshrl.u32 %v2202, 7
        %v2204 = vsub.s32 %v2201, %v2203
        %v2205 = vrot.slane %v2197, %v2204
        %v2207 = vunpack.c.l.s4 1934713408
        %v2208 = vunpack.c.0.s8 %v2207
        %v2209 = vlaneseq
        %v2210 = vshrl.u32 %v2209, 7
        %v2211 = vsub.s32 %v2208, %v2210
        %v2212 = vrot.slane %v2198, %v2211
        %v2213 = vcombine.low %v2148, %v2164
        %v2214 = vcombine.high %v2148, %v2164
        %v2216 = vunpack.c.l.s4 1934713408
        %v2217 = vunpack.c.0.s8 %v2216
        %v2218 = vlaneseq
        %v2219 = vshrl.u32 %v2218, 7
        %v2220 = vsub.s32 %v2217, %v2219
        %v2221 = vrot.slane %v2213, %v2220
        %v2223 = vunpack.c.l.s4 1934713408
        %v2224 = vunpack.c.0.s8 %v2223
        %v2225 = vlaneseq
        %v2226 = vshrl.u32 %v2225, 7
        %v2227 = vsub.s32 %v2224, %v2226
        %v2228 = vrot.slane %v2214, %v2227
        %v2229 = vcombine.low %v2173, %v2205
        %v2230 = vcombine.high %v2173, %v2205
        %v2231 = vcombine.low %v2180, %v2212
        %v2232 = vcombine.high %v2180, %v2212
        %v2233 = vcombine.low %v2189, %v2221
        %v2234 = vcombine.high %v2189, %v2221
        %v2235 = vcombine.low %v2196, %v2228
        %v2236 = vcombine.high %v2196, %v2228
        %v2237 = vcombine.low %v1015, %v1085
        %v2238 = vcombine.high %v1015, %v1085
        %v2240 = vunpack.c.l.s4 1983009808
        %v2241 = vunpack.c.0.s8 %v2240
        %v2242 = vlaneseq
        %v2243 = vshrl.u32 %v2242, 7
        %v2244 = vsub.s32 %v2241, %v2243
        %v2245 = vrot.slane %v2237, %v2244
        %v2247 = vunpack.c.l.s4 1983009808
        %v2248 = vunpack.c.0.s8 %v2247
        %v2249 = vlaneseq
        %v2250 = vshrl.u32 %v2249, 7
        %v2251 = vsub.s32 %v2248, %v2250
        %v2252 = vrot.slane %v2238, %v2251
        %v2253 = vcombine.low %v1050, %v1120
        %v2254 = vcombine.high %v1050, %v1120
        %v2256 = vunpack.c.l.s4 1983009808
        %v2257 = vunpack.c.0.s8 %v2256
        %v2258 = vlaneseq
        %v2259 = vshrl.u32 %v2258, 7
        %v2260 = vsub.s32 %v2257, %v2259
        %v2261 = vrot.slane %v2253, %v2260
        %v2263 = vunpack.c.l.s4 1983009808
        %v2264 = vunpack.c.0.s8 %v2263
        %v2265 = vlaneseq
        %v2266 = vshrl.u32 %v2265, 7
        %v2267 = vsub.s32 %v2264, %v2266
        %v2268 = vrot.slane %v2254, %v2267
        %v2269 = vcombine.low %v1155, %v1225
        %v2270 = vcombine.high %v1155, %v1225
        %v2272 = vunpack.c.l.s4 1983009808
        %v2273 = vunpack.c.0.s8 %v2272
        %v2274 = vlaneseq
        %v2275 = vshrl.u32 %v2274, 7
        %v2276 = vsub.s32 %v2273, %v2275
        %v2277 = vrot.slane %v2269, %v2276
        %v2279 = vunpack.c.l.s4 1983009808
        %v2280 = vunpack.c.0.s8 %v2279
        %v2281 = vlaneseq
        %v2282 = vshrl.u32 %v2281, 7
        %v2283 = vsub.s32 %v2280, %v2282
        %v2284 = vrot.slane %v2270, %v2283
        %v2285 = vcombine.low %v1190, %v1260
        %v2286 = vcombine.high %v1190, %v1260
        %v2288 = vunpack.c.l.s4 1983009808
        %v2289 = vunpack.c.0.s8 %v2288
        %v2290 = vlaneseq
        %v2291 = vshrl.u32 %v2290, 7
        %v2292 = vsub.s32 %v2289, %v2291
        %v2293 = vrot.slane %v2285, %v2292
        %v2295 = vunpack.c.l.s4 1983009808
        %v2296 = vunpack.c.0.s8 %v2295
        %v2297 = vlaneseq
        %v2298 = vshrl.u32 %v2297, 7
        %v2299 = vsub.s32 %v2296, %v2298
        %v2300 = vrot.slane %v2286, %v2299
        %v2301 = vcombine.low %v2245, %v2261
        %v2302 = vcombine.high %v2245, %v2261
        %v2304 = vunpack.c.l.s4 1934713408
        %v2305 = vunpack.c.0.s8 %v2304
        %v2306 = vlaneseq
        %v2307 = vshrl.u32 %v2306, 7
        %v2308 = vsub.s32 %v2305, %v2307
        %v2309 = vrot.slane %v2301, %v2308
        %v2311 = vunpack.c.l.s4 1934713408
        %v2312 = vunpack.c.0.s8 %v2311
        %v2313 = vlaneseq
        %v2314 = vshrl.u32 %v2313, 7
        %v2315 = vsub.s32 %v2312, %v2314
        %v2316 = vrot.slane %v2302, %v2315
        %v2317 = vcombine.low %v2252, %v2268
        %v2318 = vcombine.high %v2252, %v2268
        %v2320 = vunpack.c.l.s4 1934713408
        %v2321 = vunpack.c.0.s8 %v2320
        %v2322 = vlaneseq
        %v2323 = vshrl.u32 %v2322, 7
        %v2324 = vsub.s32 %v2321, %v2323
        %v2325 = vrot.slane %v2317, %v2324
        %v2327 = vunpack.c.l.s4 1934713408
        %v2328 = vunpack.c.0.s8 %v2327
        %v2329 = vlaneseq
        %v2330 = vshrl.u32 %v2329, 7
        %v2331 = vsub.s32 %v2328, %v2330
        %v2332 = vrot.slane %v2318, %v2331
        %v2333 = vcombine.low %v2277, %v2293
        %v2334 = vcombine.high %v2277, %v2293
        %v2336 = vunpack.c.l.s4 1934713408
        %v2337 = vunpack.c.0.s8 %v2336
        %v2338 = vlaneseq
        %v2339 = vshrl.u32 %v2338, 7
        %v2340 = vsub.s32 %v2337, %v2339
        %v2341 = vrot.slane %v2333, %v2340
        %v2343 = vunpack.c.l.s4 1934713408
        %v2344 = vunpack.c.0.s8 %v2343
        %v2345 = vlaneseq
        %v2346 = vshrl.u32 %v2345, 7
        %v2347 = vsub.s32 %v2344, %v2346
        %v2348 = vrot.slane %v2334, %v2347
        %v2349 = vcombine.low %v2284, %v2300
        %v2350 = vcombine.high %v2284, %v2300
        %v2352 = vunpack.c.l.s4 1934713408
        %v2353 = vunpack.c.0.s8 %v2352
        %v2354 = vlaneseq
        %v2355 = vshrl.u32 %v2354, 7
        %v2356 = vsub.s32 %v2353, %v2355
        %v2357 = vrot.slane %v2349, %v2356
        %v2359 = vunpack.c.l.s4 1934713408
        %v2360 = vunpack.c.0.s8 %v2359
        %v2361 = vlaneseq
        %v2362 = vshrl.u32 %v2361, 7
        %v2363 = vsub.s32 %v2360, %v2362
        %v2364 = vrot.slane %v2350, %v2363
        %v2365 = vcombine.low %v2309, %v2341
        %v2366 = vcombine.high %v2309, %v2341
        %v2367 = vcombine.low %v2316, %v2348
        %v2368 = vcombine.high %v2316, %v2348
        %v2369 = vcombine.low %v2325, %v2357
        %v2370 = vcombine.high %v2325, %v2357
        %v2371 = vcombine.low %v2332, %v2364
        %v2372 = vcombine.high %v2332, %v2364
        %v2373 = vcombine.low %v179, %v249
        %v2374 = vcombine.high %v179, %v249
        %v2376 = vunpack.c.l.s4 1983009808
        %v2377 = vunpack.c.0.s8 %v2376
        %v2378 = vlaneseq
        %v2379 = vshrl.u32 %v2378, 7
        %v2380 = vsub.s32 %v2377, %v2379
        %v2381 = vrot.slane %v2373, %v2380
        %v2383 = vunpack.c.l.s4 1983009808
        %v2384 = vunpack.c.0.s8 %v2383
        %v2385 = vlaneseq
        %v2386 = vshrl.u32 %v2385, 7
        %v2387 = vsub.s32 %v2384, %v2386
        %v2388 = vrot.slane %v2374, %v2387
        %v2389 = vcombine.low %v214, %v284
        %v2390 = vcombine.high %v214, %v284
        %v2392 = vunpack.c.l.s4 1983009808
        %v2393 = vunpack.c.0.s8 %v2392
        %v2394 = vlaneseq
        %v2395 = vshrl.u32 %v2394, 7
        %v2396 = vsub.s32 %v2393, %v2395
        %v2397 = vrot.slane %v2389, %v2396
        %v2399 = vunpack.c.l.s4 1983009808
        %v2400 = vunpack.c.0.s8 %v2399
        %v2401 = vlaneseq
        %v2402 = vshrl.u32 %v2401, 7
        %v2403 = vsub.s32 %v2400, %v2402
        %v2404 = vrot.slane %v2390, %v2403
        %v2405 = vcombine.low %v319, %v389
        %v2406 = vcombine.high %v319, %v389
        %v2408 = vunpack.c.l.s4 1983009808
        %v2409 = vunpack.c.0.s8 %v2408
        %v2410 = vlaneseq
        %v2411 = vshrl.u32 %v2410, 7
        %v2412 = vsub.s32 %v2409, %v2411
        %v2413 = vrot.slane %v2405, %v2412
        %v2415 = vunpack.c.l.s4 1983009808
        %v2416 = vunpack.c.0.s8 %v2415
        %v2417 = vlaneseq
        %v2418 = vshrl.u32 %v2417, 7
        %v2419 = vsub.s32 %v2416, %v2418
        %v2420 = vrot.slane %v2406, %v2419
        %v2421 = vcombine.low %v354, %v424
        %v2422 = vcombine.high %v354, %v424
        %v2424 = vunpack.c.l.s4 1983009808
        %v2425 = vunpack.c.0.s8 %v2424
        %v2426 = vlaneseq
        %v2427 = vshrl.u32 %v2426, 7
        %v2428 = vsub.s32 %v2425, %v2427
        %v2429 = vrot.slane %v2421, %v2428
        %v2431 = vunpack.c.l.s4 1983009808
        %v2432 = vunpack.c.0.s8 %v2431
        %v2433 = vlaneseq
        %v2434 = vshrl.u32 %v2433, 7
        %v2435 = vsub.s32 %v2432, %v2434
        %v2436 = vrot.slane %v2422, %v2435
        %v2437 = vcombine.low %v2381, %v2397
        %v2438 = vcombine.high %v2381, %v2397
        %v2440 = vunpack.c.l.s4 1934713408
        %v2441 = vunpack.c.0.s8 %v2440
        %v2442 = vlaneseq
        %v2443 = vshrl.u32 %v2442, 7
        %v2444 = vsub.s32 %v2441, %v2443
        %v2445 = vrot.slane %v2437, %v2444
        %v2447 = vunpack.c.l.s4 1934713408
        %v2448 = vunpack.c.0.s8 %v2447
        %v2449 = vlaneseq
        %v2450 = vshrl.u32 %v2449, 7
        %v2451 = vsub.s32 %v2448, %v2450
        %v2452 = vrot.slane %v2438, %v2451
        %v2453 = vcombine.low %v2388, %v2404
        %v2454 = vcombine.high %v2388, %v2404
        %v2456 = vunpack.c.l.s4 1934713408
        %v2457 = vunpack.c.0.s8 %v2456
        %v2458 = vlaneseq
        %v2459 = vshrl.u32 %v2458, 7
        %v2460 = vsub.s32 %v2457, %v2459
        %v2461 = vrot.slane %v2453, %v2460
        %v2463 = vunpack.c.l.s4 1934713408
        %v2464 = vunpack.c.0.s8 %v2463
        %v2465 = vlaneseq
        %v2466 = vshrl.u32 %v2465, 7
        %v2467 = vsub.s32 %v2464, %v2466
        %v2468 = vrot.slane %v2454, %v2467
        %v2469 = vcombine.low %v2413, %v2429
        %v2470 = vcombine.high %v2413, %v2429
        %v2472 = vunpack.c.l.s4 1934713408
        %v2473 = vunpack.c.0.s8 %v2472
        %v2474 = vlaneseq
        %v2475 = vshrl.u32 %v2474, 7
        %v2476 = vsub.s32 %v2473, %v2475
        %v2477 = vrot.slane %v2469, %v2476
        %v2479 = vunpack.c.l.s4 1934713408
        %v2480 = vunpack.c.0.s8 %v2479
        %v2481 = vlaneseq
        %v2482 = vshrl.u32 %v2481, 7
        %v2483 = vsub.s32 %v2480, %v2482
        %v2484 = vrot.slane %v2470, %v2483
        %v2485 = vcombine.low %v2420, %v2436
        %v2486 = vcombine.high %v2420, %v2436
        %v2488 = vunpack.c.l.s4 1934713408
        %v2489 = vunpack.c.0.s8 %v2488
        %v2490 = vlaneseq
        %v2491 = vshrl.u32 %v2490, 7
        %v2492 = vsub.s32 %v2489, %v2491
        %v2493 = vrot.slane %v2485, %v2492
        %v2495 = vunpack.c.l.s4 1934713408
        %v2496 = vunpack.c.0.s8 %v2495
        %v2497 = vlaneseq
        %v2498 = vshrl.u32 %v2497, 7
        %v2499 = vsub.s32 %v2496, %v2498
        %v2500 = vrot.slane %v2486, %v2499
        %v2501 = vcombine.low %v2445, %v2477
        %v2502 = vcombine.high %v2445, %v2477
        %v2503 = vcombine.low %v2452, %v2484
        %v2504 = vcombine.high %v2452, %v2484
        %v2505 = vcombine.low %v2461, %v2493
        %v2506 = vcombine.high %v2461, %v2493
        %v2507 = vcombine.low %v2468, %v2500
        %v2508 = vcombine.high %v2468, %v2500
        %v2509 = vcombine.low %v459, %v529
        %v2510 = vcombine.high %v459, %v529
        %v2512 = vunpack.c.l.s4 1983009808
        %v2513 = vunpack.c.0.s8 %v2512
        %v2514 = vlaneseq
        %v2515 = vshrl.u32 %v2514, 7
        %v2516 = vsub.s32 %v2513, %v2515
        %v2517 = vrot.slane %v2509, %v2516
        %v2519 = vunpack.c.l.s4 1983009808
        %v2520 = vunpack.c.0.s8 %v2519
        %v2521 = vlaneseq
        %v2522 = vshrl.u32 %v2521, 7
        %v2523 = vsub.s32 %v2520, %v2522
        %v2524 = vrot.slane %v2510, %v2523
        %v2525 = vcombine.low %v494, %v564
        %v2526 = vcombine.high %v494, %v564
        %v2528 = vunpack.c.l.s4 1983009808
        %v2529 = vunpack.c.0.s8 %v2528
        %v2530 = vlaneseq
        %v2531 = vshrl.u32 %v2530, 7
        %v2532 = vsub.s32 %v2529, %v2531
        %v2533 = vrot.slane %v2525, %v2532
        %v2535 = vunpack.c.l.s4 1983009808
        %v2536 = vunpack.c.0.s8 %v2535
        %v2537 = vlaneseq
        %v2538 = vshrl.u32 %v2537, 7
        %v2539 = vsub.s32 %v2536, %v2538
        %v2540 = vrot.slane %v2526, %v2539
        %v2541 = vcombine.low %v599, %v669
        %v2542 = vcombine.high %v599, %v669
        %v2544 = vunpack.c.l.s4 1983009808
        %v2545 = vunpack.c.0.s8 %v2544
        %v2546 = vlaneseq
        %v2547 = vshrl.u32 %v2546, 7
        %v2548 = vsub.s32 %v2545, %v2547
        %v2549 = vrot.slane %v2541, %v2548
        %v2551 = vunpack.c.l.s4 1983009808
        %v2552 = vunpack.c.0.s8 %v2551
        %v2553 = vlaneseq
        %v2554 = vshrl.u32 %v2553, 7
        %v2555 = vsub.s32 %v2552, %v2554
        %v2556 = vrot.slane %v2542, %v2555
        %v2557 = vcombine.low %v634, %v704
        %v2558 = vcombine.high %v634, %v704
        %v2560 = vunpack.c.l.s4 1983009808
        %v2561 = vunpack.c.0.s8 %v2560
        %v2562 = vlaneseq
        %v2563 = vshrl.u32 %v2562, 7
        %v2564 = vsub.s32 %v2561, %v2563
        %v2565 = vrot.slane %v2557, %v2564
        %v2567 = vunpack.c.l.s4 1983009808
        %v2568 = vunpack.c.0.s8 %v2567
        %v2569 = vlaneseq
        %v2570 = vshrl.u32 %v2569, 7
        %v2571 = vsub.s32 %v2568, %v2570
        %v2572 = vrot.slane %v2558, %v2571
        %v2573 = vcombine.low %v2517, %v2533
        %v2574 = vcombine.high %v2517, %v2533
        %v2576 = vunpack.c.l.s4 1934713408
        %v2577 = vunpack.c.0.s8 %v2576
        %v2578 = vlaneseq
        %v2579 = vshrl.u32 %v2578, 7
        %v2580 = vsub.s32 %v2577, %v2579
        %v2581 = vrot.slane %v2573, %v2580
        %v2583 = vunpack.c.l.s4 1934713408
        %v2584 = vunpack.c.0.s8 %v2583
        %v2585 = vlaneseq
        %v2586 = vshrl.u32 %v2585, 7
        %v2587 = vsub.s32 %v2584, %v2586
        %v2588 = vrot.slane %v2574, %v2587
        %v2589 = vcombine.low %v2524, %v2540
        %v2590 = vcombine.high %v2524, %v2540
        %v2592 = vunpack.c.l.s4 1934713408
        %v2593 = vunpack.c.0.s8 %v2592
        %v2594 = vlaneseq
        %v2595 = vshrl.u32 %v2594, 7
        %v2596 = vsub.s32 %v2593, %v2595
        %v2597 = vrot.slane %v2589, %v2596
        %v2599 = vunpack.c.l.s4 1934713408
        %v2600 = vunpack.c.0.s8 %v2599
        %v2601 = vlaneseq
        %v2602 = vshrl.u32 %v2601, 7
        %v2603 = vsub.s32 %v2600, %v2602
        %v2604 = vrot.slane %v2590, %v2603
        %v2605 = vcombine.low %v2549, %v2565
        %v2606 = vcombine.high %v2549, %v2565
        %v2608 = vunpack.c.l.s4 1934713408
        %v2609 = vunpack.c.0.s8 %v2608
        %v2610 = vlaneseq
        %v2611 = vshrl.u32 %v2610, 7
        %v2612 = vsub.s32 %v2609, %v2611
        %v2613 = vrot.slane %v2605, %v2612
        %v2615 = vunpack.c.l.s4 1934713408
        %v2616 = vunpack.c.0.s8 %v2615
        %v2617 = vlaneseq
        %v2618 = vshrl.u32 %v2617, 7
        %v2619 = vsub.s32 %v2616, %v2618
        %v2620 = vrot.slane %v2606, %v2619
        %v2621 = vcombine.low %v2556, %v2572
        %v2622 = vcombine.high %v2556, %v2572
        %v2624 = vunpack.c.l.s4 1934713408
        %v2625 = vunpack.c.0.s8 %v2624
        %v2626 = vlaneseq
        %v2627 = vshrl.u32 %v2626, 7
        %v2628 = vsub.s32 %v2625, %v2627
        %v2629 = vrot.slane %v2621, %v2628
        %v2631 = vunpack.c.l.s4 1934713408
        %v2632 = vunpack.c.0.s8 %v2631
        %v2633 = vlaneseq
        %v2634 = vshrl.u32 %v2633, 7
        %v2635 = vsub.s32 %v2632, %v2634
        %v2636 = vrot.slane %v2622, %v2635
        %v2637 = vcombine.low %v2581, %v2613
        %v2638 = vcombine.high %v2581, %v2613
        %v2639 = vcombine.low %v2588, %v2620
        %v2640 = vcombine.high %v2588, %v2620
        %v2641 = vcombine.low %v2597, %v2629
        %v2642 = vcombine.high %v2597, %v2629
        %v2643 = vcombine.low %v2604, %v2636
        %v2644 = vcombine.high %v2604, %v2636
        %v2645 = vcombine.low %v739, %v809
        %v2646 = vcombine.high %v739, %v809
        %v2648 = vunpack.c.l.s4 1983009808
        %v2649 = vunpack.c.0.s8 %v2648
        %v2650 = vlaneseq
        %v2651 = vshrl.u32 %v2650, 7
        %v2652 = vsub.s32 %v2649, %v2651
        %v2653 = vrot.slane %v2645, %v2652
        %v2655 = vunpack.c.l.s4 1983009808
        %v2656 = vunpack.c.0.s8 %v2655
        %v2657 = vlaneseq
        %v2658 = vshrl.u32 %v2657, 7
        %v2659 = vsub.s32 %v2656, %v2658
        %v2660 = vrot.slane %v2646, %v2659
        %v2661 = vcombine.low %v774, %v844
        %v2662 = vcombine.high %v774, %v844
        %v2664 = vunpack.c.l.s4 1983009808
        %v2665 = vunpack.c.0.s8 %v2664
        %v2666 = vlaneseq
        %v2667 = vshrl.u32 %v2666, 7
        %v2668 = vsub.s32 %v2665, %v2667
        %v2669 = vrot.slane %v2661, %v2668
        %v2671 = vunpack.c.l.s4 1983009808
        %v2672 = vunpack.c.0.s8 %v2671
        %v2673 = vlaneseq
        %v2674 = vshrl.u32 %v2673, 7
        %v2675 = vsub.s32 %v2672, %v2674
        %v2676 = vrot.slane %v2662, %v2675
        %v2677 = vcombine.low %v879, %v949
        %v2678 = vcombine.high %v879, %v949
        %v2680 = vunpack.c.l.s4 1983009808
        %v2681 = vunpack.c.0.s8 %v2680
        %v2682 = vlaneseq
        %v2683 = vshrl.u32 %v2682, 7
        %v2684 = vsub.s32 %v2681, %v2683
        %v2685 = vrot.slane %v2677, %v2684
        %v2687 = vunpack.c.l.s4 1983009808
        %v2688 = vunpack.c.0.s8 %v2687
        %v2689 = vlaneseq
        %v2690 = vshrl.u32 %v2689, 7
        %v2691 = vsub.s32 %v2688, %v2690
        %v2692 = vrot.slane %v2678, %v2691
        %v2693 = vcombine.low %v914, %v984
        %v2694 = vcombine.high %v914, %v984
        %v2696 = vunpack.c.l.s4 1983009808
        %v2697 = vunpack.c.0.s8 %v2696
        %v2698 = vlaneseq
        %v2699 = vshrl.u32 %v2698, 7
        %v2700 = vsub.s32 %v2697, %v2699
        %v2701 = vrot.slane %v2693, %v2700
        %v2703 = vunpack.c.l.s4 1983009808
        %v2704 = vunpack.c.0.s8 %v2703
        %v2705 = vlaneseq
        %v2706 = vshrl.u32 %v2705, 7
        %v2707 = vsub.s32 %v2704, %v2706
        %v2708 = vrot.slane %v2694, %v2707
        %v2709 = vcombine.low %v2653, %v2669
        %v2710 = vcombine.high %v2653, %v2669
        %v2712 = vunpack.c.l.s4 1934713408
        %v2713 = vunpack.c.0.s8 %v2712
        %v2714 = vlaneseq
        %v2715 = vshrl.u32 %v2714, 7
        %v2716 = vsub.s32 %v2713, %v2715
        %v2717 = vrot.slane %v2709, %v2716
        %v2719 = vunpack.c.l.s4 1934713408
        %v2720 = vunpack.c.0.s8 %v2719
        %v2721 = vlaneseq
        %v2722 = vshrl.u32 %v2721, 7
        %v2723 = vsub.s32 %v2720, %v2722
        %v2724 = vrot.slane %v2710, %v2723
        %v2725 = vcombine.low %v2660, %v2676
        %v2726 = vcombine.high %v2660, %v2676
        %v2728 = vunpack.c.l.s4 1934713408
        %v2729 = vunpack.c.0.s8 %v2728
        %v2730 = vlaneseq
        %v2731 = vshrl.u32 %v2730, 7
        %v2732 = vsub.s32 %v2729, %v2731
        %v2733 = vrot.slane %v2725, %v2732
        %v2735 = vunpack.c.l.s4 1934713408
        %v2736 = vunpack.c.0.s8 %v2735
        %v2737 = vlaneseq
        %v2738 = vshrl.u32 %v2737, 7
        %v2739 = vsub.s32 %v2736, %v2738
        %v2740 = vrot.slane %v2726, %v2739
        %v2741 = vcombine.low %v2685, %v2701
        %v2742 = vcombine.high %v2685, %v2701
        %v2744 = vunpack.c.l.s4 1934713408
        %v2745 = vunpack.c.0.s8 %v2744
        %v2746 = vlaneseq
        %v2747 = vshrl.u32 %v2746, 7
        %v2748 = vsub.s32 %v2745, %v2747
        %v2749 = vrot.slane %v2741, %v2748
        %v2751 = vunpack.c.l.s4 1934713408
        %v2752 = vunpack.c.0.s8 %v2751
        %v2753 = vlaneseq
        %v2754 = vshrl.u32 %v2753, 7
        %v2755 = vsub.s32 %v2752, %v2754
        %v2756 = vrot.slane %v2742, %v2755
        %v2757 = vcombine.low %v2692, %v2708
        %v2758 = vcombine.high %v2692, %v2708
        %v2760 = vunpack.c.l.s4 1934713408
        %v2761 = vunpack.c.0.s8 %v2760
        %v2762 = vlaneseq
        %v2763 = vshrl.u32 %v2762, 7
        %v2764 = vsub.s32 %v2761, %v2763
        %v2765 = vrot.slane %v2757, %v2764
        %v2767 = vunpack.c.l.s4 1934713408
        %v2768 = vunpack.c.0.s8 %v2767
        %v2769 = vlaneseq
        %v2770 = vshrl.u32 %v2769, 7
        %v2771 = vsub.s32 %v2768, %v2770
        %v2772 = vrot.slane %v2758, %v2771
        %v2773 = vcombine.low %v2717, %v2749
        %v2774 = vcombine.high %v2717, %v2749
        %v2775 = vcombine.low %v2724, %v2756
        %v2776 = vcombine.high %v2724, %v2756
        %v2777 = vcombine.low %v2733, %v2765
        %v2778 = vcombine.high %v2733, %v2765
        %v2779 = vcombine.low %v2740, %v2772
        %v2780 = vcombine.high %v2740, %v2772
        %v2781 = vcombine.low %v1019, %v1089
        %v2782 = vcombine.high %v1019, %v1089
        %v2784 = vunpack.c.l.s4 1983009808
        %v2785 = vunpack.c.0.s8 %v2784
        %v2786 = vlaneseq
        %v2787 = vshrl.u32 %v2786, 7
        %v2788 = vsub.s32 %v2785, %v2787
        %v2789 = vrot.slane %v2781, %v2788
        %v2791 = vunpack.c.l.s4 1983009808
        %v2792 = vunpack.c.0.s8 %v2791
        %v2793 = vlaneseq
        %v2794 = vshrl.u32 %v2793, 7
        %v2795 = vsub.s32 %v2792, %v2794
        %v2796 = vrot.slane %v2782, %v2795
        %v2797 = vcombine.low %v1054, %v1124
        %v2798 = vcombine.high %v1054, %v1124
        %v2800 = vunpack.c.l.s4 1983009808
        %v2801 = vunpack.c.0.s8 %v2800
        %v2802 = vlaneseq
        %v2803 = vshrl.u32 %v2802, 7
        %v2804 = vsub.s32 %v2801, %v2803
        %v2805 = vrot.slane %v2797, %v2804
        %v2807 = vunpack.c.l.s4 1983009808
        %v2808 = vunpack.c.0.s8 %v2807
        %v2809 = vlaneseq
        %v2810 = vshrl.u32 %v2809, 7
        %v2811 = vsub.s32 %v2808, %v2810
        %v2812 = vrot.slane %v2798, %v2811
        %v2813 = vcombine.low %v1159, %v1229
        %v2814 = vcombine.high %v1159, %v1229
        %v2816 = vunpack.c.l.s4 1983009808
        %v2817 = vunpack.c.0.s8 %v2816
        %v2818 = vlaneseq
        %v2819 = vshrl.u32 %v2818, 7
        %v2820 = vsub.s32 %v2817, %v2819
        %v2821 = vrot.slane %v2813, %v2820
        %v2823 = vunpack.c.l.s4 1983009808
        %v2824 = vunpack.c.0.s8 %v2823
        %v2825 = vlaneseq
        %v2826 = vshrl.u32 %v2825, 7
        %v2827 = vsub.s32 %v2824, %v2826
        %v2828 = vrot.slane %v2814, %v2827
        %v2829 = vcombine.low %v1194, %v1264
        %v2830 = vcombine.high %v1194, %v1264
        %v2832 = vunpack.c.l.s4 1983009808
        %v2833 = vunpack.c.0.s8 %v2832
        %v2834 = vlaneseq
        %v2835 = vshrl.u32 %v2834, 7
        %v2836 = vsub.s32 %v2833, %v2835
        %v2837 = vrot.slane %v2829, %v2836
        %v2839 = vunpack.c.l.s4 1983009808
        %v2840 = vunpack.c.0.s8 %v2839
        %v2841 = vlaneseq
        %v2842 = vshrl.u32 %v2841, 7
        %v2843 = vsub.s32 %v2840, %v2842
        %v2844 = vrot.slane %v2830, %v2843
        %v2845 = vcombine.low %v2789, %v2805
        %v2846 = vcombine.high %v2789, %v2805
        %v2848 = vunpack.c.l.s4 1934713408
        %v2849 = vunpack.c.0.s8 %v2848
        %v2850 = vlaneseq
        %v2851 = vshrl.u32 %v2850, 7
        %v2852 = vsub.s32 %v2849, %v2851
        %v2853 = vrot.slane %v2845, %v2852
        %v2855 = vunpack.c.l.s4 1934713408
        %v2856 = vunpack.c.0.s8 %v2855
        %v2857 = vlaneseq
        %v2858 = vshrl.u32 %v2857, 7
        %v2859 = vsub.s32 %v2856, %v2858
        %v2860 = vrot.slane %v2846, %v2859
        %v2861 = vcombine.low %v2796, %v2812
        %v2862 = vcombine.high %v2796, %v2812
        %v2864 = vunpack.c.l.s4 1934713408
        %v2865 = vunpack.c.0.s8 %v2864
        %v2866 = vlaneseq
        %v2867 = vshrl.u32 %v2866, 7
        %v2868 = vsub.s32 %v2865, %v2867
        %v2869 = vrot.slane %v2861, %v2868
        %v2871 = vunpack.c.l.s4 1934713408
        %v2872 = vunpack.c.0.s8 %v2871
        %v2873 = vlaneseq
        %v2874 = vshrl.u32 %v2873, 7
        %v2875 = vsub.s32 %v2872, %v2874
        %v2876 = vrot.slane %v2862, %v2875
        %v2877 = vcombine.low %v2821, %v2837
        %v2878 = vcombine.high %v2821, %v2837
        %v2880 = vunpack.c.l.s4 1934713408
        %v2881 = vunpack.c.0.s8 %v2880
        %v2882 = vlaneseq
        %v2883 = vshrl.u32 %v2882, 7
        %v2884 = vsub.s32 %v2881, %v2883
        %v2885 = vrot.slane %v2877, %v2884
        %v2887 = vunpack.c.l.s4 1934713408
        %v2888 = vunpack.c.0.s8 %v2887
        %v2889 = vlaneseq
        %v2890 = vshrl.u32 %v2889, 7
        %v2891 = vsub.s32 %v2888, %v2890
        %v2892 = vrot.slane %v2878, %v2891
        %v2893 = vcombine.low %v2828, %v2844
        %v2894 = vcombine.high %v2828, %v2844
        %v2896 = vunpack.c.l.s4 1934713408
        %v2897 = vunpack.c.0.s8 %v2896
        %v2898 = vlaneseq
        %v2899 = vshrl.u32 %v2898, 7
        %v2900 = vsub.s32 %v2897, %v2899
        %v2901 = vrot.slane %v2893, %v2900
        %v2903 = vunpack.c.l.s4 1934713408
        %v2904 = vunpack.c.0.s8 %v2903
        %v2905 = vlaneseq
        %v2906 = vshrl.u32 %v2905, 7
        %v2907 = vsub.s32 %v2904, %v2906
        %v2908 = vrot.slane %v2894, %v2907
        %v2909 = vcombine.low %v2853, %v2885
        %v2910 = vcombine.high %v2853, %v2885
        %v2911 = vcombine.low %v2860, %v2892
        %v2912 = vcombine.high %v2860, %v2892
        %v2913 = vcombine.low %v2869, %v2901
        %v2914 = vcombine.high %v2869, %v2901
        %v2915 = vcombine.low %v2876, %v2908
        %v2916 = vcombine.high %v2876, %v2908
        %v2917 = vcombine.low %v183, %v253
        %v2918 = vcombine.high %v183, %v253
        %v2920 = vunpack.c.l.s4 1983009808
        %v2921 = vunpack.c.0.s8 %v2920
        %v2922 = vlaneseq
        %v2923 = vshrl.u32 %v2922, 7
        %v2924 = vsub.s32 %v2921, %v2923
        %v2925 = vrot.slane %v2917, %v2924
        %v2927 = vunpack.c.l.s4 1983009808
        %v2928 = vunpack.c.0.s8 %v2927
        %v2929 = vlaneseq
        %v2930 = vshrl.u32 %v2929, 7
        %v2931 = vsub.s32 %v2928, %v2930
        %v2932 = vrot.slane %v2918, %v2931
        %v2933 = vcombine.low %v218, %v288
        %v2934 = vcombine.high %v218, %v288
        %v2936 = vunpack.c.l.s4 1983009808
        %v2937 = vunpack.c.0.s8 %v2936
        %v2938 = vlaneseq
        %v2939 = vshrl.u32 %v2938, 7
        %v2940 = vsub.s32 %v2937, %v2939
        %v2941 = vrot.slane %v2933, %v2940
        %v2943 = vunpack.c.l.s4 1983009808
        %v2944 = vunpack.c.0.s8 %v2943
        %v2945 = vlaneseq
        %v2946 = vshrl.u32 %v2945, 7
        %v2947 = vsub.s32 %v2944, %v2946
        %v2948 = vrot.slane %v2934, %v2947
        %v2949 = vcombine.low %v323, %v393
        %v2950 = vcombine.high %v323, %v393
        %v2952 = vunpack.c.l.s4 1983009808
        %v2953 = vunpack.c.0.s8 %v2952
        %v2954 = vlaneseq
        %v2955 = vshrl.u32 %v2954, 7
        %v2956 = vsub.s32 %v2953, %v2955
        %v2957 = vrot.slane %v2949, %v2956
        %v2959 = vunpack.c.l.s4 1983009808
        %v2960 = vunpack.c.0.s8 %v2959
        %v2961 = vlaneseq
        %v2962 = vshrl.u32 %v2961, 7
        %v2963 = vsub.s32 %v2960, %v2962
        %v2964 = vrot.slane %v2950, %v2963
        %v2965 = vcombine.low %v358, %v428
        %v2966 = vcombine.high %v358, %v428
        %v2968 = vunpack.c.l.s4 1983009808
        %v2969 = vunpack.c.0.s8 %v2968
        %v2970 = vlaneseq
        %v2971 = vshrl.u32 %v2970, 7
        %v2972 = vsub.s32 %v2969, %v2971
        %v2973 = vrot.slane %v2965, %v2972
        %v2975 = vunpack.c.l.s4 1983009808
        %v2976 = vunpack.c.0.s8 %v2975
        %v2977 = vlaneseq
        %v2978 = vshrl.u32 %v2977, 7
        %v2979 = vsub.s32 %v2976, %v2978
        %v2980 = vrot.slane %v2966, %v2979
        %v2981 = vcombine.low %v2925, %v2941
        %v2982 = vcombine.high %v2925, %v2941
        %v2984 = vunpack.c.l.s4 1934713408
        %v2985 = vunpack.c.0.s8 %v2984
        %v2986 = vlaneseq
        %v2987 = vshrl.u32 %v2986, 7
        %v2988 = vsub.s32 %v2985, %v2987
        %v2989 = vrot.slane %v2981, %v2988
        %v2991 = vunpack.c.l.s4 1934713408
        %v2992 = vunpack.c.0.s8 %v2991
        %v2993 = vlaneseq
        %v2994 = vshrl.u32 %v2993, 7
        %v2995 = vsub.s32 %v2992, %v2994
        %v2996 = vrot.slane %v2982, %v2995
        %v2997 = vcombine.low %v2932, %v2948
        %v2998 = vcombine.high %v2932, %v2948
        %v3000 = vunpack.c.l.s4 1934713408
        %v3001 = vunpack.c.0.s8 %v3000
        %v3002 = vlaneseq
        %v3003 = vshrl.u32 %v3002, 7
        %v3004 = vsub.s32 %v3001, %v3003
        %v3005 = vrot.slane %v2997, %v3004
        %v3007 = vunpack.c.l.s4 1934713408
        %v3008 = vunpack.c.0.s8 %v3007
        %v3009 = vlaneseq
        %v3010 = vshrl.u32 %v3009, 7
        %v3011 = vsub.s32 %v3008, %v3010
        %v3012 = vrot.slane %v2998, %v3011
        %v3013 = vcombine.low %v2957, %v2973
        %v3014 = vcombine.high %v2957, %v2973
        %v3016 = vunpack.c.l.s4 1934713408
        %v3017 = vunpack.c.0.s8 %v3016
        %v3018 = vlaneseq
        %v3019 = vshrl.u32 %v3018, 7
        %v3020 = vsub.s32 %v3017, %v3019
        %v3021 = vrot.slane %v3013, %v3020
        %v3023 = vunpack.c.l.s4 1934713408
        %v3024 = vunpack.c.0.s8 %v3023
        %v3025 = vlaneseq
        %v3026 = vshrl.u32 %v3025, 7
        %v3027 = vsub.s32 %v3024, %v3026
        %v3028 = vrot.slane %v3014, %v3027
        %v3029 = vcombine.low %v2964, %v2980
        %v3030 = vcombine.high %v2964, %v2980
        %v3032 = vunpack.c.l.s4 1934713408
        %v3033 = vunpack.c.0.s8 %v3032
        %v3034 = vlaneseq
        %v3035 = vshrl.u32 %v3034, 7
        %v3036 = vsub.s32 %v3033, %v3035
        %v3037 = vrot.slane %v3029, %v3036
        %v3039 = vunpack.c.l.s4 1934713408
        %v3040 = vunpack.c.0.s8 %v3039
        %v3041 = vlaneseq
        %v3042 = vshrl.u32 %v3041, 7
        %v3043 = vsub.s32 %v3040, %v3042
        %v3044 = vrot.slane %v3030, %v3043
        %v3045 = vcombine.low %v2989, %v3021
        %v3046 = vcombine.high %v2989, %v3021
        %v3047 = vcombine.low %v2996, %v3028
        %v3048 = vcombine.high %v2996, %v3028
        %v3049 = vcombine.low %v3005, %v3037
        %v3050 = vcombine.high %v3005, %v3037
        %v3051 = vcombine.low %v3012, %v3044
        %v3052 = vcombine.high %v3012, %v3044
        %v3053 = vcombine.low %v463, %v533
        %v3054 = vcombine.high %v463, %v533
        %v3056 = vunpack.c.l.s4 1983009808
        %v3057 = vunpack.c.0.s8 %v3056
        %v3058 = vlaneseq
        %v3059 = vshrl.u32 %v3058, 7
        %v3060 = vsub.s32 %v3057, %v3059
        %v3061 = vrot.slane %v3053, %v3060
        %v3063 = vunpack.c.l.s4 1983009808
        %v3064 = vunpack.c.0.s8 %v3063
        %v3065 = vlaneseq
        %v3066 = vshrl.u32 %v3065, 7
        %v3067 = vsub.s32 %v3064, %v3066
        %v3068 = vrot.slane %v3054, %v3067
        %v3069 = vcombine.low %v498, %v568
        %v3070 = vcombine.high %v498, %v568
        %v3072 = vunpack.c.l.s4 1983009808
        %v3073 = vunpack.c.0.s8 %v3072
        %v3074 = vlaneseq
        %v3075 = vshrl.u32 %v3074, 7
        %v3076 = vsub.s32 %v3073, %v3075
        %v3077 = vrot.slane %v3069, %v3076
        %v3079 = vunpack.c.l.s4 1983009808
        %v3080 = vunpack.c.0.s8 %v3079
        %v3081 = vlaneseq
        %v3082 = vshrl.u32 %v3081, 7
        %v3083 = vsub.s32 %v3080, %v3082
        %v3084 = vrot.slane %v3070, %v3083
        %v3085 = vcombine.low %v603, %v673
        %v3086 = vcombine.high %v603, %v673
        %v3088 = vunpack.c.l.s4 1983009808
        %v3089 = vunpack.c.0.s8 %v3088
        %v3090 = vlaneseq
        %v3091 = vshrl.u32 %v3090, 7
        %v3092 = vsub.s32 %v3089, %v3091
        %v3093 = vrot.slane %v3085, %v3092
        %v3095 = vunpack.c.l.s4 1983009808
        %v3096 = vunpack.c.0.s8 %v3095
        %v3097 = vlaneseq
        %v3098 = vshrl.u32 %v3097, 7
        %v3099 = vsub.s32 %v3096, %v3098
        %v3100 = vrot.slane %v3086, %v3099
        %v3101 = vcombine.low %v638, %v708
        %v3102 = vcombine.high %v638, %v708
        %v3104 = vunpack.c.l.s4 1983009808
        %v3105 = vunpack.c.0.s8 %v3104
        %v3106 = vlaneseq
        %v3107 = vshrl.u32 %v3106, 7
        %v3108 = vsub.s32 %v3105, %v3107
        %v3109 = vrot.slane %v3101, %v3108
        %v3111 = vunpack.c.l.s4 1983009808
        %v3112 = vunpack.c.0.s8 %v3111
        %v3113 = vlaneseq
        %v3114 = vshrl.u32 %v3113, 7
        %v3115 = vsub.s32 %v3112, %v3114
        %v3116 = vrot.slane %v3102, %v3115
        %v3117 = vcombine.low %v3061, %v3077
        %v3118 = vcombine.high %v3061, %v3077
        %v3120 = vunpack.c.l.s4 1934713408
        %v3121 = vunpack.c.0.s8 %v3120
        %v3122 = vlaneseq
        %v3123 = vshrl.u32 %v3122, 7
        %v3124 = vsub.s32 %v3121, %v3123
        %v3125 = vrot.slane %v3117, %v3124
        %v3127 = vunpack.c.l.s4 1934713408
        %v3128 = vunpack.c.0.s8 %v3127
        %v3129 = vlaneseq
        %v3130 = vshrl.u32 %v3129, 7
        %v3131 = vsub.s32 %v3128, %v3130
        %v3132 = vrot.slane %v3118, %v3131
        %v3133 = vcombine.low %v3068, %v3084
        %v3134 = vcombine.high %v3068, %v3084
        %v3136 = vunpack.c.l.s4 1934713408
        %v3137 = vunpack.c.0.s8 %v3136
        %v3138 = vlaneseq
        %v3139 = vshrl.u32 %v3138, 7
        %v3140 = vsub.s32 %v3137, %v3139
        %v3141 = vrot.slane %v3133, %v3140
        %v3143 = vunpack.c.l.s4 1934713408
        %v3144 = vunpack.c.0.s8 %v3143
        %v3145 = vlaneseq
        %v3146 = vshrl.u32 %v3145, 7
        %v3147 = vsub.s32 %v3144, %v3146
        %v3148 = vrot.slane %v3134, %v3147
        %v3149 = vcombine.low %v3093, %v3109
        %v3150 = vcombine.high %v3093, %v3109
        %v3152 = vunpack.c.l.s4 1934713408
        %v3153 = vunpack.c.0.s8 %v3152
        %v3154 = vlaneseq
        %v3155 = vshrl.u32 %v3154, 7
        %v3156 = vsub.s32 %v3153, %v3155
        %v3157 = vrot.slane %v3149, %v3156
        %v3159 = vunpack.c.l.s4 1934713408
        %v3160 = vunpack.c.0.s8 %v3159
        %v3161 = vlaneseq
        %v3162 = vshrl.u32 %v3161, 7
        %v3163 = vsub.s32 %v3160, %v3162
        %v3164 = vrot.slane %v3150, %v3163
        %v3165 = vcombine.low %v3100, %v3116
        %v3166 = vcombine.high %v3100, %v3116
        %v3168 = vunpack.c.l.s4 1934713408
        %v3169 = vunpack.c.0.s8 %v3168
        %v3170 = vlaneseq
        %v3171 = vshrl.u32 %v3170, 7
        %v3172 = vsub.s32 %v3169, %v3171
        %v3173 = vrot.slane %v3165, %v3172
        %v3175 = vunpack.c.l.s4 1934713408
        %v3176 = vunpack.c.0.s8 %v3175
        %v3177 = vlaneseq
        %v3178 = vshrl.u32 %v3177, 7
        %v3179 = vsub.s32 %v3176, %v3178
        %v3180 = vrot.slane %v3166, %v3179
        %v3181 = vcombine.low %v3125, %v3157
        %v3182 = vcombine.high %v3125, %v3157
        %v3183 = vcombine.low %v3132, %v3164
        %v3184 = vcombine.high %v3132, %v3164
        %v3185 = vcombine.low %v3141, %v3173
        %v3186 = vcombine.high %v3141, %v3173
        %v3187 = vcombine.low %v3148, %v3180
        %v3188 = vcombine.high %v3148, %v3180
        %v3189 = vcombine.low %v743, %v813
        %v3190 = vcombine.high %v743, %v813
        %v3192 = vunpack.c.l.s4 1983009808
        %v3193 = vunpack.c.0.s8 %v3192
        %v3194 = vlaneseq
        %v3195 = vshrl.u32 %v3194, 7
        %v3196 = vsub.s32 %v3193, %v3195
        %v3197 = vrot.slane %v3189, %v3196
        %v3199 = vunpack.c.l.s4 1983009808
        %v3200 = vunpack.c.0.s8 %v3199
        %v3201 = vlaneseq
        %v3202 = vshrl.u32 %v3201, 7
        %v3203 = vsub.s32 %v3200, %v3202
        %v3204 = vrot.slane %v3190, %v3203
        %v3205 = vcombine.low %v778, %v848
        %v3206 = vcombine.high %v778, %v848
        %v3208 = vunpack.c.l.s4 1983009808
        %v3209 = vunpack.c.0.s8 %v3208
        %v3210 = vlaneseq
        %v3211 = vshrl.u32 %v3210, 7
        %v3212 = vsub.s32 %v3209, %v3211
        %v3213 = vrot.slane %v3205, %v3212
        %v3215 = vunpack.c.l.s4 1983009808
        %v3216 = vunpack.c.0.s8 %v3215
        %v3217 = vlaneseq
        %v3218 = vshrl.u32 %v3217, 7
        %v3219 = vsub.s32 %v3216, %v3218
        %v3220 = vrot.slane %v3206, %v3219
        %v3221 = vcombine.low %v883, %v953
        %v3222 = vcombine.high %v883, %v953
        %v3224 = vunpack.c.l.s4 1983009808
        %v3225 = vunpack.c.0.s8 %v3224
        %v3226 = vlaneseq
        %v3227 = vshrl.u32 %v3226, 7
        %v3228 = vsub.s32 %v3225, %v3227
        %v3229 = vrot.slane %v3221, %v3228
        %v3231 = vunpack.c.l.s4 1983009808
        %v3232 = vunpack.c.0.s8 %v3231
        %v3233 = vlaneseq
        %v3234 = vshrl.u32 %v3233, 7
        %v3235 = vsub.s32 %v3232, %v3234
        %v3236 = vrot.slane %v3222, %v3235
        %v3237 = vcombine.low %v918, %v988
        %v3238 = vcombine.high %v918, %v988
        %v3240 = vunpack.c.l.s4 1983009808
        %v3241 = vunpack.c.0.s8 %v3240
        %v3242 = vlaneseq
        %v3243 = vshrl.u32 %v3242, 7
        %v3244 = vsub.s32 %v3241, %v3243
        %v3245 = vrot.slane %v3237, %v3244
        %v3247 = vunpack.c.l.s4 1983009808
        %v3248 = vunpack.c.0.s8 %v3247
        %v3249 = vlaneseq
        %v3250 = vshrl.u32 %v3249, 7
        %v3251 = vsub.s32 %v3248, %v3250
        %v3252 = vrot.slane %v3238, %v3251
        %v3253 = vcombine.low %v3197, %v3213
        %v3254 = vcombine.high %v3197, %v3213
        %v3256 = vunpack.c.l.s4 1934713408
        %v3257 = vunpack.c.0.s8 %v3256
        %v3258 = vlaneseq
        %v3259 = vshrl.u32 %v3258, 7
        %v3260 = vsub.s32 %v3257, %v3259
        %v3261 = vrot.slane %v3253, %v3260
        %v3263 = vunpack.c.l.s4 1934713408
        %v3264 = vunpack.c.0.s8 %v3263
        %v3265 = vlaneseq
        %v3266 = vshrl.u32 %v3265, 7
        %v3267 = vsub.s32 %v3264, %v3266
        %v3268 = vrot.slane %v3254, %v3267
        %v3269 = vcombine.low %v3204, %v3220
        %v3270 = vcombine.high %v3204, %v3220
        %v3272 = vunpack.c.l.s4 1934713408
        %v3273 = vunpack.c.0.s8 %v3272
        %v3274 = vlaneseq
        %v3275 = vshrl.u32 %v3274, 7
        %v3276 = vsub.s32 %v3273, %v3275
        %v3277 = vrot.slane %v3269, %v3276
        %v3279 = vunpack.c.l.s4 1934713408
        %v3280 = vunpack.c.0.s8 %v3279
        %v3281 = vlaneseq
        %v3282 = vshrl.u32 %v3281, 7
        %v3283 = vsub.s32 %v3280, %v3282
        %v3284 = vrot.slane %v3270, %v3283
        %v3285 = vcombine.low %v3229, %v3245
        %v3286 = vcombine.high %v3229, %v3245
        %v3288 = vunpack.c.l.s4 1934713408
        %v3289 = vunpack.c.0.s8 %v3288
        %v3290 = vlaneseq
        %v3291 = vshrl.u32 %v3290, 7
        %v3292 = vsub.s32 %v3289, %v3291
        %v3293 = vrot.slane %v3285, %v3292
        %v3295 = vunpack.c.l.s4 1934713408
        %v3296 = vunpack.c.0.s8 %v3295
        %v3297 = vlaneseq
        %v3298 = vshrl.u32 %v3297, 7
        %v3299 = vsub.s32 %v3296, %v3298
        %v3300 = vrot.slane %v3286, %v3299
        %v3301 = vcombine.low %v3236, %v3252
        %v3302 = vcombine.high %v3236, %v3252
        %v3304 = vunpack.c.l.s4 1934713408
        %v3305 = vunpack.c.0.s8 %v3304
        %v3306 = vlaneseq
        %v3307 = vshrl.u32 %v3306, 7
        %v3308 = vsub.s32 %v3305, %v3307
        %v3309 = vrot.slane %v3301, %v3308
        %v3311 = vunpack.c.l.s4 1934713408
        %v3312 = vunpack.c.0.s8 %v3311
        %v3313 = vlaneseq
        %v3314 = vshrl.u32 %v3313, 7
        %v3315 = vsub.s32 %v3312, %v3314
        %v3316 = vrot.slane %v3302, %v3315
        %v3317 = vcombine.low %v3261, %v3293
        %v3318 = vcombine.high %v3261, %v3293
        %v3319 = vcombine.low %v3268, %v3300
        %v3320 = vcombine.high %v3268, %v3300
        %v3321 = vcombine.low %v3277, %v3309
        %v3322 = vcombine.high %v3277, %v3309
        %v3323 = vcombine.low %v3284, %v3316
        %v3324 = vcombine.high %v3284, %v3316
        %v3325 = vcombine.low %v1023, %v1093
        %v3326 = vcombine.high %v1023, %v1093
        %v3328 = vunpack.c.l.s4 1983009808
        %v3329 = vunpack.c.0.s8 %v3328
        %v3330 = vlaneseq
        %v3331 = vshrl.u32 %v3330, 7
        %v3332 = vsub.s32 %v3329, %v3331
        %v3333 = vrot.slane %v3325, %v3332
        %v3335 = vunpack.c.l.s4 1983009808
        %v3336 = vunpack.c.0.s8 %v3335
        %v3337 = vlaneseq
        %v3338 = vshrl.u32 %v3337, 7
        %v3339 = vsub.s32 %v3336, %v3338
        %v3340 = vrot.slane %v3326, %v3339
        %v3341 = vcombine.low %v1058, %v1128
        %v3342 = vcombine.high %v1058, %v1128
        %v3344 = vunpack.c.l.s4 1983009808
        %v3345 = vunpack.c.0.s8 %v3344
        %v3346 = vlaneseq
        %v3347 = vshrl.u32 %v3346, 7
        %v3348 = vsub.s32 %v3345, %v3347
        %v3349 = vrot.slane %v3341, %v3348
        %v3351 = vunpack.c.l.s4 1983009808
        %v3352 = vunpack.c.0.s8 %v3351
        %v3353 = vlaneseq
        %v3354 = vshrl.u32 %v3353, 7
        %v3355 = vsub.s32 %v3352, %v3354
        %v3356 = vrot.slane %v3342, %v3355
        %v3357 = vcombine.low %v1163, %v1233
        %v3358 = vcombine.high %v1163, %v1233
        %v3360 = vunpack.c.l.s4 1983009808
        %v3361 = vunpack.c.0.s8 %v3360
        %v3362 = vlaneseq
        %v3363 = vshrl.u32 %v3362, 7
        %v3364 = vsub.s32 %v3361, %v3363
        %v3365 = vrot.slane %v3357, %v3364
        %v3367 = vunpack.c.l.s4 1983009808
        %v3368 = vunpack.c.0.s8 %v3367
        %v3369 = vlaneseq
        %v3370 = vshrl.u32 %v3369, 7
        %v3371 = vsub.s32 %v3368, %v3370
        %v3372 = vrot.slane %v3358, %v3371
        %v3373 = vcombine.low %v1198, %v1268
        %v3374 = vcombine.high %v1198, %v1268
        %v3376 = vunpack.c.l.s4 1983009808
        %v3377 = vunpack.c.0.s8 %v3376
        %v3378 = vlaneseq
        %v3379 = vshrl.u32 %v3378, 7
        %v3380 = vsub.s32 %v3377, %v3379
        %v3381 = vrot.slane %v3373, %v3380
        %v3383 = vunpack.c.l.s4 1983009808
        %v3384 = vunpack.c.0.s8 %v3383
        %v3385 = vlaneseq
        %v3386 = vshrl.u32 %v3385, 7
        %v3387 = vsub.s32 %v3384, %v3386
        %v3388 = vrot.slane %v3374, %v3387
        %v3389 = vcombine.low %v3333, %v3349
        %v3390 = vcombine.high %v3333, %v3349
        %v3392 = vunpack.c.l.s4 1934713408
        %v3393 = vunpack.c.0.s8 %v3392
        %v3394 = vlaneseq
        %v3395 = vshrl.u32 %v3394, 7
        %v3396 = vsub.s32 %v3393, %v3395
        %v3397 = vrot.slane %v3389, %v3396
        %v3399 = vunpack.c.l.s4 1934713408
        %v3400 = vunpack.c.0.s8 %v3399
        %v3401 = vlaneseq
        %v3402 = vshrl.u32 %v3401, 7
        %v3403 = vsub.s32 %v3400, %v3402
        %v3404 = vrot.slane %v3390, %v3403
        %v3405 = vcombine.low %v3340, %v3356
        %v3406 = vcombine.high %v3340, %v3356
        %v3408 = vunpack.c.l.s4 1934713408
        %v3409 = vunpack.c.0.s8 %v3408
        %v3410 = vlaneseq
        %v3411 = vshrl.u32 %v3410, 7
        %v3412 = vsub.s32 %v3409, %v3411
        %v3413 = vrot.slane %v3405, %v3412
        %v3415 = vunpack.c.l.s4 1934713408
        %v3416 = vunpack.c.0.s8 %v3415
        %v3417 = vlaneseq
        %v3418 = vshrl.u32 %v3417, 7
        %v3419 = vsub.s32 %v3416, %v3418
        %v3420 = vrot.slane %v3406, %v3419
        %v3421 = vcombine.low %v3365, %v3381
        %v3422 = vcombine.high %v3365, %v3381
        %v3424 = vunpack.c.l.s4 1934713408
        %v3425 = vunpack.c.0.s8 %v3424
        %v3426 = vlaneseq
        %v3427 = vshrl.u32 %v3426, 7
        %v3428 = vsub.s32 %v3425, %v3427
        %v3429 = vrot.slane %v3421, %v3428
        %v3431 = vunpack.c.l.s4 1934713408
        %v3432 = vunpack.c.0.s8 %v3431
        %v3433 = vlaneseq
        %v3434 = vshrl.u32 %v3433, 7
        %v3435 = vsub.s32 %v3432, %v3434
        %v3436 = vrot.slane %v3422, %v3435
        %v3437 = vcombine.low %v3372, %v3388
        %v3438 = vcombine.high %v3372, %v3388
        %v3440 = vunpack.c.l.s4 1934713408
        %v3441 = vunpack.c.0.s8 %v3440
        %v3442 = vlaneseq
        %v3443 = vshrl.u32 %v3442, 7
        %v3444 = vsub.s32 %v3441, %v3443
        %v3445 = vrot.slane %v3437, %v3444
        %v3447 = vunpack.c.l.s4 1934713408
        %v3448 = vunpack.c.0.s8 %v3447
        %v3449 = vlaneseq
        %v3450 = vshrl.u32 %v3449, 7
        %v3451 = vsub.s32 %v3448, %v3450
        %v3452 = vrot.slane %v3438, %v3451
        %v3453 = vcombine.low %v3397, %v3429
        %v3454 = vcombine.high %v3397, %v3429
        %v3455 = vcombine.low %v3404, %v3436
        %v3456 = vcombine.high %v3404, %v3436
        %v3457 = vcombine.low %v3413, %v3445
        %v3458 = vcombine.high %v3413, %v3445
        %v3459 = vcombine.low %v3420, %v3452
        %v3460 = vcombine.high %v3420, %v3452
        %v3461 = vcombine.low %v187, %v257
        %v3462 = vcombine.high %v187, %v257
        %v3464 = vunpack.c.l.s4 1983009808
        %v3465 = vunpack.c.0.s8 %v3464
        %v3466 = vlaneseq
        %v3467 = vshrl.u32 %v3466, 7
        %v3468 = vsub.s32 %v3465, %v3467
        %v3469 = vrot.slane %v3461, %v3468
        %v3471 = vunpack.c.l.s4 1983009808
        %v3472 = vunpack.c.0.s8 %v3471
        %v3473 = vlaneseq
        %v3474 = vshrl.u32 %v3473, 7
        %v3475 = vsub.s32 %v3472, %v3474
        %v3476 = vrot.slane %v3462, %v3475
        %v3477 = vcombine.low %v222, %v292
        %v3478 = vcombine.high %v222, %v292
        %v3480 = vunpack.c.l.s4 1983009808
        %v3481 = vunpack.c.0.s8 %v3480
        %v3482 = vlaneseq
        %v3483 = vshrl.u32 %v3482, 7
        %v3484 = vsub.s32 %v3481, %v3483
        %v3485 = vrot.slane %v3477, %v3484
        %v3487 = vunpack.c.l.s4 1983009808
        %v3488 = vunpack.c.0.s8 %v3487
        %v3489 = vlaneseq
        %v3490 = vshrl.u32 %v3489, 7
        %v3491 = vsub.s32 %v3488, %v3490
        %v3492 = vrot.slane %v3478, %v3491
        %v3493 = vcombine.low %v327, %v397
        %v3494 = vcombine.high %v327, %v397
        %v3496 = vunpack.c.l.s4 1983009808
        %v3497 = vunpack.c.0.s8 %v3496
        %v3498 = vlaneseq
        %v3499 = vshrl.u32 %v3498, 7
        %v3500 = vsub.s32 %v3497, %v3499
        %v3501 = vrot.slane %v3493, %v3500
        %v3503 = vunpack.c.l.s4 1983009808
        %v3504 = vunpack.c.0.s8 %v3503
        %v3505 = vlaneseq
        %v3506 = vshrl.u32 %v3505, 7
        %v3507 = vsub.s32 %v3504, %v3506
        %v3508 = vrot.slane %v3494, %v3507
        %v3509 = vcombine.low %v362, %v432
        %v3510 = vcombine.high %v362, %v432
        %v3512 = vunpack.c.l.s4 1983009808
        %v3513 = vunpack.c.0.s8 %v3512
        %v3514 = vlaneseq
        %v3515 = vshrl.u32 %v3514, 7
        %v3516 = vsub.s32 %v3513, %v3515
        %v3517 = vrot.slane %v3509, %v3516
        %v3519 = vunpack.c.l.s4 1983009808
        %v3520 = vunpack.c.0.s8 %v3519
        %v3521 = vlaneseq
        %v3522 = vshrl.u32 %v3521, 7
        %v3523 = vsub.s32 %v3520, %v3522
        %v3524 = vrot.slane %v3510, %v3523
        %v3525 = vcombine.low %v3469, %v3485
        %v3526 = vcombine.high %v3469, %v3485
        %v3528 = vunpack.c.l.s4 1934713408
        %v3529 = vunpack.c.0.s8 %v3528
        %v3530 = vlaneseq
        %v3531 = vshrl.u32 %v3530, 7
        %v3532 = vsub.s32 %v3529, %v3531
        %v3533 = vrot.slane %v3525, %v3532
        %v3535 = vunpack.c.l.s4 1934713408
        %v3536 = vunpack.c.0.s8 %v3535
        %v3537 = vlaneseq
        %v3538 = vshrl.u32 %v3537, 7
        %v3539 = vsub.s32 %v3536, %v3538
        %v3540 = vrot.slane %v3526, %v3539
        %v3541 = vcombine.low %v3476, %v3492
        %v3542 = vcombine.high %v3476, %v3492
        %v3544 = vunpack.c.l.s4 1934713408
        %v3545 = vunpack.c.0.s8 %v3544
        %v3546 = vlaneseq
        %v3547 = vshrl.u32 %v3546, 7
        %v3548 = vsub.s32 %v3545, %v3547
        %v3549 = vrot.slane %v3541, %v3548
        %v3551 = vunpack.c.l.s4 1934713408
        %v3552 = vunpack.c.0.s8 %v3551
        %v3553 = vlaneseq
        %v3554 = vshrl.u32 %v3553, 7
        %v3555 = vsub.s32 %v3552, %v3554
        %v3556 = vrot.slane %v3542, %v3555
        %v3557 = vcombine.low %v3501, %v3517
        %v3558 = vcombine.high %v3501, %v3517
        %v3560 = vunpack.c.l.s4 1934713408
        %v3561 = vunpack.c.0.s8 %v3560
        %v3562 = vlaneseq
        %v3563 = vshrl.u32 %v3562, 7
        %v3564 = vsub.s32 %v3561, %v3563
        %v3565 = vrot.slane %v3557, %v3564
        %v3567 = vunpack.c.l.s4 1934713408
        %v3568 = vunpack.c.0.s8 %v3567
        %v3569 = vlaneseq
        %v3570 = vshrl.u32 %v3569, 7
        %v3571 = vsub.s32 %v3568, %v3570
        %v3572 = vrot.slane %v3558, %v3571
        %v3573 = vcombine.low %v3508, %v3524
        %v3574 = vcombine.high %v3508, %v3524
        %v3576 = vunpack.c.l.s4 1934713408
        %v3577 = vunpack.c.0.s8 %v3576
        %v3578 = vlaneseq
        %v3579 = vshrl.u32 %v3578, 7
        %v3580 = vsub.s32 %v3577, %v3579
        %v3581 = vrot.slane %v3573, %v3580
        %v3583 = vunpack.c.l.s4 1934713408
        %v3584 = vunpack.c.0.s8 %v3583
        %v3585 = vlaneseq
        %v3586 = vshrl.u32 %v3585, 7
        %v3587 = vsub.s32 %v3584, %v3586
        %v3588 = vrot.slane %v3574, %v3587
        %v3589 = vcombine.low %v3533, %v3565
        %v3590 = vcombine.high %v3533, %v3565
        %v3591 = vcombine.low %v3540, %v3572
        %v3592 = vcombine.high %v3540, %v3572
        %v3593 = vcombine.low %v3549, %v3581
        %v3594 = vcombine.high %v3549, %v3581
        %v3595 = vcombine.low %v3556, %v3588
        %v3596 = vcombine.high %v3556, %v3588
        %v3597 = vcombine.low %v467, %v537
        %v3598 = vcombine.high %v467, %v537
        %v3600 = vunpack.c.l.s4 1983009808
        %v3601 = vunpack.c.0.s8 %v3600
        %v3602 = vlaneseq
        %v3603 = vshrl.u32 %v3602, 7
        %v3604 = vsub.s32 %v3601, %v3603
        %v3605 = vrot.slane %v3597, %v3604
        %v3607 = vunpack.c.l.s4 1983009808
        %v3608 = vunpack.c.0.s8 %v3607
        %v3609 = vlaneseq
        %v3610 = vshrl.u32 %v3609, 7
        %v3611 = vsub.s32 %v3608, %v3610
        %v3612 = vrot.slane %v3598, %v3611
        %v3613 = vcombine.low %v502, %v572
        %v3614 = vcombine.high %v502, %v572
        %v3616 = vunpack.c.l.s4 1983009808
        %v3617 = vunpack.c.0.s8 %v3616
        %v3618 = vlaneseq
        %v3619 = vshrl.u32 %v3618, 7
        %v3620 = vsub.s32 %v3617, %v3619
        %v3621 = vrot.slane %v3613, %v3620
        %v3623 = vunpack.c.l.s4 1983009808
        %v3624 = vunpack.c.0.s8 %v3623
        %v3625 = vlaneseq
        %v3626 = vshrl.u32 %v3625, 7
        %v3627 = vsub.s32 %v3624, %v3626
        %v3628 = vrot.slane %v3614, %v3627
        %v3629 = vcombine.low %v607, %v677
        %v3630 = vcombine.high %v607, %v677
        %v3632 = vunpack.c.l.s4 1983009808
        %v3633 = vunpack.c.0.s8 %v3632
        %v3634 = vlaneseq
        %v3635 = vshrl.u32 %v3634, 7
        %v3636 = vsub.s32 %v3633, %v3635
        %v3637 = vrot.slane %v3629, %v3636
        %v3639 = vunpack.c.l.s4 1983009808
        %v3640 = vunpack.c.0.s8 %v3639
        %v3641 = vlaneseq
        %v3642 = vshrl.u32 %v3641, 7
        %v3643 = vsub.s32 %v3640, %v3642
        %v3644 = vrot.slane %v3630, %v3643
        %v3645 = vcombine.low %v642, %v712
        %v3646 = vcombine.high %v642, %v712
        %v3648 = vunpack.c.l.s4 1983009808
        %v3649 = vunpack.c.0.s8 %v3648
        %v3650 = vlaneseq
        %v3651 = vshrl.u32 %v3650, 7
        %v3652 = vsub.s32 %v3649, %v3651
        %v3653 = vrot.slane %v3645, %v3652
        %v3655 = vunpack.c.l.s4 1983009808
        %v3656 = vunpack.c.0.s8 %v3655
        %v3657 = vlaneseq
        %v3658 = vshrl.u32 %v3657, 7
        %v3659 = vsub.s32 %v3656, %v3658
        %v3660 = vrot.slane %v3646, %v3659
        %v3661 = vcombine.low %v3605, %v3621
        %v3662 = vcombine.high %v3605, %v3621
        %v3664 = vunpack.c.l.s4 1934713408
        %v3665 = vunpack.c.0.s8 %v3664
        %v3666 = vlaneseq
        %v3667 = vshrl.u32 %v3666, 7
        %v3668 = vsub.s32 %v3665, %v3667
        %v3669 = vrot.slane %v3661, %v3668
        %v3671 = vunpack.c.l.s4 1934713408
        %v3672 = vunpack.c.0.s8 %v3671
        %v3673 = vlaneseq
        %v3674 = vshrl.u32 %v3673, 7
        %v3675 = vsub.s32 %v3672, %v3674
        %v3676 = vrot.slane %v3662, %v3675
        %v3677 = vcombine.low %v3612, %v3628
        %v3678 = vcombine.high %v3612, %v3628
        %v3680 = vunpack.c.l.s4 1934713408
        %v3681 = vunpack.c.0.s8 %v3680
        %v3682 = vlaneseq
        %v3683 = vshrl.u32 %v3682, 7
        %v3684 = vsub.s32 %v3681, %v3683
        %v3685 = vrot.slane %v3677, %v3684
        %v3687 = vunpack.c.l.s4 1934713408
        %v3688 = vunpack.c.0.s8 %v3687
        %v3689 = vlaneseq
        %v3690 = vshrl.u32 %v3689, 7
        %v3691 = vsub.s32 %v3688, %v3690
        %v3692 = vrot.slane %v3678, %v3691
        %v3693 = vcombine.low %v3637, %v3653
        %v3694 = vcombine.high %v3637, %v3653
        %v3696 = vunpack.c.l.s4 1934713408
        %v3697 = vunpack.c.0.s8 %v3696
        %v3698 = vlaneseq
        %v3699 = vshrl.u32 %v3698, 7
        %v3700 = vsub.s32 %v3697, %v3699
        %v3701 = vrot.slane %v3693, %v3700
        %v3703 = vunpack.c.l.s4 1934713408
        %v3704 = vunpack.c.0.s8 %v3703
        %v3705 = vlaneseq
        %v3706 = vshrl.u32 %v3705, 7
        %v3707 = vsub.s32 %v3704, %v3706
        %v3708 = vrot.slane %v3694, %v3707
        %v3709 = vcombine.low %v3644, %v3660
        %v3710 = vcombine.high %v3644, %v3660
        %v3712 = vunpack.c.l.s4 1934713408
        %v3713 = vunpack.c.0.s8 %v3712
        %v3714 = vlaneseq
        %v3715 = vshrl.u32 %v3714, 7
        %v3716 = vsub.s32 %v3713, %v3715
        %v3717 = vrot.slane %v3709, %v3716
        %v3719 = vunpack.c.l.s4 1934713408
        %v3720 = vunpack.c.0.s8 %v3719
        %v3721 = vlaneseq
        %v3722 = vshrl.u32 %v3721, 7
        %v3723 = vsub.s32 %v3720, %v3722
        %v3724 = vrot.slane %v3710, %v3723
        %v3725 = vcombine.low %v3669, %v3701
        %v3726 = vcombine.high %v3669, %v3701
        %v3727 = vcombine.low %v3676, %v3708
        %v3728 = vcombine.high %v3676, %v3708
        %v3729 = vcombine.low %v3685, %v3717
        %v3730 = vcombine.high %v3685, %v3717
        %v3731 = vcombine.low %v3692, %v3724
        %v3732 = vcombine.high %v3692, %v3724
        %v3733 = vcombine.low %v747, %v817
        %v3734 = vcombine.high %v747, %v817
        %v3736 = vunpack.c.l.s4 1983009808
        %v3737 = vunpack.c.0.s8 %v3736
        %v3738 = vlaneseq
        %v3739 = vshrl.u32 %v3738, 7
        %v3740 = vsub.s32 %v3737, %v3739
        %v3741 = vrot.slane %v3733, %v3740
        %v3743 = vunpack.c.l.s4 1983009808
        %v3744 = vunpack.c.0.s8 %v3743
        %v3745 = vlaneseq
        %v3746 = vshrl.u32 %v3745, 7
        %v3747 = vsub.s32 %v3744, %v3746
        %v3748 = vrot.slane %v3734, %v3747
        %v3749 = vcombine.low %v782, %v852
        %v3750 = vcombine.high %v782, %v852
        %v3752 = vunpack.c.l.s4 1983009808
        %v3753 = vunpack.c.0.s8 %v3752
        %v3754 = vlaneseq
        %v3755 = vshrl.u32 %v3754, 7
        %v3756 = vsub.s32 %v3753, %v3755
        %v3757 = vrot.slane %v3749, %v3756
        %v3759 = vunpack.c.l.s4 1983009808
        %v3760 = vunpack.c.0.s8 %v3759
        %v3761 = vlaneseq
        %v3762 = vshrl.u32 %v3761, 7
        %v3763 = vsub.s32 %v3760, %v3762
        %v3764 = vrot.slane %v3750, %v3763
        %v3765 = vcombine.low %v887, %v957
        %v3766 = vcombine.high %v887, %v957
        %v3768 = vunpack.c.l.s4 1983009808
        %v3769 = vunpack.c.0.s8 %v3768
        %v3770 = vlaneseq
        %v3771 = vshrl.u32 %v3770, 7
        %v3772 = vsub.s32 %v3769, %v3771
        %v3773 = vrot.slane %v3765, %v3772
        %v3775 = vunpack.c.l.s4 1983009808
        %v3776 = vunpack.c.0.s8 %v3775
        %v3777 = vlaneseq
        %v3778 = vshrl.u32 %v3777, 7
        %v3779 = vsub.s32 %v3776, %v3778
        %v3780 = vrot.slane %v3766, %v3779
        %v3781 = vcombine.low %v922, %v992
        %v3782 = vcombine.high %v922, %v992
        %v3784 = vunpack.c.l.s4 1983009808
        %v3785 = vunpack.c.0.s8 %v3784
        %v3786 = vlaneseq
        %v3787 = vshrl.u32 %v3786, 7
        %v3788 = vsub.s32 %v3785, %v3787
        %v3789 = vrot.slane %v3781, %v3788
        %v3791 = vunpack.c.l.s4 1983009808
        %v3792 = vunpack.c.0.s8 %v3791
        %v3793 = vlaneseq
        %v3794 = vshrl.u32 %v3793, 7
        %v3795 = vsub.s32 %v3792, %v3794
        %v3796 = vrot.slane %v3782, %v3795
        %v3797 = vcombine.low %v3741, %v3757
        %v3798 = vcombine.high %v3741, %v3757
        %v3800 = vunpack.c.l.s4 1934713408
        %v3801 = vunpack.c.0.s8 %v3800
        %v3802 = vlaneseq
        %v3803 = vshrl.u32 %v3802, 7
        %v3804 = vsub.s32 %v3801, %v3803
        %v3805 = vrot.slane %v3797, %v3804
        %v3807 = vunpack.c.l.s4 1934713408
        %v3808 = vunpack.c.0.s8 %v3807
        %v3809 = vlaneseq
        %v3810 = vshrl.u32 %v3809, 7
        %v3811 = vsub.s32 %v3808, %v3810
        %v3812 = vrot.slane %v3798, %v3811
        %v3813 = vcombine.low %v3748, %v3764
        %v3814 = vcombine.high %v3748, %v3764
        %v3816 = vunpack.c.l.s4 1934713408
        %v3817 = vunpack.c.0.s8 %v3816
        %v3818 = vlaneseq
        %v3819 = vshrl.u32 %v3818, 7
        %v3820 = vsub.s32 %v3817, %v3819
        %v3821 = vrot.slane %v3813, %v3820
        %v3823 = vunpack.c.l.s4 1934713408
        %v3824 = vunpack.c.0.s8 %v3823
        %v3825 = vlaneseq
        %v3826 = vshrl.u32 %v3825, 7
        %v3827 = vsub.s32 %v3824, %v3826
        %v3828 = vrot.slane %v3814, %v3827
        %v3829 = vcombine.low %v3773, %v3789
        %v3830 = vcombine.high %v3773, %v3789
        %v3832 = vunpack.c.l.s4 1934713408
        %v3833 = vunpack.c.0.s8 %v3832
        %v3834 = vlaneseq
        %v3835 = vshrl.u32 %v3834, 7
        %v3836 = vsub.s32 %v3833, %v3835
        %v3837 = vrot.slane %v3829, %v3836
        %v3839 = vunpack.c.l.s4 1934713408
        %v3840 = vunpack.c.0.s8 %v3839
        %v3841 = vlaneseq
        %v3842 = vshrl.u32 %v3841, 7
        %v3843 = vsub.s32 %v3840, %v3842
        %v3844 = vrot.slane %v3830, %v3843
        %v3845 = vcombine.low %v3780, %v3796
        %v3846 = vcombine.high %v3780, %v3796
        %v3848 = vunpack.c.l.s4 1934713408
        %v3849 = vunpack.c.0.s8 %v3848
        %v3850 = vlaneseq
        %v3851 = vshrl.u32 %v3850, 7
        %v3852 = vsub.s32 %v3849, %v3851
        %v3853 = vrot.slane %v3845, %v3852
        %v3855 = vunpack.c.l.s4 1934713408
        %v3856 = vunpack.c.0.s8 %v3855
        %v3857 = vlaneseq
        %v3858 = vshrl.u32 %v3857, 7
        %v3859 = vsub.s32 %v3856, %v3858
        %v3860 = vrot.slane %v3846, %v3859
        %v3861 = vcombine.low %v3805, %v3837
        %v3862 = vcombine.high %v3805, %v3837
        %v3863 = vcombine.low %v3812, %v3844
        %v3864 = vcombine.high %v3812, %v3844
        %v3865 = vcombine.low %v3821, %v3853
        %v3866 = vcombine.high %v3821, %v3853
        %v3867 = vcombine.low %v3828, %v3860
        %v3868 = vcombine.high %v3828, %v3860
        %v3869 = vcombine.low %v1027, %v1097
        %v3870 = vcombine.high %v1027, %v1097
        %v3872 = vunpack.c.l.s4 1983009808
        %v3873 = vunpack.c.0.s8 %v3872
        %v3874 = vlaneseq
        %v3875 = vshrl.u32 %v3874, 7
        %v3876 = vsub.s32 %v3873, %v3875
        %v3877 = vrot.slane %v3869, %v3876
        %v3879 = vunpack.c.l.s4 1983009808
        %v3880 = vunpack.c.0.s8 %v3879
        %v3881 = vlaneseq
        %v3882 = vshrl.u32 %v3881, 7
        %v3883 = vsub.s32 %v3880, %v3882
        %v3884 = vrot.slane %v3870, %v3883
        %v3885 = vcombine.low %v1062, %v1132
        %v3886 = vcombine.high %v1062, %v1132
        %v3888 = vunpack.c.l.s4 1983009808
        %v3889 = vunpack.c.0.s8 %v3888
        %v3890 = vlaneseq
        %v3891 = vshrl.u32 %v3890, 7
        %v3892 = vsub.s32 %v3889, %v3891
        %v3893 = vrot.slane %v3885, %v3892
        %v3895 = vunpack.c.l.s4 1983009808
        %v3896 = vunpack.c.0.s8 %v3895
        %v3897 = vlaneseq
        %v3898 = vshrl.u32 %v3897, 7
        %v3899 = vsub.s32 %v3896, %v3898
        %v3900 = vrot.slane %v3886, %v3899
        %v3901 = vcombine.low %v1167, %v1237
        %v3902 = vcombine.high %v1167, %v1237
        %v3904 = vunpack.c.l.s4 1983009808
        %v3905 = vunpack.c.0.s8 %v3904
        %v3906 = vlaneseq
        %v3907 = vshrl.u32 %v3906, 7
        %v3908 = vsub.s32 %v3905, %v3907
        %v3909 = vrot.slane %v3901, %v3908
        %v3911 = vunpack.c.l.s4 1983009808
        %v3912 = vunpack.c.0.s8 %v3911
        %v3913 = vlaneseq
        %v3914 = vshrl.u32 %v3913, 7
        %v3915 = vsub.s32 %v3912, %v3914
        %v3916 = vrot.slane %v3902, %v3915
        %v3917 = vcombine.low %v1202, %v1272
        %v3918 = vcombine.high %v1202, %v1272
        %v3920 = vunpack.c.l.s4 1983009808
        %v3921 = vunpack.c.0.s8 %v3920
        %v3922 = vlaneseq
        %v3923 = vshrl.u32 %v3922, 7
        %v3924 = vsub.s32 %v3921, %v3923
        %v3925 = vrot.slane %v3917, %v3924
        %v3927 = vunpack.c.l.s4 1983009808
        %v3928 = vunpack.c.0.s8 %v3927
        %v3929 = vlaneseq
        %v3930 = vshrl.u32 %v3929, 7
        %v3931 = vsub.s32 %v3928, %v3930
        %v3932 = vrot.slane %v3918, %v3931
        %v3933 = vcombine.low %v3877, %v3893
        %v3934 = vcombine.high %v3877, %v3893
        %v3936 = vunpack.c.l.s4 1934713408
        %v3937 = vunpack.c.0.s8 %v3936
        %v3938 = vlaneseq
        %v3939 = vshrl.u32 %v3938, 7
        %v3940 = vsub.s32 %v3937, %v3939
        %v3941 = vrot.slane %v3933, %v3940
        %v3943 = vunpack.c.l.s4 1934713408
        %v3944 = vunpack.c.0.s8 %v3943
        %v3945 = vlaneseq
        %v3946 = vshrl.u32 %v3945, 7
        %v3947 = vsub.s32 %v3944, %v3946
        %v3948 = vrot.slane %v3934, %v3947
        %v3949 = vcombine.low %v3884, %v3900
        %v3950 = vcombine.high %v3884, %v3900
        %v3952 = vunpack.c.l.s4 1934713408
        %v3953 = vunpack.c.0.s8 %v3952
        %v3954 = vlaneseq
        %v3955 = vshrl.u32 %v3954, 7
        %v3956 = vsub.s32 %v3953, %v3955
        %v3957 = vrot.slane %v3949, %v3956
        %v3959 = vunpack.c.l.s4 1934713408
        %v3960 = vunpack.c.0.s8 %v3959
        %v3961 = vlaneseq
        %v3962 = vshrl.u32 %v3961, 7
        %v3963 = vsub.s32 %v3960, %v3962
        %v3964 = vrot.slane %v3950, %v3963
        %v3965 = vcombine.low %v3909, %v3925
        %v3966 = vcombine.high %v3909, %v3925
        %v3968 = vunpack.c.l.s4 1934713408
        %v3969 = vunpack.c.0.s8 %v3968
        %v3970 = vlaneseq
        %v3971 = vshrl.u32 %v3970, 7
        %v3972 = vsub.s32 %v3969, %v3971
        %v3973 = vrot.slane %v3965, %v3972
        %v3975 = vunpack.c.l.s4 1934713408
        %v3976 = vunpack.c.0.s8 %v3975
        %v3977 = vlaneseq
        %v3978 = vshrl.u32 %v3977, 7
        %v3979 = vsub.s32 %v3976, %v3978
        %v3980 = vrot.slane %v3966, %v3979
        %v3981 = vcombine.low %v3916, %v3932
        %v3982 = vcombine.high %v3916, %v3932
        %v3984 = vunpack.c.l.s4 1934713408
        %v3985 = vunpack.c.0.s8 %v3984
        %v3986 = vlaneseq
        %v3987 = vshrl.u32 %v3986, 7
        %v3988 = vsub.s32 %v3985, %v3987
        %v3989 = vrot.slane %v3981, %v3988
        %v3991 = vunpack.c.l.s4 1934713408
        %v3992 = vunpack.c.0.s8 %v3991
        %v3993 = vlaneseq
        %v3994 = vshrl.u32 %v3993, 7
        %v3995 = vsub.s32 %v3992, %v3994
        %v3996 = vrot.slane %v3982, %v3995
        %v3997 = vcombine.low %v3941, %v3973
        %v3998 = vcombine.high %v3941, %v3973
        %v3999 = vcombine.low %v3948, %v3980
        %v4000 = vcombine.high %v3948, %v3980
        %v4001 = vcombine.low %v3957, %v3989
        %v4002 = vcombine.high %v3957, %v3989
        %v4003 = vcombine.low %v3964, %v3996
        %v4004 = vcombine.high %v3964, %v3996
        %v4005 = vcombine.low %v191, %v261
        %v4006 = vcombine.high %v191, %v261
        %v4008 = vunpack.c.l.s4 1983009808
        %v4009 = vunpack.c.0.s8 %v4008
        %v4010 = vlaneseq
        %v4011 = vshrl.u32 %v4010, 7
        %v4012 = vsub.s32 %v4009, %v4011
        %v4013 = vrot.slane %v4005, %v4012
        %v4015 = vunpack.c.l.s4 1983009808
        %v4016 = vunpack.c.0.s8 %v4015
        %v4017 = vlaneseq
        %v4018 = vshrl.u32 %v4017, 7
        %v4019 = vsub.s32 %v4016, %v4018
        %v4020 = vrot.slane %v4006, %v4019
        %v4021 = vcombine.low %v226, %v296
        %v4022 = vcombine.high %v226, %v296
        %v4024 = vunpack.c.l.s4 1983009808
        %v4025 = vunpack.c.0.s8 %v4024
        %v4026 = vlaneseq
        %v4027 = vshrl.u32 %v4026, 7
        %v4028 = vsub.s32 %v4025, %v4027
        %v4029 = vrot.slane %v4021, %v4028
        %v4031 = vunpack.c.l.s4 1983009808
        %v4032 = vunpack.c.0.s8 %v4031
        %v4033 = vlaneseq
        %v4034 = vshrl.u32 %v4033, 7
        %v4035 = vsub.s32 %v4032, %v4034
        %v4036 = vrot.slane %v4022, %v4035
        %v4037 = vcombine.low %v331, %v401
        %v4038 = vcombine.high %v331, %v401
        %v4040 = vunpack.c.l.s4 1983009808
        %v4041 = vunpack.c.0.s8 %v4040
        %v4042 = vlaneseq
        %v4043 = vshrl.u32 %v4042, 7
        %v4044 = vsub.s32 %v4041, %v4043
        %v4045 = vrot.slane %v4037, %v4044
        %v4047 = vunpack.c.l.s4 1983009808
        %v4048 = vunpack.c.0.s8 %v4047
        %v4049 = vlaneseq
        %v4050 = vshrl.u32 %v4049, 7
        %v4051 = vsub.s32 %v4048, %v4050
        %v4052 = vrot.slane %v4038, %v4051
        %v4053 = vcombine.low %v366, %v436
        %v4054 = vcombine.high %v366, %v436
        %v4056 = vunpack.c.l.s4 1983009808
        %v4057 = vunpack.c.0.s8 %v4056
        %v4058 = vlaneseq
        %v4059 = vshrl.u32 %v4058, 7
        %v4060 = vsub.s32 %v4057, %v4059
        %v4061 = vrot.slane %v4053, %v4060
        %v4063 = vunpack.c.l.s4 1983009808
        %v4064 = vunpack.c.0.s8 %v4063
        %v4065 = vlaneseq
        %v4066 = vshrl.u32 %v4065, 7
        %v4067 = vsub.s32 %v4064, %v4066
        %v4068 = vrot.slane %v4054, %v4067
        %v4069 = vcombine.low %v4013, %v4029
        %v4070 = vcombine.high %v4013, %v4029
        %v4072 = vunpack.c.l.s4 1934713408
        %v4073 = vunpack.c.0.s8 %v4072
        %v4074 = vlaneseq
        %v4075 = vshrl.u32 %v4074, 7
        %v4076 = vsub.s32 %v4073, %v4075
        %v4077 = vrot.slane %v4069, %v4076
        %v4079 = vunpack.c.l.s4 1934713408
        %v4080 = vunpack.c.0.s8 %v4079
        %v4081 = vlaneseq
        %v4082 = vshrl.u32 %v4081, 7
        %v4083 = vsub.s32 %v4080, %v4082
        %v4084 = vrot.slane %v4070, %v4083
        %v4085 = vcombine.low %v4020, %v4036
        %v4086 = vcombine.high %v4020, %v4036
        %v4088 = vunpack.c.l.s4 1934713408
        %v4089 = vunpack.c.0.s8 %v4088
        %v4090 = vlaneseq
        %v4091 = vshrl.u32 %v4090, 7
        %v4092 = vsub.s32 %v4089, %v4091
        %v4093 = vrot.slane %v4085, %v4092
        %v4095 = vunpack.c.l.s4 1934713408
        %v4096 = vunpack.c.0.s8 %v4095
        %v4097 = vlaneseq
        %v4098 = vshrl.u32 %v4097, 7
        %v4099 = vsub.s32 %v4096, %v4098
        %v4100 = vrot.slane %v4086, %v4099
        %v4101 = vcombine.low %v4045, %v4061
        %v4102 = vcombine.high %v4045, %v4061
        %v4104 = vunpack.c.l.s4 1934713408
        %v4105 = vunpack.c.0.s8 %v4104
        %v4106 = vlaneseq
        %v4107 = vshrl.u32 %v4106, 7
        %v4108 = vsub.s32 %v4105, %v4107
        %v4109 = vrot.slane %v4101, %v4108
        %v4111 = vunpack.c.l.s4 1934713408
        %v4112 = vunpack.c.0.s8 %v4111
        %v4113 = vlaneseq
        %v4114 = vshrl.u32 %v4113, 7
        %v4115 = vsub.s32 %v4112, %v4114
        %v4116 = vrot.slane %v4102, %v4115
        %v4117 = vcombine.low %v4052, %v4068
        %v4118 = vcombine.high %v4052, %v4068
        %v4120 = vunpack.c.l.s4 1934713408
        %v4121 = vunpack.c.0.s8 %v4120
        %v4122 = vlaneseq
        %v4123 = vshrl.u32 %v4122, 7
        %v4124 = vsub.s32 %v4121, %v4123
        %v4125 = vrot.slane %v4117, %v4124
        %v4127 = vunpack.c.l.s4 1934713408
        %v4128 = vunpack.c.0.s8 %v4127
        %v4129 = vlaneseq
        %v4130 = vshrl.u32 %v4129, 7
        %v4131 = vsub.s32 %v4128, %v4130
        %v4132 = vrot.slane %v4118, %v4131
        %v4133 = vcombine.low %v4077, %v4109
        %v4134 = vcombine.high %v4077, %v4109
        %v4135 = vcombine.low %v4084, %v4116
        %v4136 = vcombine.high %v4084, %v4116
        %v4137 = vcombine.low %v4093, %v4125
        %v4138 = vcombine.high %v4093, %v4125
        %v4139 = vcombine.low %v4100, %v4132
        %v4140 = vcombine.high %v4100, %v4132
        %v4141 = vcombine.low %v471, %v541
        %v4142 = vcombine.high %v471, %v541
        %v4144 = vunpack.c.l.s4 1983009808
        %v4145 = vunpack.c.0.s8 %v4144
        %v4146 = vlaneseq
        %v4147 = vshrl.u32 %v4146, 7
        %v4148 = vsub.s32 %v4145, %v4147
        %v4149 = vrot.slane %v4141, %v4148
        %v4151 = vunpack.c.l.s4 1983009808
        %v4152 = vunpack.c.0.s8 %v4151
        %v4153 = vlaneseq
        %v4154 = vshrl.u32 %v4153, 7
        %v4155 = vsub.s32 %v4152, %v4154
        %v4156 = vrot.slane %v4142, %v4155
        %v4157 = vcombine.low %v506, %v576
        %v4158 = vcombine.high %v506, %v576
        %v4160 = vunpack.c.l.s4 1983009808
        %v4161 = vunpack.c.0.s8 %v4160
        %v4162 = vlaneseq
        %v4163 = vshrl.u32 %v4162, 7
        %v4164 = vsub.s32 %v4161, %v4163
        %v4165 = vrot.slane %v4157, %v4164
        %v4167 = vunpack.c.l.s4 1983009808
        %v4168 = vunpack.c.0.s8 %v4167
        %v4169 = vlaneseq
        %v4170 = vshrl.u32 %v4169, 7
        %v4171 = vsub.s32 %v4168, %v4170
        %v4172 = vrot.slane %v4158, %v4171
        %v4173 = vcombine.low %v611, %v681
        %v4174 = vcombine.high %v611, %v681
        %v4176 = vunpack.c.l.s4 1983009808
        %v4177 = vunpack.c.0.s8 %v4176
        %v4178 = vlaneseq
        %v4179 = vshrl.u32 %v4178, 7
        %v4180 = vsub.s32 %v4177, %v4179
        %v4181 = vrot.slane %v4173, %v4180
        %v4183 = vunpack.c.l.s4 1983009808
        %v4184 = vunpack.c.0.s8 %v4183
        %v4185 = vlaneseq
        %v4186 = vshrl.u32 %v4185, 7
        %v4187 = vsub.s32 %v4184, %v4186
        %v4188 = vrot.slane %v4174, %v4187
        %v4189 = vcombine.low %v646, %v716
        %v4190 = vcombine.high %v646, %v716
        %v4192 = vunpack.c.l.s4 1983009808
        %v4193 = vunpack.c.0.s8 %v4192
        %v4194 = vlaneseq
        %v4195 = vshrl.u32 %v4194, 7
        %v4196 = vsub.s32 %v4193, %v4195
        %v4197 = vrot.slane %v4189, %v4196
        %v4199 = vunpack.c.l.s4 1983009808
        %v4200 = vunpack.c.0.s8 %v4199
        %v4201 = vlaneseq
        %v4202 = vshrl.u32 %v4201, 7
        %v4203 = vsub.s32 %v4200, %v4202
        %v4204 = vrot.slane %v4190, %v4203
        %v4205 = vcombine.low %v4149, %v4165
        %v4206 = vcombine.high %v4149, %v4165
        %v4208 = vunpack.c.l.s4 1934713408
        %v4209 = vunpack.c.0.s8 %v4208
        %v4210 = vlaneseq
        %v4211 = vshrl.u32 %v4210, 7
        %v4212 = vsub.s32 %v4209, %v4211
        %v4213 = vrot.slane %v4205, %v4212
        %v4215 = vunpack.c.l.s4 1934713408
        %v4216 = vunpack.c.0.s8 %v4215
        %v4217 = vlaneseq
        %v4218 = vshrl.u32 %v4217, 7
        %v4219 = vsub.s32 %v4216, %v4218
        %v4220 = vrot.slane %v4206, %v4219
        %v4221 = vcombine.low %v4156, %v4172
        %v4222 = vcombine.high %v4156, %v4172
        %v4224 = vunpack.c.l.s4 1934713408
        %v4225 = vunpack.c.0.s8 %v4224
        %v4226 = vlaneseq
        %v4227 = vshrl.u32 %v4226, 7
        %v4228 = vsub.s32 %v4225, %v4227
        %v4229 = vrot.slane %v4221, %v4228
        %v4231 = vunpack.c.l.s4 1934713408
        %v4232 = vunpack.c.0.s8 %v4231
        %v4233 = vlaneseq
        %v4234 = vshrl.u32 %v4233, 7
        %v4235 = vsub.s32 %v4232, %v4234
        %v4236 = vrot.slane %v4222, %v4235
        %v4237 = vcombine.low %v4181, %v4197
        %v4238 = vcombine.high %v4181, %v4197
        %v4240 = vunpack.c.l.s4 1934713408
        %v4241 = vunpack.c.0.s8 %v4240
        %v4242 = vlaneseq
        %v4243 = vshrl.u32 %v4242, 7
        %v4244 = vsub.s32 %v4241, %v4243
        %v4245 = vrot.slane %v4237, %v4244
        %v4247 = vunpack.c.l.s4 1934713408
        %v4248 = vunpack.c.0.s8 %v4247
        %v4249 = vlaneseq
        %v4250 = vshrl.u32 %v4249, 7
        %v4251 = vsub.s32 %v4248, %v4250
        %v4252 = vrot.slane %v4238, %v4251
        %v4253 = vcombine.low %v4188, %v4204
        %v4254 = vcombine.high %v4188, %v4204
        %v4256 = vunpack.c.l.s4 1934713408
        %v4257 = vunpack.c.0.s8 %v4256
        %v4258 = vlaneseq
        %v4259 = vshrl.u32 %v4258, 7
        %v4260 = vsub.s32 %v4257, %v4259
        %v4261 = vrot.slane %v4253, %v4260
        %v4263 = vunpack.c.l.s4 1934713408
        %v4264 = vunpack.c.0.s8 %v4263
        %v4265 = vlaneseq
        %v4266 = vshrl.u32 %v4265, 7
        %v4267 = vsub.s32 %v4264, %v4266
        %v4268 = vrot.slane %v4254, %v4267
        %v4269 = vcombine.low %v4213, %v4245
        %v4270 = vcombine.high %v4213, %v4245
        %v4271 = vcombine.low %v4220, %v4252
        %v4272 = vcombine.high %v4220, %v4252
        %v4273 = vcombine.low %v4229, %v4261
        %v4274 = vcombine.high %v4229, %v4261
        %v4275 = vcombine.low %v4236, %v4268
        %v4276 = vcombine.high %v4236, %v4268
        %v4277 = vcombine.low %v751, %v821
        %v4278 = vcombine.high %v751, %v821
        %v4280 = vunpack.c.l.s4 1983009808
        %v4281 = vunpack.c.0.s8 %v4280
        %v4282 = vlaneseq
        %v4283 = vshrl.u32 %v4282, 7
        %v4284 = vsub.s32 %v4281, %v4283
        %v4285 = vrot.slane %v4277, %v4284
        %v4287 = vunpack.c.l.s4 1983009808
        %v4288 = vunpack.c.0.s8 %v4287
        %v4289 = vlaneseq
        %v4290 = vshrl.u32 %v4289, 7
        %v4291 = vsub.s32 %v4288, %v4290
        %v4292 = vrot.slane %v4278, %v4291
        %v4293 = vcombine.low %v786, %v856
        %v4294 = vcombine.high %v786, %v856
        %v4296 = vunpack.c.l.s4 1983009808
        %v4297 = vunpack.c.0.s8 %v4296
        %v4298 = vlaneseq
        %v4299 = vshrl.u32 %v4298, 7
        %v4300 = vsub.s32 %v4297, %v4299
        %v4301 = vrot.slane %v4293, %v4300
        %v4303 = vunpack.c.l.s4 1983009808
        %v4304 = vunpack.c.0.s8 %v4303
        %v4305 = vlaneseq
        %v4306 = vshrl.u32 %v4305, 7
        %v4307 = vsub.s32 %v4304, %v4306
        %v4308 = vrot.slane %v4294, %v4307
        %v4309 = vcombine.low %v891, %v961
        %v4310 = vcombine.high %v891, %v961
        %v4312 = vunpack.c.l.s4 1983009808
        %v4313 = vunpack.c.0.s8 %v4312
        %v4314 = vlaneseq
        %v4315 = vshrl.u32 %v4314, 7
        %v4316 = vsub.s32 %v4313, %v4315
        %v4317 = vrot.slane %v4309, %v4316
        %v4319 = vunpack.c.l.s4 1983009808
        %v4320 = vunpack.c.0.s8 %v4319
        %v4321 = vlaneseq
        %v4322 = vshrl.u32 %v4321, 7
        %v4323 = vsub.s32 %v4320, %v4322
        %v4324 = vrot.slane %v4310, %v4323
        %v4325 = vcombine.low %v926, %v996
        %v4326 = vcombine.high %v926, %v996
        %v4328 = vunpack.c.l.s4 1983009808
        %v4329 = vunpack.c.0.s8 %v4328
        %v4330 = vlaneseq
        %v4331 = vshrl.u32 %v4330, 7
        %v4332 = vsub.s32 %v4329, %v4331
        %v4333 = vrot.slane %v4325, %v4332
        %v4335 = vunpack.c.l.s4 1983009808
        %v4336 = vunpack.c.0.s8 %v4335
        %v4337 = vlaneseq
        %v4338 = vshrl.u32 %v4337, 7
        %v4339 = vsub.s32 %v4336, %v4338
        %v4340 = vrot.slane %v4326, %v4339
        %v4341 = vcombine.low %v4285, %v4301
        %v4342 = vcombine.high %v4285, %v4301
        %v4344 = vunpack.c.l.s4 1934713408
        %v4345 = vunpack.c.0.s8 %v4344
        %v4346 = vlaneseq
        %v4347 = vshrl.u32 %v4346, 7
        %v4348 = vsub.s32 %v4345, %v4347
        %v4349 = vrot.slane %v4341, %v4348
        %v4351 = vunpack.c.l.s4 1934713408
        %v4352 = vunpack.c.0.s8 %v4351
        %v4353 = vlaneseq
        %v4354 = vshrl.u32 %v4353, 7
        %v4355 = vsub.s32 %v4352, %v4354
        %v4356 = vrot.slane %v4342, %v4355
        %v4357 = vcombine.low %v4292, %v4308
        %v4358 = vcombine.high %v4292, %v4308
        %v4360 = vunpack.c.l.s4 1934713408
        %v4361 = vunpack.c.0.s8 %v4360
        %v4362 = vlaneseq
        %v4363 = vshrl.u32 %v4362, 7
        %v4364 = vsub.s32 %v4361, %v4363
        %v4365 = vrot.slane %v4357, %v4364
        %v4367 = vunpack.c.l.s4 1934713408
        %v4368 = vunpack.c.0.s8 %v4367
        %v4369 = vlaneseq
        %v4370 = vshrl.u32 %v4369, 7
        %v4371 = vsub.s32 %v4368, %v4370
        %v4372 = vrot.slane %v4358, %v4371
        %v4373 = vcombine.low %v4317, %v4333
        %v4374 = vcombine.high %v4317, %v4333
        %v4376 = vunpack.c.l.s4 1934713408
        %v4377 = vunpack.c.0.s8 %v4376
        %v4378 = vlaneseq
        %v4379 = vshrl.u32 %v4378, 7
        %v4380 = vsub.s32 %v4377, %v4379
        %v4381 = vrot.slane %v4373, %v4380
        %v4383 = vunpack.c.l.s4 1934713408
        %v4384 = vunpack.c.0.s8 %v4383
        %v4385 = vlaneseq
        %v4386 = vshrl.u32 %v4385, 7
        %v4387 = vsub.s32 %v4384, %v4386
        %v4388 = vrot.slane %v4374, %v4387
        %v4389 = vcombine.low %v4324, %v4340
        %v4390 = vcombine.high %v4324, %v4340
        %v4392 = vunpack.c.l.s4 1934713408
        %v4393 = vunpack.c.0.s8 %v4392
        %v4394 = vlaneseq
        %v4395 = vshrl.u32 %v4394, 7
        %v4396 = vsub.s32 %v4393, %v4395
        %v4397 = vrot.slane %v4389, %v4396
        %v4399 = vunpack.c.l.s4 1934713408
        %v4400 = vunpack.c.0.s8 %v4399
        %v4401 = vlaneseq
        %v4402 = vshrl.u32 %v4401, 7
        %v4403 = vsub.s32 %v4400, %v4402
        %v4404 = vrot.slane %v4390, %v4403
        %v4405 = vcombine.low %v4349, %v4381
        %v4406 = vcombine.high %v4349, %v4381
        %v4407 = vcombine.low %v4356, %v4388
        %v4408 = vcombine.high %v4356, %v4388
        %v4409 = vcombine.low %v4365, %v4397
        %v4410 = vcombine.high %v4365, %v4397
        %v4411 = vcombine.low %v4372, %v4404
        %v4412 = vcombine.high %v4372, %v4404
        %v4413 = vcombine.low %v1031, %v1101
        %v4414 = vcombine.high %v1031, %v1101
        %v4416 = vunpack.c.l.s4 1983009808
        %v4417 = vunpack.c.0.s8 %v4416
        %v4418 = vlaneseq
        %v4419 = vshrl.u32 %v4418, 7
        %v4420 = vsub.s32 %v4417, %v4419
        %v4421 = vrot.slane %v4413, %v4420
        %v4423 = vunpack.c.l.s4 1983009808
        %v4424 = vunpack.c.0.s8 %v4423
        %v4425 = vlaneseq
        %v4426 = vshrl.u32 %v4425, 7
        %v4427 = vsub.s32 %v4424, %v4426
        %v4428 = vrot.slane %v4414, %v4427
        %v4429 = vcombine.low %v1066, %v1136
        %v4430 = vcombine.high %v1066, %v1136
        %v4432 = vunpack.c.l.s4 1983009808
        %v4433 = vunpack.c.0.s8 %v4432
        %v4434 = vlaneseq
        %v4435 = vshrl.u32 %v4434, 7
        %v4436 = vsub.s32 %v4433, %v4435
        %v4437 = vrot.slane %v4429, %v4436
        %v4439 = vunpack.c.l.s4 1983009808
        %v4440 = vunpack.c.0.s8 %v4439
        %v4441 = vlaneseq
        %v4442 = vshrl.u32 %v4441, 7
        %v4443 = vsub.s32 %v4440, %v4442
        %v4444 = vrot.slane %v4430, %v4443
        %v4445 = vcombine.low %v1171, %v1241
        %v4446 = vcombine.high %v1171, %v1241
        %v4448 = vunpack.c.l.s4 1983009808
        %v4449 = vunpack.c.0.s8 %v4448
        %v4450 = vlaneseq
        %v4451 = vshrl.u32 %v4450, 7
        %v4452 = vsub.s32 %v4449, %v4451
        %v4453 = vrot.slane %v4445, %v4452
        %v4455 = vunpack.c.l.s4 1983009808
        %v4456 = vunpack.c.0.s8 %v4455
        %v4457 = vlaneseq
        %v4458 = vshrl.u32 %v4457, 7
        %v4459 = vsub.s32 %v4456, %v4458
        %v4460 = vrot.slane %v4446, %v4459
        %v4461 = vcombine.low %v1206, %v1276
        %v4462 = vcombine.high %v1206, %v1276
        %v4464 = vunpack.c.l.s4 1983009808
        %v4465 = vunpack.c.0.s8 %v4464
        %v4466 = vlaneseq
        %v4467 = vshrl.u32 %v4466, 7
        %v4468 = vsub.s32 %v4465, %v4467
        %v4469 = vrot.slane %v4461, %v4468
        %v4471 = vunpack.c.l.s4 1983009808
        %v4472 = vunpack.c.0.s8 %v4471
        %v4473 = vlaneseq
        %v4474 = vshrl.u32 %v4473, 7
        %v4475 = vsub.s32 %v4472, %v4474
        %v4476 = vrot.slane %v4462, %v4475
        %v4477 = vcombine.low %v4421, %v4437
        %v4478 = vcombine.high %v4421, %v4437
        %v4480 = vunpack.c.l.s4 1934713408
        %v4481 = vunpack.c.0.s8 %v4480
        %v4482 = vlaneseq
        %v4483 = vshrl.u32 %v4482, 7
        %v4484 = vsub.s32 %v4481, %v4483
        %v4485 = vrot.slane %v4477, %v4484
        %v4487 = vunpack.c.l.s4 1934713408
        %v4488 = vunpack.c.0.s8 %v4487
        %v4489 = vlaneseq
        %v4490 = vshrl.u32 %v4489, 7
        %v4491 = vsub.s32 %v4488, %v4490
        %v4492 = vrot.slane %v4478, %v4491
        %v4493 = vcombine.low %v4428, %v4444
        %v4494 = vcombine.high %v4428, %v4444
        %v4496 = vunpack.c.l.s4 1934713408
        %v4497 = vunpack.c.0.s8 %v4496
        %v4498 = vlaneseq
        %v4499 = vshrl.u32 %v4498, 7
        %v4500 = vsub.s32 %v4497, %v4499
        %v4501 = vrot.slane %v4493, %v4500
        %v4503 = vunpack.c.l.s4 1934713408
        %v4504 = vunpack.c.0.s8 %v4503
        %v4505 = vlaneseq
        %v4506 = vshrl.u32 %v4505, 7
        %v4507 = vsub.s32 %v4504, %v4506
        %v4508 = vrot.slane %v4494, %v4507
        %v4509 = vcombine.low %v4453, %v4469
        %v4510 = vcombine.high %v4453, %v4469
        %v4512 = vunpack.c.l.s4 1934713408
        %v4513 = vunpack.c.0.s8 %v4512
        %v4514 = vlaneseq
        %v4515 = vshrl.u32 %v4514, 7
        %v4516 = vsub.s32 %v4513, %v4515
        %v4517 = vrot.slane %v4509, %v4516
        %v4519 = vunpack.c.l.s4 1934713408
        %v4520 = vunpack.c.0.s8 %v4519
        %v4521 = vlaneseq
        %v4522 = vshrl.u32 %v4521, 7
        %v4523 = vsub.s32 %v4520, %v4522
        %v4524 = vrot.slane %v4510, %v4523
        %v4525 = vcombine.low %v4460, %v4476
        %v4526 = vcombine.high %v4460, %v4476
        %v4528 = vunpack.c.l.s4 1934713408
        %v4529 = vunpack.c.0.s8 %v4528
        %v4530 = vlaneseq
        %v4531 = vshrl.u32 %v4530, 7
        %v4532 = vsub.s32 %v4529, %v4531
        %v4533 = vrot.slane %v4525, %v4532
        %v4535 = vunpack.c.l.s4 1934713408
        %v4536 = vunpack.c.0.s8 %v4535
        %v4537 = vlaneseq
        %v4538 = vshrl.u32 %v4537, 7
        %v4539 = vsub.s32 %v4536, %v4538
        %v4540 = vrot.slane %v4526, %v4539
        %v4541 = vcombine.low %v4485, %v4517
        %v4542 = vcombine.high %v4485, %v4517
        %v4543 = vcombine.low %v4492, %v4524
        %v4544 = vcombine.high %v4492, %v4524
        %v4545 = vcombine.low %v4501, %v4533
        %v4546 = vcombine.high %v4501, %v4533
        %v4547 = vcombine.low %v4508, %v4540
        %v4548 = vcombine.high %v4508, %v4540
        %v4549 = vcombine.low %v195, %v265
        %v4550 = vcombine.high %v195, %v265
        %v4552 = vunpack.c.l.s4 1983009808
        %v4553 = vunpack.c.0.s8 %v4552
        %v4554 = vlaneseq
        %v4555 = vshrl.u32 %v4554, 7
        %v4556 = vsub.s32 %v4553, %v4555
        %v4557 = vrot.slane %v4549, %v4556
        %v4559 = vunpack.c.l.s4 1983009808
        %v4560 = vunpack.c.0.s8 %v4559
        %v4561 = vlaneseq
        %v4562 = vshrl.u32 %v4561, 7
        %v4563 = vsub.s32 %v4560, %v4562
        %v4564 = vrot.slane %v4550, %v4563
        %v4565 = vcombine.low %v230, %v300
        %v4566 = vcombine.high %v230, %v300
        %v4568 = vunpack.c.l.s4 1983009808
        %v4569 = vunpack.c.0.s8 %v4568
        %v4570 = vlaneseq
        %v4571 = vshrl.u32 %v4570, 7
        %v4572 = vsub.s32 %v4569, %v4571
        %v4573 = vrot.slane %v4565, %v4572
        %v4575 = vunpack.c.l.s4 1983009808
        %v4576 = vunpack.c.0.s8 %v4575
        %v4577 = vlaneseq
        %v4578 = vshrl.u32 %v4577, 7
        %v4579 = vsub.s32 %v4576, %v4578
        %v4580 = vrot.slane %v4566, %v4579
        %v4581 = vcombine.low %v335, %v405
        %v4582 = vcombine.high %v335, %v405
        %v4584 = vunpack.c.l.s4 1983009808
        %v4585 = vunpack.c.0.s8 %v4584
        %v4586 = vlaneseq
        %v4587 = vshrl.u32 %v4586, 7
        %v4588 = vsub.s32 %v4585, %v4587
        %v4589 = vrot.slane %v4581, %v4588
        %v4591 = vunpack.c.l.s4 1983009808
        %v4592 = vunpack.c.0.s8 %v4591
        %v4593 = vlaneseq
        %v4594 = vshrl.u32 %v4593, 7
        %v4595 = vsub.s32 %v4592, %v4594
        %v4596 = vrot.slane %v4582, %v4595
        %v4597 = vcombine.low %v370, %v440
        %v4598 = vcombine.high %v370, %v440
        %v4600 = vunpack.c.l.s4 1983009808
        %v4601 = vunpack.c.0.s8 %v4600
        %v4602 = vlaneseq
        %v4603 = vshrl.u32 %v4602, 7
        %v4604 = vsub.s32 %v4601, %v4603
        %v4605 = vrot.slane %v4597, %v4604
        %v4607 = vunpack.c.l.s4 1983009808
        %v4608 = vunpack.c.0.s8 %v4607
        %v4609 = vlaneseq
        %v4610 = vshrl.u32 %v4609, 7
        %v4611 = vsub.s32 %v4608, %v4610
        %v4612 = vrot.slane %v4598, %v4611
        %v4613 = vcombine.low %v4557, %v4573
        %v4614 = vcombine.high %v4557, %v4573
        %v4616 = vunpack.c.l.s4 1934713408
        %v4617 = vunpack.c.0.s8 %v4616
        %v4618 = vlaneseq
        %v4619 = vshrl.u32 %v4618, 7
        %v4620 = vsub.s32 %v4617, %v4619
        %v4621 = vrot.slane %v4613, %v4620
        %v4623 = vunpack.c.l.s4 1934713408
        %v4624 = vunpack.c.0.s8 %v4623
        %v4625 = vlaneseq
        %v4626 = vshrl.u32 %v4625, 7
        %v4627 = vsub.s32 %v4624, %v4626
        %v4628 = vrot.slane %v4614, %v4627
        %v4629 = vcombine.low %v4564, %v4580
        %v4630 = vcombine.high %v4564, %v4580
        %v4632 = vunpack.c.l.s4 1934713408
        %v4633 = vunpack.c.0.s8 %v4632
        %v4634 = vlaneseq
        %v4635 = vshrl.u32 %v4634, 7
        %v4636 = vsub.s32 %v4633, %v4635
        %v4637 = vrot.slane %v4629, %v4636
        %v4639 = vunpack.c.l.s4 1934713408
        %v4640 = vunpack.c.0.s8 %v4639
        %v4641 = vlaneseq
        %v4642 = vshrl.u32 %v4641, 7
        %v4643 = vsub.s32 %v4640, %v4642
        %v4644 = vrot.slane %v4630, %v4643
        %v4645 = vcombine.low %v4589, %v4605
        %v4646 = vcombine.high %v4589, %v4605
        %v4648 = vunpack.c.l.s4 1934713408
        %v4649 = vunpack.c.0.s8 %v4648
        %v4650 = vlaneseq
        %v4651 = vshrl.u32 %v4650, 7
        %v4652 = vsub.s32 %v4649, %v4651
        %v4653 = vrot.slane %v4645, %v4652
        %v4655 = vunpack.c.l.s4 1934713408
        %v4656 = vunpack.c.0.s8 %v4655
        %v4657 = vlaneseq
        %v4658 = vshrl.u32 %v4657, 7
        %v4659 = vsub.s32 %v4656, %v4658
        %v4660 = vrot.slane %v4646, %v4659
        %v4661 = vcombine.low %v4596, %v4612
        %v4662 = vcombine.high %v4596, %v4612
        %v4664 = vunpack.c.l.s4 1934713408
        %v4665 = vunpack.c.0.s8 %v4664
        %v4666 = vlaneseq
        %v4667 = vshrl.u32 %v4666, 7
        %v4668 = vsub.s32 %v4665, %v4667
        %v4669 = vrot.slane %v4661, %v4668
        %v4671 = vunpack.c.l.s4 1934713408
        %v4672 = vunpack.c.0.s8 %v4671
        %v4673 = vlaneseq
        %v4674 = vshrl.u32 %v4673, 7
        %v4675 = vsub.s32 %v4672, %v4674
        %v4676 = vrot.slane %v4662, %v4675
        %v4677 = vcombine.low %v4621, %v4653
        %v4678 = vcombine.high %v4621, %v4653
        %v4679 = vcombine.low %v4628, %v4660
        %v4680 = vcombine.high %v4628, %v4660
        %v4681 = vcombine.low %v4637, %v4669
        %v4682 = vcombine.high %v4637, %v4669
        %v4683 = vcombine.low %v4644, %v4676
        %v4684 = vcombine.high %v4644, %v4676
        %v4685 = vcombine.low %v475, %v545
        %v4686 = vcombine.high %v475, %v545
        %v4688 = vunpack.c.l.s4 1983009808
        %v4689 = vunpack.c.0.s8 %v4688
        %v4690 = vlaneseq
        %v4691 = vshrl.u32 %v4690, 7
        %v4692 = vsub.s32 %v4689, %v4691
        %v4693 = vrot.slane %v4685, %v4692
        %v4695 = vunpack.c.l.s4 1983009808
        %v4696 = vunpack.c.0.s8 %v4695
        %v4697 = vlaneseq
        %v4698 = vshrl.u32 %v4697, 7
        %v4699 = vsub.s32 %v4696, %v4698
        %v4700 = vrot.slane %v4686, %v4699
        %v4701 = vcombine.low %v510, %v580
        %v4702 = vcombine.high %v510, %v580
        %v4704 = vunpack.c.l.s4 1983009808
        %v4705 = vunpack.c.0.s8 %v4704
        %v4706 = vlaneseq
        %v4707 = vshrl.u32 %v4706, 7
        %v4708 = vsub.s32 %v4705, %v4707
        %v4709 = vrot.slane %v4701, %v4708
        %v4711 = vunpack.c.l.s4 1983009808
        %v4712 = vunpack.c.0.s8 %v4711
        %v4713 = vlaneseq
        %v4714 = vshrl.u32 %v4713, 7
        %v4715 = vsub.s32 %v4712, %v4714
        %v4716 = vrot.slane %v4702, %v4715
        %v4717 = vcombine.low %v615, %v685
        %v4718 = vcombine.high %v615, %v685
        %v4720 = vunpack.c.l.s4 1983009808
        %v4721 = vunpack.c.0.s8 %v4720
        %v4722 = vlaneseq
        %v4723 = vshrl.u32 %v4722, 7
        %v4724 = vsub.s32 %v4721, %v4723
        %v4725 = vrot.slane %v4717, %v4724
        %v4727 = vunpack.c.l.s4 1983009808
        %v4728 = vunpack.c.0.s8 %v4727
        %v4729 = vlaneseq
        %v4730 = vshrl.u32 %v4729, 7
        %v4731 = vsub.s32 %v4728, %v4730
        %v4732 = vrot.slane %v4718, %v4731
        %v4733 = vcombine.low %v650, %v720
        %v4734 = vcombine.high %v650, %v720
        %v4736 = vunpack.c.l.s4 1983009808
        %v4737 = vunpack.c.0.s8 %v4736
        %v4738 = vlaneseq
        %v4739 = vshrl.u32 %v4738, 7
        %v4740 = vsub.s32 %v4737, %v4739
        %v4741 = vrot.slane %v4733, %v4740
        %v4743 = vunpack.c.l.s4 1983009808
        %v4744 = vunpack.c.0.s8 %v4743
        %v4745 = vlaneseq
        %v4746 = vshrl.u32 %v4745, 7
        %v4747 = vsub.s32 %v4744, %v4746
        %v4748 = vrot.slane %v4734, %v4747
        %v4749 = vcombine.low %v4693, %v4709
        %v4750 = vcombine.high %v4693, %v4709
        %v4752 = vunpack.c.l.s4 1934713408
        %v4753 = vunpack.c.0.s8 %v4752
        %v4754 = vlaneseq
        %v4755 = vshrl.u32 %v4754, 7
        %v4756 = vsub.s32 %v4753, %v4755
        %v4757 = vrot.slane %v4749, %v4756
        %v4759 = vunpack.c.l.s4 1934713408
        %v4760 = vunpack.c.0.s8 %v4759
        %v4761 = vlaneseq
        %v4762 = vshrl.u32 %v4761, 7
        %v4763 = vsub.s32 %v4760, %v4762
        %v4764 = vrot.slane %v4750, %v4763
        %v4765 = vcombine.low %v4700, %v4716
        %v4766 = vcombine.high %v4700, %v4716
        %v4768 = vunpack.c.l.s4 1934713408
        %v4769 = vunpack.c.0.s8 %v4768
        %v4770 = vlaneseq
        %v4771 = vshrl.u32 %v4770, 7
        %v4772 = vsub.s32 %v4769, %v4771
        %v4773 = vrot.slane %v4765, %v4772
        %v4775 = vunpack.c.l.s4 1934713408
        %v4776 = vunpack.c.0.s8 %v4775
        %v4777 = vlaneseq
        %v4778 = vshrl.u32 %v4777, 7
        %v4779 = vsub.s32 %v4776, %v4778
        %v4780 = vrot.slane %v4766, %v4779
        %v4781 = vcombine.low %v4725, %v4741
        %v4782 = vcombine.high %v4725, %v4741
        %v4784 = vunpack.c.l.s4 1934713408
        %v4785 = vunpack.c.0.s8 %v4784
        %v4786 = vlaneseq
        %v4787 = vshrl.u32 %v4786, 7
        %v4788 = vsub.s32 %v4785, %v4787
        %v4789 = vrot.slane %v4781, %v4788
        %v4791 = vunpack.c.l.s4 1934713408
        %v4792 = vunpack.c.0.s8 %v4791
        %v4793 = vlaneseq
        %v4794 = vshrl.u32 %v4793, 7
        %v4795 = vsub.s32 %v4792, %v4794
        %v4796 = vrot.slane %v4782, %v4795
        %v4797 = vcombine.low %v4732, %v4748
        %v4798 = vcombine.high %v4732, %v4748
        %v4800 = vunpack.c.l.s4 1934713408
        %v4801 = vunpack.c.0.s8 %v4800
        %v4802 = vlaneseq
        %v4803 = vshrl.u32 %v4802, 7
        %v4804 = vsub.s32 %v4801, %v4803
        %v4805 = vrot.slane %v4797, %v4804
        %v4807 = vunpack.c.l.s4 1934713408
        %v4808 = vunpack.c.0.s8 %v4807
        %v4809 = vlaneseq
        %v4810 = vshrl.u32 %v4809, 7
        %v4811 = vsub.s32 %v4808, %v4810
        %v4812 = vrot.slane %v4798, %v4811
        %v4813 = vcombine.low %v4757, %v4789
        %v4814 = vcombine.high %v4757, %v4789
        %v4815 = vcombine.low %v4764, %v4796
        %v4816 = vcombine.high %v4764, %v4796
        %v4817 = vcombine.low %v4773, %v4805
        %v4818 = vcombine.high %v4773, %v4805
        %v4819 = vcombine.low %v4780, %v4812
        %v4820 = vcombine.high %v4780, %v4812
        %v4821 = vcombine.low %v755, %v825
        %v4822 = vcombine.high %v755, %v825
        %v4824 = vunpack.c.l.s4 1983009808
        %v4825 = vunpack.c.0.s8 %v4824
        %v4826 = vlaneseq
        %v4827 = vshrl.u32 %v4826, 7
        %v4828 = vsub.s32 %v4825, %v4827
        %v4829 = vrot.slane %v4821, %v4828
        %v4831 = vunpack.c.l.s4 1983009808
        %v4832 = vunpack.c.0.s8 %v4831
        %v4833 = vlaneseq
        %v4834 = vshrl.u32 %v4833, 7
        %v4835 = vsub.s32 %v4832, %v4834
        %v4836 = vrot.slane %v4822, %v4835
        %v4837 = vcombine.low %v790, %v860
        %v4838 = vcombine.high %v790, %v860
        %v4840 = vunpack.c.l.s4 1983009808
        %v4841 = vunpack.c.0.s8 %v4840
        %v4842 = vlaneseq
        %v4843 = vshrl.u32 %v4842, 7
        %v4844 = vsub.s32 %v4841, %v4843
        %v4845 = vrot.slane %v4837, %v4844
        %v4847 = vunpack.c.l.s4 1983009808
        %v4848 = vunpack.c.0.s8 %v4847
        %v4849 = vlaneseq
        %v4850 = vshrl.u32 %v4849, 7
        %v4851 = vsub.s32 %v4848, %v4850
        %v4852 = vrot.slane %v4838, %v4851
        %v4853 = vcombine.low %v895, %v965
        %v4854 = vcombine.high %v895, %v965
        %v4856 = vunpack.c.l.s4 1983009808
        %v4857 = vunpack.c.0.s8 %v4856
        %v4858 = vlaneseq
        %v4859 = vshrl.u32 %v4858, 7
        %v4860 = vsub.s32 %v4857, %v4859
        %v4861 = vrot.slane %v4853, %v4860
        %v4863 = vunpack.c.l.s4 1983009808
        %v4864 = vunpack.c.0.s8 %v4863
        %v4865 = vlaneseq
        %v4866 = vshrl.u32 %v4865, 7
        %v4867 = vsub.s32 %v4864, %v4866
        %v4868 = vrot.slane %v4854, %v4867
        %v4869 = vcombine.low %v930, %v1000
        %v4870 = vcombine.high %v930, %v1000
        %v4872 = vunpack.c.l.s4 1983009808
        %v4873 = vunpack.c.0.s8 %v4872
        %v4874 = vlaneseq
        %v4875 = vshrl.u32 %v4874, 7
        %v4876 = vsub.s32 %v4873, %v4875
        %v4877 = vrot.slane %v4869, %v4876
        %v4879 = vunpack.c.l.s4 1983009808
        %v4880 = vunpack.c.0.s8 %v4879
        %v4881 = vlaneseq
        %v4882 = vshrl.u32 %v4881, 7
        %v4883 = vsub.s32 %v4880, %v4882
        %v4884 = vrot.slane %v4870, %v4883
        %v4885 = vcombine.low %v4829, %v4845
        %v4886 = vcombine.high %v4829, %v4845
        %v4888 = vunpack.c.l.s4 1934713408
        %v4889 = vunpack.c.0.s8 %v4888
        %v4890 = vlaneseq
        %v4891 = vshrl.u32 %v4890, 7
        %v4892 = vsub.s32 %v4889, %v4891
        %v4893 = vrot.slane %v4885, %v4892
        %v4895 = vunpack.c.l.s4 1934713408
        %v4896 = vunpack.c.0.s8 %v4895
        %v4897 = vlaneseq
        %v4898 = vshrl.u32 %v4897, 7
        %v4899 = vsub.s32 %v4896, %v4898
        %v4900 = vrot.slane %v4886, %v4899
        %v4901 = vcombine.low %v4836, %v4852
        %v4902 = vcombine.high %v4836, %v4852
        %v4904 = vunpack.c.l.s4 1934713408
        %v4905 = vunpack.c.0.s8 %v4904
        %v4906 = vlaneseq
        %v4907 = vshrl.u32 %v4906, 7
        %v4908 = vsub.s32 %v4905, %v4907
        %v4909 = vrot.slane %v4901, %v4908
        %v4911 = vunpack.c.l.s4 1934713408
        %v4912 = vunpack.c.0.s8 %v4911
        %v4913 = vlaneseq
        %v4914 = vshrl.u32 %v4913, 7
        %v4915 = vsub.s32 %v4912, %v4914
        %v4916 = vrot.slane %v4902, %v4915
        %v4917 = vcombine.low %v4861, %v4877
        %v4918 = vcombine.high %v4861, %v4877
        %v4920 = vunpack.c.l.s4 1934713408
        %v4921 = vunpack.c.0.s8 %v4920
        %v4922 = vlaneseq
        %v4923 = vshrl.u32 %v4922, 7
        %v4924 = vsub.s32 %v4921, %v4923
        %v4925 = vrot.slane %v4917, %v4924
        %v4927 = vunpack.c.l.s4 1934713408
        %v4928 = vunpack.c.0.s8 %v4927
        %v4929 = vlaneseq
        %v4930 = vshrl.u32 %v4929, 7
        %v4931 = vsub.s32 %v4928, %v4930
        %v4932 = vrot.slane %v4918, %v4931
        %v4933 = vcombine.low %v4868, %v4884
        %v4934 = vcombine.high %v4868, %v4884
        %v4936 = vunpack.c.l.s4 1934713408
        %v4937 = vunpack.c.0.s8 %v4936
        %v4938 = vlaneseq
        %v4939 = vshrl.u32 %v4938, 7
        %v4940 = vsub.s32 %v4937, %v4939
        %v4941 = vrot.slane %v4933, %v4940
        %v4943 = vunpack.c.l.s4 1934713408
        %v4944 = vunpack.c.0.s8 %v4943
        %v4945 = vlaneseq
        %v4946 = vshrl.u32 %v4945, 7
        %v4947 = vsub.s32 %v4944, %v4946
        %v4948 = vrot.slane %v4934, %v4947
        %v4949 = vcombine.low %v4893, %v4925
        %v4950 = vcombine.high %v4893, %v4925
        %v4951 = vcombine.low %v4900, %v4932
        %v4952 = vcombine.high %v4900, %v4932
        %v4953 = vcombine.low %v4909, %v4941
        %v4954 = vcombine.high %v4909, %v4941
        %v4955 = vcombine.low %v4916, %v4948
        %v4956 = vcombine.high %v4916, %v4948
        %v4957 = vcombine.low %v1035, %v1105
        %v4958 = vcombine.high %v1035, %v1105
        %v4960 = vunpack.c.l.s4 1983009808
        %v4961 = vunpack.c.0.s8 %v4960
        %v4962 = vlaneseq
        %v4963 = vshrl.u32 %v4962, 7
        %v4964 = vsub.s32 %v4961, %v4963
        %v4965 = vrot.slane %v4957, %v4964
        %v4967 = vunpack.c.l.s4 1983009808
        %v4968 = vunpack.c.0.s8 %v4967
        %v4969 = vlaneseq
        %v4970 = vshrl.u32 %v4969, 7
        %v4971 = vsub.s32 %v4968, %v4970
        %v4972 = vrot.slane %v4958, %v4971
        %v4973 = vcombine.low %v1070, %v1140
        %v4974 = vcombine.high %v1070, %v1140
        %v4976 = vunpack.c.l.s4 1983009808
        %v4977 = vunpack.c.0.s8 %v4976
        %v4978 = vlaneseq
        %v4979 = vshrl.u32 %v4978, 7
        %v4980 = vsub.s32 %v4977, %v4979
        %v4981 = vrot.slane %v4973, %v4980
        %v4983 = vunpack.c.l.s4 1983009808
        %v4984 = vunpack.c.0.s8 %v4983
        %v4985 = vlaneseq
        %v4986 = vshrl.u32 %v4985, 7
        %v4987 = vsub.s32 %v4984, %v4986
        %v4988 = vrot.slane %v4974, %v4987
        %v4989 = vcombine.low %v1175, %v1245
        %v4990 = vcombine.high %v1175, %v1245
        %v4992 = vunpack.c.l.s4 1983009808
        %v4993 = vunpack.c.0.s8 %v4992
        %v4994 = vlaneseq
        %v4995 = vshrl.u32 %v4994, 7
        %v4996 = vsub.s32 %v4993, %v4995
        %v4997 = vrot.slane %v4989, %v4996
        %v4999 = vunpack.c.l.s4 1983009808
        %v5000 = vunpack.c.0.s8 %v4999
        %v5001 = vlaneseq
        %v5002 = vshrl.u32 %v5001, 7
        %v5003 = vsub.s32 %v5000, %v5002
        %v5004 = vrot.slane %v4990, %v5003
        %v5005 = vcombine.low %v1210, %v1280
        %v5006 = vcombine.high %v1210, %v1280
        %v5008 = vunpack.c.l.s4 1983009808
        %v5009 = vunpack.c.0.s8 %v5008
        %v5010 = vlaneseq
        %v5011 = vshrl.u32 %v5010, 7
        %v5012 = vsub.s32 %v5009, %v5011
        %v5013 = vrot.slane %v5005, %v5012
        %v5015 = vunpack.c.l.s4 1983009808
        %v5016 = vunpack.c.0.s8 %v5015
        %v5017 = vlaneseq
        %v5018 = vshrl.u32 %v5017, 7
        %v5019 = vsub.s32 %v5016, %v5018
        %v5020 = vrot.slane %v5006, %v5019
        %v5021 = vcombine.low %v4965, %v4981
        %v5022 = vcombine.high %v4965, %v4981
        %v5024 = vunpack.c.l.s4 1934713408
        %v5025 = vunpack.c.0.s8 %v5024
        %v5026 = vlaneseq
        %v5027 = vshrl.u32 %v5026, 7
        %v5028 = vsub.s32 %v5025, %v5027
        %v5029 = vrot.slane %v5021, %v5028
        %v5031 = vunpack.c.l.s4 1934713408
        %v5032 = vunpack.c.0.s8 %v5031
        %v5033 = vlaneseq
        %v5034 = vshrl.u32 %v5033, 7
        %v5035 = vsub.s32 %v5032, %v5034
        %v5036 = vrot.slane %v5022, %v5035
        %v5037 = vcombine.low %v4972, %v4988
        %v5038 = vcombine.high %v4972, %v4988
        %v5040 = vunpack.c.l.s4 1934713408
        %v5041 = vunpack.c.0.s8 %v5040
        %v5042 = vlaneseq
        %v5043 = vshrl.u32 %v5042, 7
        %v5044 = vsub.s32 %v5041, %v5043
        %v5045 = vrot.slane %v5037, %v5044
        %v5047 = vunpack.c.l.s4 1934713408
        %v5048 = vunpack.c.0.s8 %v5047
        %v5049 = vlaneseq
        %v5050 = vshrl.u32 %v5049, 7
        %v5051 = vsub.s32 %v5048, %v5050
        %v5052 = vrot.slane %v5038, %v5051
        %v5053 = vcombine.low %v4997, %v5013
        %v5054 = vcombine.high %v4997, %v5013
        %v5056 = vunpack.c.l.s4 1934713408
        %v5057 = vunpack.c.0.s8 %v5056
        %v5058 = vlaneseq
        %v5059 = vshrl.u32 %v5058, 7
        %v5060 = vsub.s32 %v5057, %v5059
        %v5061 = vrot.slane %v5053, %v5060
        %v5063 = vunpack.c.l.s4 1934713408
        %v5064 = vunpack.c.0.s8 %v5063
        %v5065 = vlaneseq
        %v5066 = vshrl.u32 %v5065, 7
        %v5067 = vsub.s32 %v5064, %v5066
        %v5068 = vrot.slane %v5054, %v5067
        %v5069 = vcombine.low %v5004, %v5020
        %v5070 = vcombine.high %v5004, %v5020
        %v5072 = vunpack.c.l.s4 1934713408
        %v5073 = vunpack.c.0.s8 %v5072
        %v5074 = vlaneseq
        %v5075 = vshrl.u32 %v5074, 7
        %v5076 = vsub.s32 %v5073, %v5075
        %v5077 = vrot.slane %v5069, %v5076
        %v5079 = vunpack.c.l.s4 1934713408
        %v5080 = vunpack.c.0.s8 %v5079
        %v5081 = vlaneseq
        %v5082 = vshrl.u32 %v5081, 7
        %v5083 = vsub.s32 %v5080, %v5082
        %v5084 = vrot.slane %v5070, %v5083
        %v5085 = vcombine.low %v5029, %v5061
        %v5086 = vcombine.high %v5029, %v5061
        %v5087 = vcombine.low %v5036, %v5068
        %v5088 = vcombine.high %v5036, %v5068
        %v5089 = vcombine.low %v5045, %v5077
        %v5090 = vcombine.high %v5045, %v5077
        %v5091 = vcombine.low %v5052, %v5084
        %v5092 = vcombine.high %v5052, %v5084
        %v5093 = vcombine.low %v199, %v269
        %v5094 = vcombine.high %v199, %v269
        %v5096 = vunpack.c.l.s4 1983009808
        %v5097 = vunpack.c.0.s8 %v5096
        %v5098 = vlaneseq
        %v5099 = vshrl.u32 %v5098, 7
        %v5100 = vsub.s32 %v5097, %v5099
        %v5101 = vrot.slane %v5093, %v5100
        %v5103 = vunpack.c.l.s4 1983009808
        %v5104 = vunpack.c.0.s8 %v5103
        %v5105 = vlaneseq
        %v5106 = vshrl.u32 %v5105, 7
        %v5107 = vsub.s32 %v5104, %v5106
        %v5108 = vrot.slane %v5094, %v5107
        %v5109 = vcombine.low %v234, %v304
        %v5110 = vcombine.high %v234, %v304
        %v5112 = vunpack.c.l.s4 1983009808
        %v5113 = vunpack.c.0.s8 %v5112
        %v5114 = vlaneseq
        %v5115 = vshrl.u32 %v5114, 7
        %v5116 = vsub.s32 %v5113, %v5115
        %v5117 = vrot.slane %v5109, %v5116
        %v5119 = vunpack.c.l.s4 1983009808
        %v5120 = vunpack.c.0.s8 %v5119
        %v5121 = vlaneseq
        %v5122 = vshrl.u32 %v5121, 7
        %v5123 = vsub.s32 %v5120, %v5122
        %v5124 = vrot.slane %v5110, %v5123
        %v5125 = vcombine.low %v339, %v409
        %v5126 = vcombine.high %v339, %v409
        %v5128 = vunpack.c.l.s4 1983009808
        %v5129 = vunpack.c.0.s8 %v5128
        %v5130 = vlaneseq
        %v5131 = vshrl.u32 %v5130, 7
        %v5132 = vsub.s32 %v5129, %v5131
        %v5133 = vrot.slane %v5125, %v5132
        %v5135 = vunpack.c.l.s4 1983009808
        %v5136 = vunpack.c.0.s8 %v5135
        %v5137 = vlaneseq
        %v5138 = vshrl.u32 %v5137, 7
        %v5139 = vsub.s32 %v5136, %v5138
        %v5140 = vrot.slane %v5126, %v5139
        %v5141 = vcombine.low %v374, %v444
        %v5142 = vcombine.high %v374, %v444
        %v5144 = vunpack.c.l.s4 1983009808
        %v5145 = vunpack.c.0.s8 %v5144
        %v5146 = vlaneseq
        %v5147 = vshrl.u32 %v5146, 7
        %v5148 = vsub.s32 %v5145, %v5147
        %v5149 = vrot.slane %v5141, %v5148
        %v5151 = vunpack.c.l.s4 1983009808
        %v5152 = vunpack.c.0.s8 %v5151
        %v5153 = vlaneseq
        %v5154 = vshrl.u32 %v5153, 7
        %v5155 = vsub.s32 %v5152, %v5154
        %v5156 = vrot.slane %v5142, %v5155
        %v5157 = vcombine.low %v5101, %v5117
        %v5158 = vcombine.high %v5101, %v5117
        %v5160 = vunpack.c.l.s4 1934713408
        %v5161 = vunpack.c.0.s8 %v5160
        %v5162 = vlaneseq
        %v5163 = vshrl.u32 %v5162, 7
        %v5164 = vsub.s32 %v5161, %v5163
        %v5165 = vrot.slane %v5157, %v5164
        %v5167 = vunpack.c.l.s4 1934713408
        %v5168 = vunpack.c.0.s8 %v5167
        %v5169 = vlaneseq
        %v5170 = vshrl.u32 %v5169, 7
        %v5171 = vsub.s32 %v5168, %v5170
        %v5172 = vrot.slane %v5158, %v5171
        %v5173 = vcombine.low %v5108, %v5124
        %v5174 = vcombine.high %v5108, %v5124
        %v5176 = vunpack.c.l.s4 1934713408
        %v5177 = vunpack.c.0.s8 %v5176
        %v5178 = vlaneseq
        %v5179 = vshrl.u32 %v5178, 7
        %v5180 = vsub.s32 %v5177, %v5179
        %v5181 = vrot.slane %v5173, %v5180
        %v5183 = vunpack.c.l.s4 1934713408
        %v5184 = vunpack.c.0.s8 %v5183
        %v5185 = vlaneseq
        %v5186 = vshrl.u32 %v5185, 7
        %v5187 = vsub.s32 %v5184, %v5186
        %v5188 = vrot.slane %v5174, %v5187
        %v5189 = vcombine.low %v5133, %v5149
        %v5190 = vcombine.high %v5133, %v5149
        %v5192 = vunpack.c.l.s4 1934713408
        %v5193 = vunpack.c.0.s8 %v5192
        %v5194 = vlaneseq
        %v5195 = vshrl.u32 %v5194, 7
        %v5196 = vsub.s32 %v5193, %v5195
        %v5197 = vrot.slane %v5189, %v5196
        %v5199 = vunpack.c.l.s4 1934713408
        %v5200 = vunpack.c.0.s8 %v5199
        %v5201 = vlaneseq
        %v5202 = vshrl.u32 %v5201, 7
        %v5203 = vsub.s32 %v5200, %v5202
        %v5204 = vrot.slane %v5190, %v5203
        %v5205 = vcombine.low %v5140, %v5156
        %v5206 = vcombine.high %v5140, %v5156
        %v5208 = vunpack.c.l.s4 1934713408
        %v5209 = vunpack.c.0.s8 %v5208
        %v5210 = vlaneseq
        %v5211 = vshrl.u32 %v5210, 7
        %v5212 = vsub.s32 %v5209, %v5211
        %v5213 = vrot.slane %v5205, %v5212
        %v5215 = vunpack.c.l.s4 1934713408
        %v5216 = vunpack.c.0.s8 %v5215
        %v5217 = vlaneseq
        %v5218 = vshrl.u32 %v5217, 7
        %v5219 = vsub.s32 %v5216, %v5218
        %v5220 = vrot.slane %v5206, %v5219
        %v5221 = vcombine.low %v5165, %v5197
        %v5222 = vcombine.high %v5165, %v5197
        %v5223 = vcombine.low %v5172, %v5204
        %v5224 = vcombine.high %v5172, %v5204
        %v5225 = vcombine.low %v5181, %v5213
        %v5226 = vcombine.high %v5181, %v5213
        %v5227 = vcombine.low %v5188, %v5220
        %v5228 = vcombine.high %v5188, %v5220
        %v5229 = vcombine.low %v479, %v549
        %v5230 = vcombine.high %v479, %v549
        %v5232 = vunpack.c.l.s4 1983009808
        %v5233 = vunpack.c.0.s8 %v5232
        %v5234 = vlaneseq
        %v5235 = vshrl.u32 %v5234, 7
        %v5236 = vsub.s32 %v5233, %v5235
        %v5237 = vrot.slane %v5229, %v5236
        %v5239 = vunpack.c.l.s4 1983009808
        %v5240 = vunpack.c.0.s8 %v5239
        %v5241 = vlaneseq
        %v5242 = vshrl.u32 %v5241, 7
        %v5243 = vsub.s32 %v5240, %v5242
        %v5244 = vrot.slane %v5230, %v5243
        %v5245 = vcombine.low %v514, %v584
        %v5246 = vcombine.high %v514, %v584
        %v5248 = vunpack.c.l.s4 1983009808
        %v5249 = vunpack.c.0.s8 %v5248
        %v5250 = vlaneseq
        %v5251 = vshrl.u32 %v5250, 7
        %v5252 = vsub.s32 %v5249, %v5251
        %v5253 = vrot.slane %v5245, %v5252
        %v5255 = vunpack.c.l.s4 1983009808
        %v5256 = vunpack.c.0.s8 %v5255
        %v5257 = vlaneseq
        %v5258 = vshrl.u32 %v5257, 7
        %v5259 = vsub.s32 %v5256, %v5258
        %v5260 = vrot.slane %v5246, %v5259
        %v5261 = vcombine.low %v619, %v689
        %v5262 = vcombine.high %v619, %v689
        %v5264 = vunpack.c.l.s4 1983009808
        %v5265 = vunpack.c.0.s8 %v5264
        %v5266 = vlaneseq
        %v5267 = vshrl.u32 %v5266, 7
        %v5268 = vsub.s32 %v5265, %v5267
        %v5269 = vrot.slane %v5261, %v5268
        %v5271 = vunpack.c.l.s4 1983009808
        %v5272 = vunpack.c.0.s8 %v5271
        %v5273 = vlaneseq
        %v5274 = vshrl.u32 %v5273, 7
        %v5275 = vsub.s32 %v5272, %v5274
        %v5276 = vrot.slane %v5262, %v5275
        %v5277 = vcombine.low %v654, %v724
        %v5278 = vcombine.high %v654, %v724
        %v5280 = vunpack.c.l.s4 1983009808
        %v5281 = vunpack.c.0.s8 %v5280
        %v5282 = vlaneseq
        %v5283 = vshrl.u32 %v5282, 7
        %v5284 = vsub.s32 %v5281, %v5283
        %v5285 = vrot.slane %v5277, %v5284
        %v5287 = vunpack.c.l.s4 1983009808
        %v5288 = vunpack.c.0.s8 %v5287
        %v5289 = vlaneseq
        %v5290 = vshrl.u32 %v5289, 7
        %v5291 = vsub.s32 %v5288, %v5290
        %v5292 = vrot.slane %v5278, %v5291
        %v5293 = vcombine.low %v5237, %v5253
        %v5294 = vcombine.high %v5237, %v5253
        %v5296 = vunpack.c.l.s4 1934713408
        %v5297 = vunpack.c.0.s8 %v5296
        %v5298 = vlaneseq
        %v5299 = vshrl.u32 %v5298, 7
        %v5300 = vsub.s32 %v5297, %v5299
        %v5301 = vrot.slane %v5293, %v5300
        %v5303 = vunpack.c.l.s4 1934713408
        %v5304 = vunpack.c.0.s8 %v5303
        %v5305 = vlaneseq
        %v5306 = vshrl.u32 %v5305, 7
        %v5307 = vsub.s32 %v5304, %v5306
        %v5308 = vrot.slane %v5294, %v5307
        %v5309 = vcombine.low %v5244, %v5260
        %v5310 = vcombine.high %v5244, %v5260
        %v5312 = vunpack.c.l.s4 1934713408
        %v5313 = vunpack.c.0.s8 %v5312
        %v5314 = vlaneseq
        %v5315 = vshrl.u32 %v5314, 7
        %v5316 = vsub.s32 %v5313, %v5315
        %v5317 = vrot.slane %v5309, %v5316
        %v5319 = vunpack.c.l.s4 1934713408
        %v5320 = vunpack.c.0.s8 %v5319
        %v5321 = vlaneseq
        %v5322 = vshrl.u32 %v5321, 7
        %v5323 = vsub.s32 %v5320, %v5322
        %v5324 = vrot.slane %v5310, %v5323
        %v5325 = vcombine.low %v5269, %v5285
        %v5326 = vcombine.high %v5269, %v5285
        %v5328 = vunpack.c.l.s4 1934713408
        %v5329 = vunpack.c.0.s8 %v5328
        %v5330 = vlaneseq
        %v5331 = vshrl.u32 %v5330, 7
        %v5332 = vsub.s32 %v5329, %v5331
        %v5333 = vrot.slane %v5325, %v5332
        %v5335 = vunpack.c.l.s4 1934713408
        %v5336 = vunpack.c.0.s8 %v5335
        %v5337 = vlaneseq
        %v5338 = vshrl.u32 %v5337, 7
        %v5339 = vsub.s32 %v5336, %v5338
        %v5340 = vrot.slane %v5326, %v5339
        %v5341 = vcombine.low %v5276, %v5292
        %v5342 = vcombine.high %v5276, %v5292
        %v5344 = vunpack.c.l.s4 1934713408
        %v5345 = vunpack.c.0.s8 %v5344
        %v5346 = vlaneseq
        %v5347 = vshrl.u32 %v5346, 7
        %v5348 = vsub.s32 %v5345, %v5347
        %v5349 = vrot.slane %v5341, %v5348
        %v5351 = vunpack.c.l.s4 1934713408
        %v5352 = vunpack.c.0.s8 %v5351
        %v5353 = vlaneseq
        %v5354 = vshrl.u32 %v5353, 7
        %v5355 = vsub.s32 %v5352, %v5354
        %v5356 = vrot.slane %v5342, %v5355
        %v5357 = vcombine.low %v5301, %v5333
        %v5358 = vcombine.high %v5301, %v5333
        %v5359 = vcombine.low %v5308, %v5340
        %v5360 = vcombine.high %v5308, %v5340
        %v5361 = vcombine.low %v5317, %v5349
        %v5362 = vcombine.high %v5317, %v5349
        %v5363 = vcombine.low %v5324, %v5356
        %v5364 = vcombine.high %v5324, %v5356
        %v5365 = vcombine.low %v759, %v829
        %v5366 = vcombine.high %v759, %v829
        %v5368 = vunpack.c.l.s4 1983009808
        %v5369 = vunpack.c.0.s8 %v5368
        %v5370 = vlaneseq
        %v5371 = vshrl.u32 %v5370, 7
        %v5372 = vsub.s32 %v5369, %v5371
        %v5373 = vrot.slane %v5365, %v5372
        %v5375 = vunpack.c.l.s4 1983009808
        %v5376 = vunpack.c.0.s8 %v5375
        %v5377 = vlaneseq
        %v5378 = vshrl.u32 %v5377, 7
        %v5379 = vsub.s32 %v5376, %v5378
        %v5380 = vrot.slane %v5366, %v5379
        %v5381 = vcombine.low %v794, %v864
        %v5382 = vcombine.high %v794, %v864
        %v5384 = vunpack.c.l.s4 1983009808
        %v5385 = vunpack.c.0.s8 %v5384
        %v5386 = vlaneseq
        %v5387 = vshrl.u32 %v5386, 7
        %v5388 = vsub.s32 %v5385, %v5387
        %v5389 = vrot.slane %v5381, %v5388
        %v5391 = vunpack.c.l.s4 1983009808
        %v5392 = vunpack.c.0.s8 %v5391
        %v5393 = vlaneseq
        %v5394 = vshrl.u32 %v5393, 7
        %v5395 = vsub.s32 %v5392, %v5394
        %v5396 = vrot.slane %v5382, %v5395
        %v5397 = vcombine.low %v899, %v969
        %v5398 = vcombine.high %v899, %v969
        %v5400 = vunpack.c.l.s4 1983009808
        %v5401 = vunpack.c.0.s8 %v5400
        %v5402 = vlaneseq
        %v5403 = vshrl.u32 %v5402, 7
        %v5404 = vsub.s32 %v5401, %v5403
        %v5405 = vrot.slane %v5397, %v5404
        %v5407 = vunpack.c.l.s4 1983009808
        %v5408 = vunpack.c.0.s8 %v5407
        %v5409 = vlaneseq
        %v5410 = vshrl.u32 %v5409, 7
        %v5411 = vsub.s32 %v5408, %v5410
        %v5412 = vrot.slane %v5398, %v5411
        %v5413 = vcombine.low %v934, %v1004
        %v5414 = vcombine.high %v934, %v1004
        %v5416 = vunpack.c.l.s4 1983009808
        %v5417 = vunpack.c.0.s8 %v5416
        %v5418 = vlaneseq
        %v5419 = vshrl.u32 %v5418, 7
        %v5420 = vsub.s32 %v5417, %v5419
        %v5421 = vrot.slane %v5413, %v5420
        %v5423 = vunpack.c.l.s4 1983009808
        %v5424 = vunpack.c.0.s8 %v5423
        %v5425 = vlaneseq
        %v5426 = vshrl.u32 %v5425, 7
        %v5427 = vsub.s32 %v5424, %v5426
        %v5428 = vrot.slane %v5414, %v5427
        %v5429 = vcombine.low %v5373, %v5389
        %v5430 = vcombine.high %v5373, %v5389
        %v5432 = vunpack.c.l.s4 1934713408
        %v5433 = vunpack.c.0.s8 %v5432
        %v5434 = vlaneseq
        %v5435 = vshrl.u32 %v5434, 7
        %v5436 = vsub.s32 %v5433, %v5435
        %v5437 = vrot.slane %v5429, %v5436
        %v5439 = vunpack.c.l.s4 1934713408
        %v5440 = vunpack.c.0.s8 %v5439
        %v5441 = vlaneseq
        %v5442 = vshrl.u32 %v5441, 7
        %v5443 = vsub.s32 %v5440, %v5442
        %v5444 = vrot.slane %v5430, %v5443
        %v5445 = vcombine.low %v5380, %v5396
        %v5446 = vcombine.high %v5380, %v5396
        %v5448 = vunpack.c.l.s4 1934713408
        %v5449 = vunpack.c.0.s8 %v5448
        %v5450 = vlaneseq
        %v5451 = vshrl.u32 %v5450, 7
        %v5452 = vsub.s32 %v5449, %v5451
        %v5453 = vrot.slane %v5445, %v5452
        %v5455 = vunpack.c.l.s4 1934713408
        %v5456 = vunpack.c.0.s8 %v5455
        %v5457 = vlaneseq
        %v5458 = vshrl.u32 %v5457, 7
        %v5459 = vsub.s32 %v5456, %v5458
        %v5460 = vrot.slane %v5446, %v5459
        %v5461 = vcombine.low %v5405, %v5421
        %v5462 = vcombine.high %v5405, %v5421
        %v5464 = vunpack.c.l.s4 1934713408
        %v5465 = vunpack.c.0.s8 %v5464
        %v5466 = vlaneseq
        %v5467 = vshrl.u32 %v5466, 7
        %v5468 = vsub.s32 %v5465, %v5467
        %v5469 = vrot.slane %v5461, %v5468
        %v5471 = vunpack.c.l.s4 1934713408
        %v5472 = vunpack.c.0.s8 %v5471
        %v5473 = vlaneseq
        %v5474 = vshrl.u32 %v5473, 7
        %v5475 = vsub.s32 %v5472, %v5474
        %v5476 = vrot.slane %v5462, %v5475
        %v5477 = vcombine.low %v5412, %v5428
        %v5478 = vcombine.high %v5412, %v5428
        %v5480 = vunpack.c.l.s4 1934713408
        %v5481 = vunpack.c.0.s8 %v5480
        %v5482 = vlaneseq
        %v5483 = vshrl.u32 %v5482, 7
        %v5484 = vsub.s32 %v5481, %v5483
        %v5485 = vrot.slane %v5477, %v5484
        %v5487 = vunpack.c.l.s4 1934713408
        %v5488 = vunpack.c.0.s8 %v5487
        %v5489 = vlaneseq
        %v5490 = vshrl.u32 %v5489, 7
        %v5491 = vsub.s32 %v5488, %v5490
        %v5492 = vrot.slane %v5478, %v5491
        %v5493 = vcombine.low %v5437, %v5469
        %v5494 = vcombine.high %v5437, %v5469
        %v5495 = vcombine.low %v5444, %v5476
        %v5496 = vcombine.high %v5444, %v5476
        %v5497 = vcombine.low %v5453, %v5485
        %v5498 = vcombine.high %v5453, %v5485
        %v5499 = vcombine.low %v5460, %v5492
        %v5500 = vcombine.high %v5460, %v5492
        %v5501 = vcombine.low %v1039, %v1109
        %v5502 = vcombine.high %v1039, %v1109
        %v5504 = vunpack.c.l.s4 1983009808
        %v5505 = vunpack.c.0.s8 %v5504
        %v5506 = vlaneseq
        %v5507 = vshrl.u32 %v5506, 7
        %v5508 = vsub.s32 %v5505, %v5507
        %v5509 = vrot.slane %v5501, %v5508
        %v5511 = vunpack.c.l.s4 1983009808
        %v5512 = vunpack.c.0.s8 %v5511
        %v5513 = vlaneseq
        %v5514 = vshrl.u32 %v5513, 7
        %v5515 = vsub.s32 %v5512, %v5514
        %v5516 = vrot.slane %v5502, %v5515
        %v5517 = vcombine.low %v1074, %v1144
        %v5518 = vcombine.high %v1074, %v1144
        %v5520 = vunpack.c.l.s4 1983009808
        %v5521 = vunpack.c.0.s8 %v5520
        %v5522 = vlaneseq
        %v5523 = vshrl.u32 %v5522, 7
        %v5524 = vsub.s32 %v5521, %v5523
        %v5525 = vrot.slane %v5517, %v5524
        %v5527 = vunpack.c.l.s4 1983009808
        %v5528 = vunpack.c.0.s8 %v5527
        %v5529 = vlaneseq
        %v5530 = vshrl.u32 %v5529, 7
        %v5531 = vsub.s32 %v5528, %v5530
        %v5532 = vrot.slane %v5518, %v5531
        %v5533 = vcombine.low %v1179, %v1249
        %v5534 = vcombine.high %v1179, %v1249
        %v5536 = vunpack.c.l.s4 1983009808
        %v5537 = vunpack.c.0.s8 %v5536
        %v5538 = vlaneseq
        %v5539 = vshrl.u32 %v5538, 7
        %v5540 = vsub.s32 %v5537, %v5539
        %v5541 = vrot.slane %v5533, %v5540
        %v5543 = vunpack.c.l.s4 1983009808
        %v5544 = vunpack.c.0.s8 %v5543
        %v5545 = vlaneseq
        %v5546 = vshrl.u32 %v5545, 7
        %v5547 = vsub.s32 %v5544, %v5546
        %v5548 = vrot.slane %v5534, %v5547
        %v5549 = vcombine.low %v1214, %v1284
        %v5550 = vcombine.high %v1214, %v1284
        %v5552 = vunpack.c.l.s4 1983009808
        %v5553 = vunpack.c.0.s8 %v5552
        %v5554 = vlaneseq
        %v5555 = vshrl.u32 %v5554, 7
        %v5556 = vsub.s32 %v5553, %v5555
        %v5557 = vrot.slane %v5549, %v5556
        %v5559 = vunpack.c.l.s4 1983009808
        %v5560 = vunpack.c.0.s8 %v5559
        %v5561 = vlaneseq
        %v5562 = vshrl.u32 %v5561, 7
        %v5563 = vsub.s32 %v5560, %v5562
        %v5564 = vrot.slane %v5550, %v5563
        %v5565 = vcombine.low %v5509, %v5525
        %v5566 = vcombine.high %v5509, %v5525
        %v5568 = vunpack.c.l.s4 1934713408
        %v5569 = vunpack.c.0.s8 %v5568
        %v5570 = vlaneseq
        %v5571 = vshrl.u32 %v5570, 7
        %v5572 = vsub.s32 %v5569, %v5571
        %v5573 = vrot.slane %v5565, %v5572
        %v5575 = vunpack.c.l.s4 1934713408
        %v5576 = vunpack.c.0.s8 %v5575
        %v5577 = vlaneseq
        %v5578 = vshrl.u32 %v5577, 7
        %v5579 = vsub.s32 %v5576, %v5578
        %v5580 = vrot.slane %v5566, %v5579
        %v5581 = vcombine.low %v5516, %v5532
        %v5582 = vcombine.high %v5516, %v5532
        %v5584 = vunpack.c.l.s4 1934713408
        %v5585 = vunpack.c.0.s8 %v5584
        %v5586 = vlaneseq
        %v5587 = vshrl.u32 %v5586, 7
        %v5588 = vsub.s32 %v5585, %v5587
        %v5589 = vrot.slane %v5581, %v5588
        %v5591 = vunpack.c.l.s4 1934713408
        %v5592 = vunpack.c.0.s8 %v5591
        %v5593 = vlaneseq
        %v5594 = vshrl.u32 %v5593, 7
        %v5595 = vsub.s32 %v5592, %v5594
        %v5596 = vrot.slane %v5582, %v5595
        %v5597 = vcombine.low %v5541, %v5557
        %v5598 = vcombine.high %v5541, %v5557
        %v5600 = vunpack.c.l.s4 1934713408
        %v5601 = vunpack.c.0.s8 %v5600
        %v5602 = vlaneseq
        %v5603 = vshrl.u32 %v5602, 7
        %v5604 = vsub.s32 %v5601, %v5603
        %v5605 = vrot.slane %v5597, %v5604
        %v5607 = vunpack.c.l.s4 1934713408
        %v5608 = vunpack.c.0.s8 %v5607
        %v5609 = vlaneseq
        %v5610 = vshrl.u32 %v5609, 7
        %v5611 = vsub.s32 %v5608, %v5610
        %v5612 = vrot.slane %v5598, %v5611
        %v5613 = vcombine.low %v5548, %v5564
        %v5614 = vcombine.high %v5548, %v5564
        %v5616 = vunpack.c.l.s4 1934713408
        %v5617 = vunpack.c.0.s8 %v5616
        %v5618 = vlaneseq
        %v5619 = vshrl.u32 %v5618, 7
        %v5620 = vsub.s32 %v5617, %v5619
        %v5621 = vrot.slane %v5613, %v5620
        %v5623 = vunpack.c.l.s4 1934713408
        %v5624 = vunpack.c.0.s8 %v5623
        %v5625 = vlaneseq
        %v5626 = vshrl.u32 %v5625, 7
        %v5627 = vsub.s32 %v5624, %v5626
        %v5628 = vrot.slane %v5614, %v5627
        %v5629 = vcombine.low %v5573, %v5605
        %v5630 = vcombine.high %v5573, %v5605
        %v5631 = vcombine.low %v5580, %v5612
        %v5632 = vcombine.high %v5580, %v5612
        %v5633 = vcombine.low %v5589, %v5621
        %v5634 = vcombine.high %v5589, %v5621
        %v5635 = vcombine.low %v5596, %v5628
        %v5636 = vcombine.high %v5596, %v5628
        %5641 = vrot.lane.b32.xlu0 %v1414, 2
        %v5642 = vpop.permute.xlu0 %5641
        %5643 = vrot.lane.b32.xlu0 %v1550, 2
        %v5644 = vpop.permute.xlu0 %5643
        %5645 = vrot.lane.b32.xlu0 %v1686, 2
        %v5646 = vpop.permute.xlu0 %5645
        %5647 = vrot.lane.b32.xlu0 %v1822, 2
        %v5648 = vpop.permute.xlu0 %5647
        %5657 = vrot.lane.b32.xlu0 %v1415, 4
        %v5658 = vpop.permute.xlu0 %5657
        %5659 = vrot.lane.b32.xlu0 %v1551, 4
        %v5660 = vpop.permute.xlu0 %5659
        %5661 = vrot.lane.b32.xlu0 %v1687, 4
        %v5662 = vpop.permute.xlu0 %5661
        %5663 = vrot.lane.b32.xlu0 %v1823, 4
        %v5664 = vpop.permute.xlu0 %5663
        %5673 = vrot.lane.b32.xlu0 %v1416, 6
        %v5674 = vpop.permute.xlu0 %5673
        %5675 = vrot.lane.b32.xlu0 %v1552, 6
        %v5676 = vpop.permute.xlu0 %5675
        %5677 = vrot.lane.b32.xlu0 %v1688, 6
        %v5678 = vpop.permute.xlu0 %5677
        %5679 = vrot.lane.b32.xlu0 %v1824, 6
        %v5680 = vpop.permute.xlu0 %5679
        %5689 = vrot.lane.b32.xlu0 %v1417, 8
        %v5690 = vpop.permute.xlu0 %5689
        %5691 = vrot.lane.b32.xlu0 %v1553, 8
        %v5692 = vpop.permute.xlu0 %5691
        %5693 = vrot.lane.b32.xlu0 %v1689, 8
        %v5694 = vpop.permute.xlu0 %5693
        %5695 = vrot.lane.b32.xlu0 %v1825, 8
        %v5696 = vpop.permute.xlu0 %5695
        %5705 = vrot.lane.b32.xlu0 %v1418, 10
        %v5706 = vpop.permute.xlu0 %5705
        %5707 = vrot.lane.b32.xlu0 %v1554, 10
        %v5708 = vpop.permute.xlu0 %5707
        %5709 = vrot.lane.b32.xlu0 %v1690, 10
        %v5710 = vpop.permute.xlu0 %5709
        %5711 = vrot.lane.b32.xlu0 %v1826, 10
        %v5712 = vpop.permute.xlu0 %5711
        %5721 = vrot.lane.b32.xlu0 %v1419, 12
        %v5722 = vpop.permute.xlu0 %5721
        %5723 = vrot.lane.b32.xlu0 %v1555, 12
        %v5724 = vpop.permute.xlu0 %5723
        %5725 = vrot.lane.b32.xlu0 %v1691, 12
        %v5726 = vpop.permute.xlu0 %5725
        %5727 = vrot.lane.b32.xlu0 %v1827, 12
        %v5728 = vpop.permute.xlu0 %5727
        %5737 = vrot.lane.b32.xlu0 %v1420, 14
        %v5738 = vpop.permute.xlu0 %5737
        %5739 = vrot.lane.b32.xlu0 %v1556, 14
        %v5740 = vpop.permute.xlu0 %5739
        %5741 = vrot.lane.b32.xlu0 %v1692, 14
        %v5742 = vpop.permute.xlu0 %5741
        %5743 = vrot.lane.b32.xlu0 %v1828, 14
        %v5744 = vpop.permute.xlu0 %5743
        %5753 = vrot.lane.b32.xlu0 %v1957, 16
        %v5754 = vpop.permute.xlu0 %5753
        %5755 = vrot.lane.b32.xlu0 %v2093, 16
        %v5756 = vpop.permute.xlu0 %5755
        %5757 = vrot.lane.b32.xlu0 %v2229, 16
        %v5758 = vpop.permute.xlu0 %5757
        %5759 = vrot.lane.b32.xlu0 %v2365, 16
        %v5760 = vpop.permute.xlu0 %5759
        %5769 = vrot.lane.b32.xlu0 %v1958, 18
        %v5770 = vpop.permute.xlu0 %5769
        %5771 = vrot.lane.b32.xlu0 %v2094, 18
        %v5772 = vpop.permute.xlu0 %5771
        %5773 = vrot.lane.b32.xlu0 %v2230, 18
        %v5774 = vpop.permute.xlu0 %5773
        %5775 = vrot.lane.b32.xlu0 %v2366, 18
        %v5776 = vpop.permute.xlu0 %5775
        %5785 = vrot.lane.b32.xlu0 %v1959, 20
        %v5786 = vpop.permute.xlu0 %5785
        %5787 = vrot.lane.b32.xlu0 %v2095, 20
        %v5788 = vpop.permute.xlu0 %5787
        %5789 = vrot.lane.b32.xlu0 %v2231, 20
        %v5790 = vpop.permute.xlu0 %5789
        %5791 = vrot.lane.b32.xlu0 %v2367, 20
        %v5792 = vpop.permute.xlu0 %5791
        %5801 = vrot.lane.b32.xlu0 %v1960, 22
        %v5802 = vpop.permute.xlu0 %5801
        %5803 = vrot.lane.b32.xlu0 %v2096, 22
        %v5804 = vpop.permute.xlu0 %5803
        %5805 = vrot.lane.b32.xlu0 %v2232, 22
        %v5806 = vpop.permute.xlu0 %5805
        %5807 = vrot.lane.b32.xlu0 %v2368, 22
        %v5808 = vpop.permute.xlu0 %5807
        %5817 = vrot.lane.b32.xlu0 %v1961, 24
        %v5818 = vpop.permute.xlu0 %5817
        %5819 = vrot.lane.b32.xlu0 %v2097, 24
        %v5820 = vpop.permute.xlu0 %5819
        %5821 = vrot.lane.b32.xlu0 %v2233, 24
        %v5822 = vpop.permute.xlu0 %5821
        %5823 = vrot.lane.b32.xlu0 %v2369, 24
        %v5824 = vpop.permute.xlu0 %5823
        %5833 = vrot.lane.b32.xlu0 %v1962, 26
        %v5834 = vpop.permute.xlu0 %5833
        %5835 = vrot.lane.b32.xlu0 %v2098, 26
        %v5836 = vpop.permute.xlu0 %5835
        %5837 = vrot.lane.b32.xlu0 %v2234, 26
        %v5838 = vpop.permute.xlu0 %5837
        %5839 = vrot.lane.b32.xlu0 %v2370, 26
        %v5840 = vpop.permute.xlu0 %5839
        %5849 = vrot.lane.b32.xlu0 %v1963, 28
        %v5850 = vpop.permute.xlu0 %5849
        %5851 = vrot.lane.b32.xlu0 %v2099, 28
        %v5852 = vpop.permute.xlu0 %5851
        %5853 = vrot.lane.b32.xlu0 %v2235, 28
        %v5854 = vpop.permute.xlu0 %5853
        %5855 = vrot.lane.b32.xlu0 %v2371, 28
        %v5856 = vpop.permute.xlu0 %5855
        %5865 = vrot.lane.b32.xlu0 %v1964, 30
        %v5866 = vpop.permute.xlu0 %5865
        %5867 = vrot.lane.b32.xlu0 %v2100, 30
        %v5868 = vpop.permute.xlu0 %5867
        %5869 = vrot.lane.b32.xlu0 %v2236, 30
        %v5870 = vpop.permute.xlu0 %5869
        %5871 = vrot.lane.b32.xlu0 %v2372, 30
        %v5872 = vpop.permute.xlu0 %5871
        %5881 = vrot.lane.b32.xlu0 %v2501, 32
        %v5882 = vpop.permute.xlu0 %5881
        %5883 = vrot.lane.b32.xlu0 %v2637, 32
        %v5884 = vpop.permute.xlu0 %5883
        %5885 = vrot.lane.b32.xlu0 %v2773, 32
        %v5886 = vpop.permute.xlu0 %5885
        %5887 = vrot.lane.b32.xlu0 %v2909, 32
        %v5888 = vpop.permute.xlu0 %5887
        %5897 = vrot.lane.b32.xlu0 %v2502, 34
        %v5898 = vpop.permute.xlu0 %5897
        %5899 = vrot.lane.b32.xlu0 %v2638, 34
        %v5900 = vpop.permute.xlu0 %5899
        %5901 = vrot.lane.b32.xlu0 %v2774, 34
        %v5902 = vpop.permute.xlu0 %5901
        %5903 = vrot.lane.b32.xlu0 %v2910, 34
        %v5904 = vpop.permute.xlu0 %5903
        %5913 = vrot.lane.b32.xlu0 %v2503, 36
        %v5914 = vpop.permute.xlu0 %5913
        %5915 = vrot.lane.b32.xlu0 %v2639, 36
        %v5916 = vpop.permute.xlu0 %5915
        %5917 = vrot.lane.b32.xlu0 %v2775, 36
        %v5918 = vpop.permute.xlu0 %5917
        %5919 = vrot.lane.b32.xlu0 %v2911, 36
        %v5920 = vpop.permute.xlu0 %5919
        %5929 = vrot.lane.b32.xlu0 %v2504, 38
        %v5930 = vpop.permute.xlu0 %5929
        %5931 = vrot.lane.b32.xlu0 %v2640, 38
        %v5932 = vpop.permute.xlu0 %5931
        %5933 = vrot.lane.b32.xlu0 %v2776, 38
        %v5934 = vpop.permute.xlu0 %5933
        %5935 = vrot.lane.b32.xlu0 %v2912, 38
        %v5936 = vpop.permute.xlu0 %5935
        %5945 = vrot.lane.b32.xlu0 %v2505, 40
        %v5946 = vpop.permute.xlu0 %5945
        %5947 = vrot.lane.b32.xlu0 %v2641, 40
        %v5948 = vpop.permute.xlu0 %5947
        %5949 = vrot.lane.b32.xlu0 %v2777, 40
        %v5950 = vpop.permute.xlu0 %5949
        %5951 = vrot.lane.b32.xlu0 %v2913, 40
        %v5952 = vpop.permute.xlu0 %5951
        %5961 = vrot.lane.b32.xlu0 %v2506, 42
        %v5962 = vpop.permute.xlu0 %5961
        %5963 = vrot.lane.b32.xlu0 %v2642, 42
        %v5964 = vpop.permute.xlu0 %5963
        %5965 = vrot.lane.b32.xlu0 %v2778, 42
        %v5966 = vpop.permute.xlu0 %5965
        %5967 = vrot.lane.b32.xlu0 %v2914, 42
        %v5968 = vpop.permute.xlu0 %5967
        %5977 = vrot.lane.b32.xlu0 %v2507, 44
        %v5978 = vpop.permute.xlu0 %5977
        %5979 = vrot.lane.b32.xlu0 %v2643, 44
        %v5980 = vpop.permute.xlu0 %5979
        %5981 = vrot.lane.b32.xlu0 %v2779, 44
        %v5982 = vpop.permute.xlu0 %5981
        %5983 = vrot.lane.b32.xlu0 %v2915, 44
        %v5984 = vpop.permute.xlu0 %5983
        %5993 = vrot.lane.b32.xlu0 %v2508, 46
        %v5994 = vpop.permute.xlu0 %5993
        %5995 = vrot.lane.b32.xlu0 %v2644, 46
        %v5996 = vpop.permute.xlu0 %5995
        %5997 = vrot.lane.b32.xlu0 %v2780, 46
        %v5998 = vpop.permute.xlu0 %5997
        %5999 = vrot.lane.b32.xlu0 %v2916, 46
        %v6000 = vpop.permute.xlu0 %5999
        %6009 = vrot.lane.b32.xlu0 %v3045, 48
        %v6010 = vpop.permute.xlu0 %6009
        %6011 = vrot.lane.b32.xlu0 %v3181, 48
        %v6012 = vpop.permute.xlu0 %6011
        %6013 = vrot.lane.b32.xlu0 %v3317, 48
        %v6014 = vpop.permute.xlu0 %6013
        %6015 = vrot.lane.b32.xlu0 %v3453, 48
        %v6016 = vpop.permute.xlu0 %6015
        %6025 = vrot.lane.b32.xlu0 %v3046, 50
        %v6026 = vpop.permute.xlu0 %6025
        %6027 = vrot.lane.b32.xlu0 %v3182, 50
        %v6028 = vpop.permute.xlu0 %6027
        %6029 = vrot.lane.b32.xlu0 %v3318, 50
        %v6030 = vpop.permute.xlu0 %6029
        %6031 = vrot.lane.b32.xlu0 %v3454, 50
        %v6032 = vpop.permute.xlu0 %6031
        %6041 = vrot.lane.b32.xlu0 %v3047, 52
        %v6042 = vpop.permute.xlu0 %6041
        %6043 = vrot.lane.b32.xlu0 %v3183, 52
        %v6044 = vpop.permute.xlu0 %6043
        %6045 = vrot.lane.b32.xlu0 %v3319, 52
        %v6046 = vpop.permute.xlu0 %6045
        %6047 = vrot.lane.b32.xlu0 %v3455, 52
        %v6048 = vpop.permute.xlu0 %6047
        %6057 = vrot.lane.b32.xlu0 %v3048, 54
        %v6058 = vpop.permute.xlu0 %6057
        %6059 = vrot.lane.b32.xlu0 %v3184, 54
        %v6060 = vpop.permute.xlu0 %6059
        %6061 = vrot.lane.b32.xlu0 %v3320, 54
        %v6062 = vpop.permute.xlu0 %6061
        %6063 = vrot.lane.b32.xlu0 %v3456, 54
        %v6064 = vpop.permute.xlu0 %6063
        %6073 = vrot.lane.b32.xlu0 %v3049, 56
        %v6074 = vpop.permute.xlu0 %6073
        %6075 = vrot.lane.b32.xlu0 %v3185, 56
        %v6076 = vpop.permute.xlu0 %6075
        %6077 = vrot.lane.b32.xlu0 %v3321, 56
        %v6078 = vpop.permute.xlu0 %6077
        %6079 = vrot.lane.b32.xlu0 %v3457, 56
        %v6080 = vpop.permute.xlu0 %6079
        %6089 = vrot.lane.b32.xlu0 %v3050, 58
        %v6090 = vpop.permute.xlu0 %6089
        %6091 = vrot.lane.b32.xlu0 %v3186, 58
        %v6092 = vpop.permute.xlu0 %6091
        %6093 = vrot.lane.b32.xlu0 %v3322, 58
        %v6094 = vpop.permute.xlu0 %6093
        %6095 = vrot.lane.b32.xlu0 %v3458, 58
        %v6096 = vpop.permute.xlu0 %6095
        %6105 = vrot.lane.b32.xlu0 %v3051, 60
        %v6106 = vpop.permute.xlu0 %6105
        %6107 = vrot.lane.b32.xlu0 %v3187, 60
        %v6108 = vpop.permute.xlu0 %6107
        %6109 = vrot.lane.b32.xlu0 %v3323, 60
        %v6110 = vpop.permute.xlu0 %6109
        %6111 = vrot.lane.b32.xlu0 %v3459, 60
        %v6112 = vpop.permute.xlu0 %6111
        %6121 = vrot.lane.b32.xlu0 %v3052, 62
        %v6122 = vpop.permute.xlu0 %6121
        %6123 = vrot.lane.b32.xlu0 %v3188, 62
        %v6124 = vpop.permute.xlu0 %6123
        %6125 = vrot.lane.b32.xlu0 %v3324, 62
        %v6126 = vpop.permute.xlu0 %6125
        %6127 = vrot.lane.b32.xlu0 %v3460, 62
        %v6128 = vpop.permute.xlu0 %6127
        %6137 = vrot.lane.b32.xlu0 %v3589, 64
        %v6138 = vpop.permute.xlu0 %6137
        %6139 = vrot.lane.b32.xlu0 %v3725, 64
        %v6140 = vpop.permute.xlu0 %6139
        %6141 = vrot.lane.b32.xlu0 %v3861, 64
        %v6142 = vpop.permute.xlu0 %6141
        %6143 = vrot.lane.b32.xlu0 %v3997, 64
        %v6144 = vpop.permute.xlu0 %6143
        %6153 = vrot.lane.b32.xlu0 %v3590, 66
        %v6154 = vpop.permute.xlu0 %6153
        %6155 = vrot.lane.b32.xlu0 %v3726, 66
        %v6156 = vpop.permute.xlu0 %6155
        %6157 = vrot.lane.b32.xlu0 %v3862, 66
        %v6158 = vpop.permute.xlu0 %6157
        %6159 = vrot.lane.b32.xlu0 %v3998, 66
        %v6160 = vpop.permute.xlu0 %6159
        %6169 = vrot.lane.b32.xlu0 %v3591, 68
        %v6170 = vpop.permute.xlu0 %6169
        %6171 = vrot.lane.b32.xlu0 %v3727, 68
        %v6172 = vpop.permute.xlu0 %6171
        %6173 = vrot.lane.b32.xlu0 %v3863, 68
        %v6174 = vpop.permute.xlu0 %6173
        %6175 = vrot.lane.b32.xlu0 %v3999, 68
        %v6176 = vpop.permute.xlu0 %6175
        %6185 = vrot.lane.b32.xlu0 %v3592, 70
        %v6186 = vpop.permute.xlu0 %6185
        %6187 = vrot.lane.b32.xlu0 %v3728, 70
        %v6188 = vpop.permute.xlu0 %6187
        %6189 = vrot.lane.b32.xlu0 %v3864, 70
        %v6190 = vpop.permute.xlu0 %6189
        %6191 = vrot.lane.b32.xlu0 %v4000, 70
        %v6192 = vpop.permute.xlu0 %6191
        %6201 = vrot.lane.b32.xlu0 %v3593, 72
        %v6202 = vpop.permute.xlu0 %6201
        %6203 = vrot.lane.b32.xlu0 %v3729, 72
        %v6204 = vpop.permute.xlu0 %6203
        %6205 = vrot.lane.b32.xlu0 %v3865, 72
        %v6206 = vpop.permute.xlu0 %6205
        %6207 = vrot.lane.b32.xlu0 %v4001, 72
        %v6208 = vpop.permute.xlu0 %6207
        %6217 = vrot.lane.b32.xlu0 %v3594, 74
        %v6218 = vpop.permute.xlu0 %6217
        %6219 = vrot.lane.b32.xlu0 %v3730, 74
        %v6220 = vpop.permute.xlu0 %6219
        %6221 = vrot.lane.b32.xlu0 %v3866, 74
        %v6222 = vpop.permute.xlu0 %6221
        %6223 = vrot.lane.b32.xlu0 %v4002, 74
        %v6224 = vpop.permute.xlu0 %6223
        %6233 = vrot.lane.b32.xlu0 %v3595, 76
        %v6234 = vpop.permute.xlu0 %6233
        %6235 = vrot.lane.b32.xlu0 %v3731, 76
        %v6236 = vpop.permute.xlu0 %6235
        %6237 = vrot.lane.b32.xlu0 %v3867, 76
        %v6238 = vpop.permute.xlu0 %6237
        %6239 = vrot.lane.b32.xlu0 %v4003, 76
        %v6240 = vpop.permute.xlu0 %6239
        %6249 = vrot.lane.b32.xlu0 %v3596, 78
        %v6250 = vpop.permute.xlu0 %6249
        %6251 = vrot.lane.b32.xlu0 %v3732, 78
        %v6252 = vpop.permute.xlu0 %6251
        %6253 = vrot.lane.b32.xlu0 %v3868, 78
        %v6254 = vpop.permute.xlu0 %6253
        %6255 = vrot.lane.b32.xlu0 %v4004, 78
        %v6256 = vpop.permute.xlu0 %6255
        %6265 = vrot.lane.b32.xlu0 %v4133, 80
        %v6266 = vpop.permute.xlu0 %6265
        %6267 = vrot.lane.b32.xlu0 %v4269, 80
        %v6268 = vpop.permute.xlu0 %6267
        %6269 = vrot.lane.b32.xlu0 %v4405, 80
        %v6270 = vpop.permute.xlu0 %6269
        %6271 = vrot.lane.b32.xlu0 %v4541, 80
        %v6272 = vpop.permute.xlu0 %6271
        %6281 = vrot.lane.b32.xlu0 %v4134, 82
        %v6282 = vpop.permute.xlu0 %6281
        %6283 = vrot.lane.b32.xlu0 %v4270, 82
        %v6284 = vpop.permute.xlu0 %6283
        %6285 = vrot.lane.b32.xlu0 %v4406, 82
        %v6286 = vpop.permute.xlu0 %6285
        %6287 = vrot.lane.b32.xlu0 %v4542, 82
        %v6288 = vpop.permute.xlu0 %6287
        %6297 = vrot.lane.b32.xlu0 %v4135, 84
        %v6298 = vpop.permute.xlu0 %6297
        %6299 = vrot.lane.b32.xlu0 %v4271, 84
        %v6300 = vpop.permute.xlu0 %6299
        %6301 = vrot.lane.b32.xlu0 %v4407, 84
        %v6302 = vpop.permute.xlu0 %6301
        %6303 = vrot.lane.b32.xlu0 %v4543, 84
        %v6304 = vpop.permute.xlu0 %6303
        %6313 = vrot.lane.b32.xlu0 %v4136, 86
        %v6314 = vpop.permute.xlu0 %6313
        %6315 = vrot.lane.b32.xlu0 %v4272, 86
        %v6316 = vpop.permute.xlu0 %6315
        %6317 = vrot.lane.b32.xlu0 %v4408, 86
        %v6318 = vpop.permute.xlu0 %6317
        %6319 = vrot.lane.b32.xlu0 %v4544, 86
        %v6320 = vpop.permute.xlu0 %6319
        %6329 = vrot.lane.b32.xlu0 %v4137, 88
        %v6330 = vpop.permute.xlu0 %6329
        %6331 = vrot.lane.b32.xlu0 %v4273, 88
        %v6332 = vpop.permute.xlu0 %6331
        %6333 = vrot.lane.b32.xlu0 %v4409, 88
        %v6334 = vpop.permute.xlu0 %6333
        %6335 = vrot.lane.b32.xlu0 %v4545, 88
        %v6336 = vpop.permute.xlu0 %6335
        %6345 = vrot.lane.b32.xlu0 %v4138, 90
        %v6346 = vpop.permute.xlu0 %6345
        %6347 = vrot.lane.b32.xlu0 %v4274, 90
        %v6348 = vpop.permute.xlu0 %6347
        %6349 = vrot.lane.b32.xlu0 %v4410, 90
        %v6350 = vpop.permute.xlu0 %6349
        %6351 = vrot.lane.b32.xlu0 %v4546, 90
        %v6352 = vpop.permute.xlu0 %6351
        %6361 = vrot.lane.b32.xlu0 %v4139, 92
        %v6362 = vpop.permute.xlu0 %6361
        %6363 = vrot.lane.b32.xlu0 %v4275, 92
        %v6364 = vpop.permute.xlu0 %6363
        %6365 = vrot.lane.b32.xlu0 %v4411, 92
        %v6366 = vpop.permute.xlu0 %6365
        %6367 = vrot.lane.b32.xlu0 %v4547, 92
        %v6368 = vpop.permute.xlu0 %6367
        %6377 = vrot.lane.b32.xlu0 %v4140, 94
        %v6378 = vpop.permute.xlu0 %6377
        %6379 = vrot.lane.b32.xlu0 %v4276, 94
        %v6380 = vpop.permute.xlu0 %6379
        %6381 = vrot.lane.b32.xlu0 %v4412, 94
        %v6382 = vpop.permute.xlu0 %6381
        %6383 = vrot.lane.b32.xlu0 %v4548, 94
        %v6384 = vpop.permute.xlu0 %6383
        %6393 = vrot.lane.b32.xlu0 %v4677, 96
        %v6394 = vpop.permute.xlu0 %6393
        %6395 = vrot.lane.b32.xlu0 %v4813, 96
        %v6396 = vpop.permute.xlu0 %6395
        %6397 = vrot.lane.b32.xlu0 %v4949, 96
        %v6398 = vpop.permute.xlu0 %6397
        %6399 = vrot.lane.b32.xlu0 %v5085, 96
        %v6400 = vpop.permute.xlu0 %6399
        %6409 = vrot.lane.b32.xlu0 %v4678, 98
        %v6410 = vpop.permute.xlu0 %6409
        %6411 = vrot.lane.b32.xlu0 %v4814, 98
        %v6412 = vpop.permute.xlu0 %6411
        %6413 = vrot.lane.b32.xlu0 %v4950, 98
        %v6414 = vpop.permute.xlu0 %6413
        %6415 = vrot.lane.b32.xlu0 %v5086, 98
        %v6416 = vpop.permute.xlu0 %6415
        %6425 = vrot.lane.b32.xlu0 %v4679, 100
        %v6426 = vpop.permute.xlu0 %6425
        %6427 = vrot.lane.b32.xlu0 %v4815, 100
        %v6428 = vpop.permute.xlu0 %6427
        %6429 = vrot.lane.b32.xlu0 %v4951, 100
        %v6430 = vpop.permute.xlu0 %6429
        %6431 = vrot.lane.b32.xlu0 %v5087, 100
        %v6432 = vpop.permute.xlu0 %6431
        %6441 = vrot.lane.b32.xlu0 %v4680, 102
        %v6442 = vpop.permute.xlu0 %6441
        %6443 = vrot.lane.b32.xlu0 %v4816, 102
        %v6444 = vpop.permute.xlu0 %6443
        %6445 = vrot.lane.b32.xlu0 %v4952, 102
        %v6446 = vpop.permute.xlu0 %6445
        %6447 = vrot.lane.b32.xlu0 %v5088, 102
        %v6448 = vpop.permute.xlu0 %6447
        %6457 = vrot.lane.b32.xlu0 %v4681, 104
        %v6458 = vpop.permute.xlu0 %6457
        %6459 = vrot.lane.b32.xlu0 %v4817, 104
        %v6460 = vpop.permute.xlu0 %6459
        %6461 = vrot.lane.b32.xlu0 %v4953, 104
        %v6462 = vpop.permute.xlu0 %6461
        %6463 = vrot.lane.b32.xlu0 %v5089, 104
        %v6464 = vpop.permute.xlu0 %6463
        %6473 = vrot.lane.b32.xlu0 %v4682, 106
        %v6474 = vpop.permute.xlu0 %6473
        %6475 = vrot.lane.b32.xlu0 %v4818, 106
        %v6476 = vpop.permute.xlu0 %6475
        %6477 = vrot.lane.b32.xlu0 %v4954, 106
        %v6478 = vpop.permute.xlu0 %6477
        %6479 = vrot.lane.b32.xlu0 %v5090, 106
        %v6480 = vpop.permute.xlu0 %6479
        %6489 = vrot.lane.b32.xlu0 %v4683, 108
        %v6490 = vpop.permute.xlu0 %6489
        %6491 = vrot.lane.b32.xlu0 %v4819, 108
        %v6492 = vpop.permute.xlu0 %6491
        %6493 = vrot.lane.b32.xlu0 %v4955, 108
        %v6494 = vpop.permute.xlu0 %6493
        %6495 = vrot.lane.b32.xlu0 %v5091, 108
        %v6496 = vpop.permute.xlu0 %6495
        %6505 = vrot.lane.b32.xlu0 %v4684, 110
        %v6506 = vpop.permute.xlu0 %6505
        %6507 = vrot.lane.b32.xlu0 %v4820, 110
        %v6508 = vpop.permute.xlu0 %6507
        %6509 = vrot.lane.b32.xlu0 %v4956, 110
        %v6510 = vpop.permute.xlu0 %6509
        %6511 = vrot.lane.b32.xlu0 %v5092, 110
        %v6512 = vpop.permute.xlu0 %6511
        %6521 = vrot.lane.b32.xlu0 %v5221, 112
        %v6522 = vpop.permute.xlu0 %6521
        %6523 = vrot.lane.b32.xlu0 %v5357, 112
        %v6524 = vpop.permute.xlu0 %6523
        %6525 = vrot.lane.b32.xlu0 %v5493, 112
        %v6526 = vpop.permute.xlu0 %6525
        %6527 = vrot.lane.b32.xlu0 %v5629, 112
        %v6528 = vpop.permute.xlu0 %6527
        %6537 = vrot.lane.b32.xlu0 %v5222, 114
        %v6538 = vpop.permute.xlu0 %6537
        %6539 = vrot.lane.b32.xlu0 %v5358, 114
        %v6540 = vpop.permute.xlu0 %6539
        %6541 = vrot.lane.b32.xlu0 %v5494, 114
        %v6542 = vpop.permute.xlu0 %6541
        %6543 = vrot.lane.b32.xlu0 %v5630, 114
        %v6544 = vpop.permute.xlu0 %6543
        %6553 = vrot.lane.b32.xlu0 %v5223, 116
        %v6554 = vpop.permute.xlu0 %6553
        %6555 = vrot.lane.b32.xlu0 %v5359, 116
        %v6556 = vpop.permute.xlu0 %6555
        %6557 = vrot.lane.b32.xlu0 %v5495, 116
        %v6558 = vpop.permute.xlu0 %6557
        %6559 = vrot.lane.b32.xlu0 %v5631, 116
        %v6560 = vpop.permute.xlu0 %6559
        %6569 = vrot.lane.b32.xlu0 %v5224, 118
        %v6570 = vpop.permute.xlu0 %6569
        %6571 = vrot.lane.b32.xlu0 %v5360, 118
        %v6572 = vpop.permute.xlu0 %6571
        %6573 = vrot.lane.b32.xlu0 %v5496, 118
        %v6574 = vpop.permute.xlu0 %6573
        %6575 = vrot.lane.b32.xlu0 %v5632, 118
        %v6576 = vpop.permute.xlu0 %6575
        %6585 = vrot.lane.b32.xlu0 %v5225, 120
        %v6586 = vpop.permute.xlu0 %6585
        %6587 = vrot.lane.b32.xlu0 %v5361, 120
        %v6588 = vpop.permute.xlu0 %6587
        %6589 = vrot.lane.b32.xlu0 %v5497, 120
        %v6590 = vpop.permute.xlu0 %6589
        %6591 = vrot.lane.b32.xlu0 %v5633, 120
        %v6592 = vpop.permute.xlu0 %6591
        %6601 = vrot.lane.b32.xlu0 %v5226, 122
        %v6602 = vpop.permute.xlu0 %6601
        %6603 = vrot.lane.b32.xlu0 %v5362, 122
        %v6604 = vpop.permute.xlu0 %6603
        %6605 = vrot.lane.b32.xlu0 %v5498, 122
        %v6606 = vpop.permute.xlu0 %6605
        %6607 = vrot.lane.b32.xlu0 %v5634, 122
        %v6608 = vpop.permute.xlu0 %6607
        %6617 = vrot.lane.b32.xlu0 %v5227, 124
        %v6618 = vpop.permute.xlu0 %6617
        %6619 = vrot.lane.b32.xlu0 %v5363, 124
        %v6620 = vpop.permute.xlu0 %6619
        %6621 = vrot.lane.b32.xlu0 %v5499, 124
        %v6622 = vpop.permute.xlu0 %6621
        %6623 = vrot.lane.b32.xlu0 %v5635, 124
        %v6624 = vpop.permute.xlu0 %6623
        %6633 = vrot.lane.b32.xlu0 %v5228, 126
        %v6634 = vpop.permute.xlu0 %6633
        %6635 = vrot.lane.b32.xlu0 %v5364, 126
        %v6636 = vpop.permute.xlu0 %6635
        %6637 = vrot.lane.b32.xlu0 %v5500, 126
        %v6638 = vpop.permute.xlu0 %6637
        %6639 = vrot.lane.b32.xlu0 %v5636, 126
        %v6640 = vpop.permute.xlu0 %6639
        %vm6645 = vcmask 15360
        %v6646 = vsel %vm6645, %v1413, %v5642
        %v6647 = vsel %vm6645, %v1549, %v5644
        %v6648 = vsel %vm6645, %v1685, %v5646
        %v6649 = vsel %vm6645, %v1821, %v5648
        %vm6650 = vcmask 31744
        %v6651 = vsel %vm6650, %v6646, %v5658
        %v6652 = vsel %vm6650, %v6647, %v5660
        %v6653 = vsel %vm6650, %v6648, %v5662
        %v6654 = vsel %vm6650, %v6649, %v5664
        %vm6655 = vcmask 48128
        %v6656 = vsel %vm6655, %v6651, %v5674
        %v6657 = vsel %vm6655, %v6652, %v5676
        %v6658 = vsel %vm6655, %v6653, %v5678
        %v6659 = vsel %vm6655, %v6654, %v5680
        %vm6660 = vcmask 64512
        %v6661 = vsel %vm6660, %v6656, %v5690
        %v6662 = vsel %vm6660, %v6657, %v5692
        %v6663 = vsel %vm6660, %v6658, %v5694
        %v6664 = vsel %vm6660, %v6659, %v5696
        %vm6665 = vcmask 80896
        %v6666 = vsel %vm6665, %v6661, %v5706
        %v6667 = vsel %vm6665, %v6662, %v5708
        %v6668 = vsel %vm6665, %v6663, %v5710
        %v6669 = vsel %vm6665, %v6664, %v5712
        %vm6670 = vcmask 97280
        %v6671 = vsel %vm6670, %v6666, %v5722
        %v6672 = vsel %vm6670, %v6667, %v5724
        %v6673 = vsel %vm6670, %v6668, %v5726
        %v6674 = vsel %vm6670, %v6669, %v5728
        %vm6675 = vcmask 113664
        %v6676 = vsel %vm6675, %v6671, %v5738
        %v6677 = vsel %vm6675, %v6672, %v5740
        %v6678 = vsel %vm6675, %v6673, %v5742
        %v6679 = vsel %vm6675, %v6674, %v5744
        %v6680 = vsel %vm150, %v6676, %v5754
        %v6681 = vsel %vm150, %v6677, %v5756
        %v6682 = vsel %vm150, %v6678, %v5758
        %v6683 = vsel %vm150, %v6679, %v5760
        %vm6684 = vcmask 146432
        %v6685 = vsel %vm6684, %v6680, %v5770
        %v6686 = vsel %vm6684, %v6681, %v5772
        %v6687 = vsel %vm6684, %v6682, %v5774
        %v6688 = vsel %vm6684, %v6683, %v5776
        %vm6689 = vcmask 162816
        %v6690 = vsel %vm6689, %v6685, %v5786
        %v6691 = vsel %vm6689, %v6686, %v5788
        %v6692 = vsel %vm6689, %v6687, %v5790
        %v6693 = vsel %vm6689, %v6688, %v5792
        %vm6694 = vcmask 179200
        %v6695 = vsel %vm6694, %v6690, %v5802
        %v6696 = vsel %vm6694, %v6691, %v5804
        %v6697 = vsel %vm6694, %v6692, %v5806
        %v6698 = vsel %vm6694, %v6693, %v5808
        %vm6699 = vcmask 195584
        %v6700 = vsel %vm6699, %v6695, %v5818
        %v6701 = vsel %vm6699, %v6696, %v5820
        %v6702 = vsel %vm6699, %v6697, %v5822
        %v6703 = vsel %vm6699, %v6698, %v5824
        %vm6704 = vcmask 211968
        %v6705 = vsel %vm6704, %v6700, %v5834
        %v6706 = vsel %vm6704, %v6701, %v5836
        %v6707 = vsel %vm6704, %v6702, %v5838
        %v6708 = vsel %vm6704, %v6703, %v5840
        %vm6709 = vcmask 228352
        %v6710 = vsel %vm6709, %v6705, %v5850
        %v6711 = vsel %vm6709, %v6706, %v5852
        %v6712 = vsel %vm6709, %v6707, %v5854
        %v6713 = vsel %vm6709, %v6708, %v5856
        %vm6714 = vcmask 244736
        %v6715 = vsel %vm6714, %v6710, %v5866
        %v6716 = vsel %vm6714, %v6711, %v5868
        %v6717 = vsel %vm6714, %v6712, %v5870
        %v6718 = vsel %vm6714, %v6713, %v5872
        %v6719 = vsel %vm155, %v6715, %v5882
        %v6720 = vsel %vm155, %v6716, %v5884
        %v6721 = vsel %vm155, %v6717, %v5886
        %v6722 = vsel %vm155, %v6718, %v5888
        %vm6723 = vcmask 277504
        %v6724 = vsel %vm6723, %v6719, %v5898
        %v6725 = vsel %vm6723, %v6720, %v5900
        %v6726 = vsel %vm6723, %v6721, %v5902
        %v6727 = vsel %vm6723, %v6722, %v5904
        %vm6728 = vcmask 293888
        %v6729 = vsel %vm6728, %v6724, %v5914
        %v6730 = vsel %vm6728, %v6725, %v5916
        %v6731 = vsel %vm6728, %v6726, %v5918
        %v6732 = vsel %vm6728, %v6727, %v5920
        %vm6733 = vcmask 310272
        %v6734 = vsel %vm6733, %v6729, %v5930
        %v6735 = vsel %vm6733, %v6730, %v5932
        %v6736 = vsel %vm6733, %v6731, %v5934
        %v6737 = vsel %vm6733, %v6732, %v5936
        %vm6738 = vcmask 326656
        %v6739 = vsel %vm6738, %v6734, %v5946
        %v6740 = vsel %vm6738, %v6735, %v5948
        %v6741 = vsel %vm6738, %v6736, %v5950
        %v6742 = vsel %vm6738, %v6737, %v5952
        %vm6743 = vcmask 343040
        %v6744 = vsel %vm6743, %v6739, %v5962
        %v6745 = vsel %vm6743, %v6740, %v5964
        %v6746 = vsel %vm6743, %v6741, %v5966
        %v6747 = vsel %vm6743, %v6742, %v5968
        %vm6748 = vcmask 359424
        %v6749 = vsel %vm6748, %v6744, %v5978
        %v6750 = vsel %vm6748, %v6745, %v5980
        %v6751 = vsel %vm6748, %v6746, %v5982
        %v6752 = vsel %vm6748, %v6747, %v5984
        %vm6753 = vcmask 375808
        %v6754 = vsel %vm6753, %v6749, %v5994
        %v6755 = vsel %vm6753, %v6750, %v5996
        %v6756 = vsel %vm6753, %v6751, %v5998
        %v6757 = vsel %vm6753, %v6752, %v6000
        %v6758 = vsel %vm160, %v6754, %v6010
        %v6759 = vsel %vm160, %v6755, %v6012
        %v6760 = vsel %vm160, %v6756, %v6014
        %v6761 = vsel %vm160, %v6757, %v6016
        %vm6762 = vcmask 408576
        %v6763 = vsel %vm6762, %v6758, %v6026
        %v6764 = vsel %vm6762, %v6759, %v6028
        %v6765 = vsel %vm6762, %v6760, %v6030
        %v6766 = vsel %vm6762, %v6761, %v6032
        %vm6767 = vcmask 424960
        %v6768 = vsel %vm6767, %v6763, %v6042
        %v6769 = vsel %vm6767, %v6764, %v6044
        %v6770 = vsel %vm6767, %v6765, %v6046
        %v6771 = vsel %vm6767, %v6766, %v6048
        %vm6772 = vcmask 441344
        %v6773 = vsel %vm6772, %v6768, %v6058
        %v6774 = vsel %vm6772, %v6769, %v6060
        %v6775 = vsel %vm6772, %v6770, %v6062
        %v6776 = vsel %vm6772, %v6771, %v6064
        %vm6777 = vcmask 457728
        %v6778 = vsel %vm6777, %v6773, %v6074
        %v6779 = vsel %vm6777, %v6774, %v6076
        %v6780 = vsel %vm6777, %v6775, %v6078
        %v6781 = vsel %vm6777, %v6776, %v6080
        %vm6782 = vcmask 474112
        %v6783 = vsel %vm6782, %v6778, %v6090
        %v6784 = vsel %vm6782, %v6779, %v6092
        %v6785 = vsel %vm6782, %v6780, %v6094
        %v6786 = vsel %vm6782, %v6781, %v6096
        %vm6787 = vcmask 490496
        %v6788 = vsel %vm6787, %v6783, %v6106
        %v6789 = vsel %vm6787, %v6784, %v6108
        %v6790 = vsel %vm6787, %v6785, %v6110
        %v6791 = vsel %vm6787, %v6786, %v6112
        %vm6792 = vcmask 506880
        %v6793 = vsel %vm6792, %v6788, %v6122
        %v6794 = vsel %vm6792, %v6789, %v6124
        %v6795 = vsel %vm6792, %v6790, %v6126
        %v6796 = vsel %vm6792, %v6791, %v6128
        %vm6797 = vcmask 523264
        %v6798 = vsel %vm6797, %v6793, %v6138
        %v6799 = vsel %vm6797, %v6794, %v6140
        %v6800 = vsel %vm6797, %v6795, %v6142
        %v6801 = vsel %vm6797, %v6796, %v6144
        %vm6802 = vcmask 539648
        %v6803 = vsel %vm6802, %v6798, %v6154
        %v6804 = vsel %vm6802, %v6799, %v6156
        %v6805 = vsel %vm6802, %v6800, %v6158
        %v6806 = vsel %vm6802, %v6801, %v6160
        %vm6807 = vcmask 556032
        %v6808 = vsel %vm6807, %v6803, %v6170
        %v6809 = vsel %vm6807, %v6804, %v6172
        %v6810 = vsel %vm6807, %v6805, %v6174
        %v6811 = vsel %vm6807, %v6806, %v6176
        %vm6812 = vcmask 572416
        %v6813 = vsel %vm6812, %v6808, %v6186
        %v6814 = vsel %vm6812, %v6809, %v6188
        %v6815 = vsel %vm6812, %v6810, %v6190
        %v6816 = vsel %vm6812, %v6811, %v6192
        %vm6817 = vcmask 588800
        %v6818 = vsel %vm6817, %v6813, %v6202
        %v6819 = vsel %vm6817, %v6814, %v6204
        %v6820 = vsel %vm6817, %v6815, %v6206
        %v6821 = vsel %vm6817, %v6816, %v6208
        %vm6822 = vcmask 605184
        %v6823 = vsel %vm6822, %v6818, %v6218
        %v6824 = vsel %vm6822, %v6819, %v6220
        %v6825 = vsel %vm6822, %v6820, %v6222
        %v6826 = vsel %vm6822, %v6821, %v6224
        %vm6827 = vcmask 621568
        %v6828 = vsel %vm6827, %v6823, %v6234
        %v6829 = vsel %vm6827, %v6824, %v6236
        %v6830 = vsel %vm6827, %v6825, %v6238
        %v6831 = vsel %vm6827, %v6826, %v6240
        %vm6832 = vcmask 637952
        %v6833 = vsel %vm6832, %v6828, %v6250
        %v6834 = vsel %vm6832, %v6829, %v6252
        %v6835 = vsel %vm6832, %v6830, %v6254
        %v6836 = vsel %vm6832, %v6831, %v6256
        %vm6837 = vcmask 654336
        %v6838 = vsel %vm6837, %v6833, %v6266
        %v6839 = vsel %vm6837, %v6834, %v6268
        %v6840 = vsel %vm6837, %v6835, %v6270
        %v6841 = vsel %vm6837, %v6836, %v6272
        %vm6842 = vcmask 670720
        %v6843 = vsel %vm6842, %v6838, %v6282
        %v6844 = vsel %vm6842, %v6839, %v6284
        %v6845 = vsel %vm6842, %v6840, %v6286
        %v6846 = vsel %vm6842, %v6841, %v6288
        %vm6847 = vcmask 687104
        %v6848 = vsel %vm6847, %v6843, %v6298
        %v6849 = vsel %vm6847, %v6844, %v6300
        %v6850 = vsel %vm6847, %v6845, %v6302
        %v6851 = vsel %vm6847, %v6846, %v6304
        %vm6852 = vcmask 703488
        %v6853 = vsel %vm6852, %v6848, %v6314
        %v6854 = vsel %vm6852, %v6849, %v6316
        %v6855 = vsel %vm6852, %v6850, %v6318
        %v6856 = vsel %vm6852, %v6851, %v6320
        %vm6857 = vcmask 719872
        %v6858 = vsel %vm6857, %v6853, %v6330
        %v6859 = vsel %vm6857, %v6854, %v6332
        %v6860 = vsel %vm6857, %v6855, %v6334
        %v6861 = vsel %vm6857, %v6856, %v6336
        %vm6862 = vcmask 736256
        %v6863 = vsel %vm6862, %v6858, %v6346
        %v6864 = vsel %vm6862, %v6859, %v6348
        %v6865 = vsel %vm6862, %v6860, %v6350
        %v6866 = vsel %vm6862, %v6861, %v6352
        %vm6867 = vcmask 752640
        %v6868 = vsel %vm6867, %v6863, %v6362
        %v6869 = vsel %vm6867, %v6864, %v6364
        %v6870 = vsel %vm6867, %v6865, %v6366
        %v6871 = vsel %vm6867, %v6866, %v6368
        %vm6872 = vcmask 769024
        %v6873 = vsel %vm6872, %v6868, %v6378
        %v6874 = vsel %vm6872, %v6869, %v6380
        %v6875 = vsel %vm6872, %v6870, %v6382
        %v6876 = vsel %vm6872, %v6871, %v6384
        %vm6877 = vcmask 785408
        %v6878 = vsel %vm6877, %v6873, %v6394
        %v6879 = vsel %vm6877, %v6874, %v6396
        %v6880 = vsel %vm6877, %v6875, %v6398
        %v6881 = vsel %vm6877, %v6876, %v6400
        %vm6882 = vcmask 801792
        %v6883 = vsel %vm6882, %v6878, %v6410
        %v6884 = vsel %vm6882, %v6879, %v6412
        %v6885 = vsel %vm6882, %v6880, %v6414
        %v6886 = vsel %vm6882, %v6881, %v6416
        %vm6887 = vcmask 818176
        %v6888 = vsel %vm6887, %v6883, %v6426
        %v6889 = vsel %vm6887, %v6884, %v6428
        %v6890 = vsel %vm6887, %v6885, %v6430
        %v6891 = vsel %vm6887, %v6886, %v6432
        %vm6892 = vcmask 834560
        %v6893 = vsel %vm6892, %v6888, %v6442
        %v6894 = vsel %vm6892, %v6889, %v6444
        %v6895 = vsel %vm6892, %v6890, %v6446
        %v6896 = vsel %vm6892, %v6891, %v6448
        %vm6897 = vcmask 850944
        %v6898 = vsel %vm6897, %v6893, %v6458
        %v6899 = vsel %vm6897, %v6894, %v6460
        %v6900 = vsel %vm6897, %v6895, %v6462
        %v6901 = vsel %vm6897, %v6896, %v6464
        %vm6902 = vcmask 867328
        %v6903 = vsel %vm6902, %v6898, %v6474
        %v6904 = vsel %vm6902, %v6899, %v6476
        %v6905 = vsel %vm6902, %v6900, %v6478
        %v6906 = vsel %vm6902, %v6901, %v6480
        %vm6907 = vcmask 883712
        %v6908 = vsel %vm6907, %v6903, %v6490
        %v6909 = vsel %vm6907, %v6904, %v6492
        %v6910 = vsel %vm6907, %v6905, %v6494
        %v6911 = vsel %vm6907, %v6906, %v6496
        %vm6912 = vcmask 900096
        %v6913 = vsel %vm6912, %v6908, %v6506
        %v6914 = vsel %vm6912, %v6909, %v6508
        %v6915 = vsel %vm6912, %v6910, %v6510
        %v6916 = vsel %vm6912, %v6911, %v6512
        %vm6917 = vcmask 916480
        %v6918 = vsel %vm6917, %v6913, %v6522
        %v6919 = vsel %vm6917, %v6914, %v6524
        %v6920 = vsel %vm6917, %v6915, %v6526
        %v6921 = vsel %vm6917, %v6916, %v6528
        %vm6922 = vcmask 932864
        %v6923 = vsel %vm6922, %v6918, %v6538
        %v6924 = vsel %vm6922, %v6919, %v6540
        %v6925 = vsel %vm6922, %v6920, %v6542
        %v6926 = vsel %vm6922, %v6921, %v6544
        %vm6927 = vcmask 949248
        %v6928 = vsel %vm6927, %v6923, %v6554
        %v6929 = vsel %vm6927, %v6924, %v6556
        %v6930 = vsel %vm6927, %v6925, %v6558
        %v6931 = vsel %vm6927, %v6926, %v6560
        %vm6932 = vcmask 965632
        %v6933 = vsel %vm6932, %v6928, %v6570
        %v6934 = vsel %vm6932, %v6929, %v6572
        %v6935 = vsel %vm6932, %v6930, %v6574
        %v6936 = vsel %vm6932, %v6931, %v6576
        %vm6937 = vcmask 982016
        %v6938 = vsel %vm6937, %v6933, %v6586
        %v6939 = vsel %vm6937, %v6934, %v6588
        %v6940 = vsel %vm6937, %v6935, %v6590
        %v6941 = vsel %vm6937, %v6936, %v6592
        %vm6942 = vcmask 998400
        %v6943 = vsel %vm6942, %v6938, %v6602
        %v6944 = vsel %vm6942, %v6939, %v6604
        %v6945 = vsel %vm6942, %v6940, %v6606
        %v6946 = vsel %vm6942, %v6941, %v6608
        %vm6947 = vcmask 1014784
        %v6948 = vsel %vm6947, %v6943, %v6618
        %v6949 = vsel %vm6947, %v6944, %v6620
        %v6950 = vsel %vm6947, %v6945, %v6622
        %v6951 = vsel %vm6947, %v6946, %v6624
        %vm6952 = vcmask 1031168
        %v6953 = vsel %vm6952, %v6948, %v6634
        %v6954 = vsel %vm6952, %v6949, %v6636
        %v6955 = vsel %vm6952, %v6950, %v6638
        %v6956 = vsel %vm6952, %v6951, %v6640
        %6957 = vst [vmem:[%s110] sm:$0xff] %v6953
        %6958 = vst [vmem:[%s110 + $0x8] sm:$0xff] %v6954
        %6959 = vst [vmem:[%s110 + $0x10] sm:$0xff] %v6955
        %6960 = vst [vmem:[%s110 + $0x18] sm:$0xff] %v6956
        %s6961 = sand.u32 %s49, 1
        %s6962 = scalar_lea.sflag [#allocation3], %s6961
        %s6963 = sand.u32 %s49, 1
        %s6964 = smul.addr %s6963, 32
        %s6965 = scalar_lea.vmem [#allocation2], %s6964
        // Predicated region
        $region25: #{tpu_custom_call.1} parent=23 // pred_check
          %p6966 = pneg %p59
        $region26: #{tpu_custom_call.1} parent=23 // pred_check_branch
          %6968 = sbr.rel (%p6966) target = $region28
        $region27: #{tpu_custom_call.1} parent=23 // pred_region
          %s6969 = smul.u32 4, %s15
          %s6971 = ssub.s32 512, 512
          %6972 = vsyncadd %s6962, %s6971
          %s6973 = smul.addr %s6969, 128
          %s6974 = scalar_lea.hbm %s1, %s6973
          %s6975 = sshll.u32 %s6965, 4
          %s6976 = int_to_ptr.vmem [resolvable:$true] %s6975
          %6981 = dma.vmem_to_hbm [thread:$0]  %s6976, 512, %s6974, %s6962, 128, 128, 8
        $region28: #{tpu_custom_call.1} parent=23 // pred_fallthru
          _
      $region24: #{tpu_custom_call.1} parent=5 // pred_fallthru
        _
      %p6982 = scmp.le.s32.totalorder 2, %s10
      // Predicated region
      $region29: #{tpu_custom_call.1} parent=5 // pred_check
        %p6983 = pneg %p6982
      $region30: #{tpu_custom_call.1} parent=5 // pred_check_branch
        %6985 = sbr.rel (%p6983) target = $region32
      $region31: #{tpu_custom_call.1} parent=5 // pred_region
        %s6986 = ssub.s32 %s10, 2
        // Predicated region
        $region33: #{tpu_custom_call.1} parent=31 // pred_check
          %p6987 = pneg %p65
        $region34: #{tpu_custom_call.1} parent=31 // pred_check_branch
          %6989 = sbr.rel (%p6987) target = $region36
        $region35: #{tpu_custom_call.1} parent=31 // pred_region
          %s6990 = sand.u32 %s50, 1
          %s6991 = scalar_lea.sflag [#allocation3], %s6990
          %s6992 = sand.u32 %s50, 1
          %s6993 = smul.addr %s6992, 32
          %s6994 = scalar_lea.vmem [#allocation2], %s6993
          %6995 = dma.done %s6991, 512
        $region36: #{tpu_custom_call.1} parent=31 // pred_fallthru
          _
      $region32: #{tpu_custom_call.1} parent=5 // pred_fallthru
        _
    $region6: #{tpu_custom_call.1} parent=1 // loop_footer
      %s14 = sadd.s32 1, %s10
    $region7: #{tpu_custom_call.1} parent=1 // loop_footer_branch
      %9 = sbr.rel target = $region3
    $region8: #{tpu_custom_call.1} parent=1 // loop_exit
      _
    %6996 = vsyncpa [#allocation3], 1
    %s6997 = scalar_lea.sflag [#allocation3], 1
    %6998 = vsyncpa %s6997, 1

</llo_original>
